<compile_context>
chip_gen: v7x
topology: tpu7x:2x2x1
jax: 0.10.0
libtpu: 0.0.40
codegen_flags: <defaults>
</compile_context>

<pallas_src>
import jax
import jax.numpy as jnp
from jax.experimental import pallas as pl
from jax.experimental.pallas import tpu as pltpu


# ------------------------------------------------------------------ fused kernel

def make_kernel(*, nc, ic, num, plan, geo):
    Wp, Npix, L0 = geo['Wp'], geo['Npix'], geo['L0']

    def kernel(lr_ref, bic_ref, mask_ref, w_ref, b_ref, out_ref, pad_ref, col_ref):
        # The whole scratch is only (8, Ltot) f32 (a handful of vregs), so a full
        # memset (guards + stale channels) is cheaper than any bookkeeping.
        pad_ref[...] = jnp.zeros_like(pad_ref)
        mask = mask_ref[...]                         # (1, Npix); 1.0 at valid columns

        avail = [0]                                  # statically tracked channel count

        def set_interior(val, c):
            # masked so the horizontal-halo columns of the interior stay zero
            pad_ref[:c, L0:L0 + Npix] = val * mask
            avail[0] = c

        def conv(cin, cout, kc, w_off, b_off):
            # one im2col matmul: gather k*k lane-shifted taps into the slab, dot once
            assert cin <= avail[0], "conv would read stale scratch channels"
            pc = kc // 2
            K = kc * kc * cin
            t = 0
            for ky in range(kc):
                for kx in range(kc):
                    s = L0 + (ky - pc) * Wp + (kx - pc)
                    col_ref[t * cin:(t + 1) * cin, :] = pad_ref[:cin, s:s + Npix]
                    t += 1
            w = w_ref[w_off:w_off + cout, :K]                       # (cout, K) bf16
            col = col_ref[:K, :].astype(jnp.bfloat16)               # (K, Npix)
            y = jnp.dot(w, col, preferred_element_type=jnp.float32)  # f32 accum
            return y + b_ref[b_off:b_off + cout, :]                  # f32 epilogue

        # ---- head: 3x3 conv (nc -> ic) + PReLU (halo columns pre-zeroed host-side)
        pad_ref[:nc, L0:L0 + Npix] = lr_ref[0]
        avail[0] = nc
        hd = plan['head']
        y = conv(nc, ic, hd['k'], hd['w'], hd['b'])                  # (ic, Npix)
        alpha = b_ref[plan['prelu_b']:plan['prelu_b'] + ic, :]       # (ic, 1)
        x = jnp.where(y >= 0.0, y, y * alpha)

        # ---- regression layers (conv1 + conv2 share one packed im2col weight)
        for L in plan['layers']:
            dim = L['dim']
            nd = num * dim
            set_interior(x, ic)
            y = conv(ic, nd + num, L['k'], L['w12'], L['b12'])       # (nd+num, Npix)

            # softmax over the `num` anchors: block-wise max/sum over sublanes,
            # exact divide (no approx reciprocal)
            logits = y[nd:nd + num, :]                               # (num, Npix)
            m = jnp.max(logits, axis=0, keepdims=True)
            e = jnp.exp(logits - m)
            a = e / jnp.sum(e, axis=0, keepdims=True)

            out = y[0:dim, :] * a[0:1, :]
            for i in range(1, num):
                out = out + y[i * dim:(i + 1) * dim, :] * a[i:i + 1, :]

            if L['new']:                                             # conv3 (weight-norm'd)
                set_interior(out, dim)
                out = conv(dim, dim, L['k'], L['w3'], L['b3'])
            if L['shortcut']:
                out = out + x                                        # residual in-register
            x = out

        # ---- fused +bic (bic pre-arranged to the same flat layout host-side)
        out_ref[0] = x + bic_ref[0]

    return kernel


def _make_geo(H, W, k):
    pmax = max(1, k // 2)                  # head conv is 3x3
    Wp = W + 2 * pmax
    Npix = H * Wp
    halo = pmax * (Wp + 1)                 # worst-case flat tap offset
    L0 = ((halo + 127) // 128) * 128       # lane-aligned interior start
    Ltot = ((L0 + Npix + halo + 127) // 128) * 128
    return dict(H=H, W=W, pmax=pmax, Wp=Wp, Npix=Npix, L0=L0, Ltot=Ltot)


def newcarn_forward(lr, bic, w_all, b_all, plan, cfg):
    """lr: (N,H,W,nc) f32, bic: (N,H*up,W*up,1) f32 -> (N,H*up,W*up,1) f32."""
    N, H, W, nc = lr.shape
    up, ic, num, k = cfg['upscale'], cfg['inner_channel'], cfg['num_anchor'], cfg['deep_kernel']
    upup = up * up
    assert k % 2 == 1, "pad=k//2 matches PyTorch 'same' only for odd k"
    geo = _make_geo(H, W, k)
    Wp, Npix, pmax, Ltot = geo['Wp'], geo['Npix'], geo['pmax'], geo['Ltot']
    Cpad = -(-max(nc, ic, upup) // 8) * 8
    Kpad = -(-plan['Kmax'] // 8) * 8

    # ---- host-side layout plumbing (pure reshape/transpose/pad, no compute)
    lr_flat = jnp.pad(jnp.transpose(lr, (0, 3, 1, 2)),
                      ((0, 0), (0, 0), (0, 0), (pmax, pmax))).reshape(N, nc, Npix)
    # inverse pixel shuffle of bic so the final add commutes with the shuffle
    bic_s2d = jnp.transpose(bic.reshape(N, H, up, W, up), (0, 2, 4, 1, 3))   # (N,up,up,H,W)
    bic_flat = jnp.pad(bic_s2d, ((0, 0), (0, 0), (0, 0), (0, 0), (pmax, pmax))
                       ).reshape(N, upup, Npix)
    col_idx = jnp.arange(Npix, dtype=jnp.int32) % Wp
    mask = ((col_idx >= pmax) & (col_idx < pmax + W)).astype(jnp.float32).reshape(1, Npix)

    kernel = make_kernel(nc=nc, ic=ic, num=num, plan=plan, geo=geo)

    out_flat = pl.pallas_call(
        kernel,
        out_shape=jax.ShapeDtypeStruct((N, upup, Npix), jnp.float32),
        grid=(N,),
        in_specs=[
            pl.BlockSpec((1, nc, Npix), lambda n: (n, 0, 0)),
            pl.BlockSpec((1, upup, Npix), lambda n: (n, 0, 0)),
            pl.BlockSpec(mask.shape, lambda n: (0, 0)),       # resident across grid
            pl.BlockSpec(w_all.shape, lambda n: (0, 0)),
            pl.BlockSpec(b_all.shape, lambda n: (0, 0)),
        ],
        out_specs=pl.BlockSpec((1, upup, Npix), lambda n: (n, 0, 0)),
        scratch_shapes=[
            pltpu.VMEM((Cpad, Ltot), jnp.float32),            # padded flat activation
            pltpu.VMEM((Kpad, Npix), jnp.float32),            # im2col slab
        ],
        compiler_params=pltpu.CompilerParams(dimension_semantics=("parallel",)),
    )(lr_flat, bic_flat, mask, w_all, b_all)

    # drop halo columns + pixel shuffle (pure layout) on the already-summed result
    o = out_flat.reshape(N, up, up, H, Wp)[..., pmax:pmax + W]   # (N, up, up, H, W)
    sr = jnp.transpose(o, (0, 3, 1, 4, 2)).reshape(N, H * up, W * up, 1)
    return sr


# ------------------------------------------------------------------ parameters

def make_conv(key, cin, cout, ksize, wn):
    """Returns (w HWIO (k,k,cin,cout), b (cout,)); wn = weight_norm over dim 0."""
    k1, k2, k3 = jax.random.split(key, 3)
    v = jax.random.normal(k1, (cout, cin, ksize, ksize), jnp.float32) * 0.1
    if wn:
        g = jax.random.uniform(k2, (cout,), jnp.float32, 0.5, 1.5)
        norm = jnp.sqrt(jnp.sum(v * v, axis=(1, 2, 3), keepdims=True)) + 1e-12
        w = v / norm * g[:, None, None, None]
    else:
        w = v
    b = jax.random.normal(k3, (cout,), jnp.float32) * 0.01
    return jnp.transpose(w, (2, 3, 1, 0)), b


def make_raw_params(key, num_channels, cfg):
    num, ic, up = cfg['num_anchor'], cfg['inner_channel'], cfg['upscale']
    k, dl = cfg['deep_kernel'], cfg['deep_layer']
    keys = jax.random.split(key, dl + 2)
    raw = {'conv1': make_conv(keys[0], num_channels, ic, 3, wn=True),
           'prelu': jnp.full((ic,), 0.25, jnp.float32)}

    def reg(rkey, dim, new, shortcut):
        ks = jax.random.split(rkey, 3)
        k1 = 1 if new else k
        return {'new': new, 'dim': dim, 'shortcut': shortcut,
                'conv1': make_conv(ks[0], ic, num * dim, k1, wn=new),
                'conv2': make_conv(ks[1], ic, num, k, wn=new),
                'conv3': make_conv(ks[2], dim, dim, k, wn=True) if new else None}

    layers = []
    if dl == 1:
        layers.append(reg(keys[1], up * up, True, ic == up * up))      # reg1
    else:
        layers.append(reg(keys[1], ic, True, True))                    # reg2
        for i in range(dl - 2):
            layers.append(reg(keys[2 + i], ic, False, True))           # reg3[i]
        layers.append(reg(keys[dl], up * up, True, ic == up * up))     # reg4
    raw['layers'] = layers
    return raw


def _to_mat(w_hwio):
    """HWIO (k,k,cin,cout) -> im2col weight (cout, k*k*cin), tap-major rows."""
    kh, kw, cin, cout = w_hwio.shape
    return w_hwio.reshape(kh * kw * cin, cout).T


def pack_params(raw, num, k):
    """Consolidates all conv weights into one bf16 (rows, Kmax) im2col array and
    all biases + PReLU alpha into one f32 (rows, 1) array; returns a static plan
    of row offsets.  conv1 (1x1 for new layers) is embedded at the kernel center
    of conv2's k x k footprint so each regression layer needs one matmul."""
    entries = [(_to_mat(raw['conv1'][0]), raw['conv1'][1])]            # head
    prelu_idx = len(entries)
    entries.append((None, raw['prelu']))                               # PReLU alpha
    lmeta = []
    for L in raw['layers']:
        dim = L['dim']
        nd = num * dim
        w1, b1 = L['conv1']
        w2, b2 = L['conv2']
        k1, cin = w1.shape[0], w1.shape[2]
        wc = jnp.zeros((k, k, cin, nd + num), jnp.float32)
        off = (k - k1) // 2
        wc = wc.at[off:off + k1, off:off + k1, :, :nd].set(w1)
        wc = wc.at[:, :, :, nd:].set(w2)
        e12 = len(entries)
        entries.append((_to_mat(wc), jnp.concatenate([b1, b2])))
        e3 = None
        if L['new']:
            e3 = len(entries)
            entries.append((_to_mat(L['conv3'][0]), L['conv3'][1]))
        lmeta.append(dict(new=L['new'], dim=dim, shortcut=L['shortcut'], e12=e12, e3=e3))

    Kmax = max(w.shape[1] for w, _ in entries if w is not None)
    w_blocks, b_blocks, w_off, b_off = [], [], [], []
    rw = rb = 0
    for w, b in entries:
        c = b.shape[0]
        cpad = -(-c // 8) * 8                           # sublane-aligned row blocks
        if w is not None:
            w_blocks.append(jnp.zeros((cpad, Kmax), jnp.float32).at[:c, :w.shape[1]].set(w))
            w_off.append(rw)
            rw += cpad
        else:
            w_off.append(None)
        b_blocks.append(jnp.zeros((cpad, 1), jnp.float32).at[:c, 0].set(b))
        b_off.append(rb)
        rb += cpad
    w_all = jnp.concatenate(w_blocks, axis=0).astype(jnp.bfloat16)     # bf16 at the dot
    b_all = jnp.concatenate(b_blocks, axis=0)                          # f32 epilogues

    plan = dict(Kmax=Kmax,
                head=dict(k=3, w=w_off[0], b=b_off[0]),
                prelu_b=b_off[prelu_idx],
                layers=[])
    for m in lmeta:
        d = dict(new=m['new'], dim=m['dim'], shortcut=m['shortcut'], k=k,
                 w12=w_off[m['e12']], b12=b_off[m['e12']])
        if m['new']:
            d['w3'] = w_off[m['e3']]
            d['b3'] = b_off[m['e3']]
        plan['layers'].append(d)
    return w_all, b_all, plan


# ------------------------------------------------------------------ plain-JAX reference
# (bf16 at the conv, f32 accumulation/epilogues — same numerics as the kernel)

def _conv_ref(x, wb):
    w, b = wb
    p = w.shape[0] // 2
    y = jax.lax.conv_general_dilated(
        x.astype(jnp.bfloat16), w.astype(jnp.bfloat16),
        window_strides=(1, 1), padding=[(p, p), (p, p)],
        dimension_numbers=('NHWC', 'HWIO', 'NHWC'),
        preferred_element_type=jnp.float32)
    return y + b


def _reg_ref(x, L, num):
    dim = L['dim']
    r = _conv_ref(x, L['conv1'])
    a = jax.nn.softmax(_conv_ref(x, L['conv2']), axis=-1)
    n, h, w, _ = r.shape
    out = jnp.sum(r.reshape(n, h, w, num, dim) * a[..., None], axis=3)
    if L['new']:
        out = _conv_ref(out, L['conv3'])
    if L['shortcut']:
        out = out + x
    return out


def newcarn_ref(lr, bic, raw, cfg):
    num, up = cfg['num_anchor'], cfg['upscale']
    x = _conv_ref(lr, raw['conv1'])
    x = jnp.where(x >= 0, x, x * raw['prelu'])
    for L in raw['layers']:
        x = _reg_ref(x, L, num)
    n, h, w, _ = x.shape
    sr = x.reshape(n, h, w, up, up).transpose(0, 1, 3, 2, 4).reshape(n, h * up, w * up, 1)
    return sr + bic


# ------------------------------------------------------------------ main

if __name__ == "__main__":
    # FLAGS
    cfg = dict(num_anchor=4, inner_channel=8, deep_kernel=3, deep_layer=3, upscale=2)
    num_channels = 1
    N, H, W = 2, 16, 16
    up = cfg['upscale']

    key = jax.random.PRNGKey(0)
    kp, kl, kb = jax.random.split(key, 3)
    raw = make_raw_params(kp, num_channels, cfg)
    w_all, b_all, plan = pack_params(raw, cfg['num_anchor'], cfg['deep_kernel'])

    # Inputs (PyTorch would be NCHW: lr (2,1,16,16), bic (2,1,32,32)); we use NHWC.
    lr = jax.random.normal(kl, (N, H, W, num_channels), jnp.float32)
    bic = jax.random.normal(kb, (N, H * up, W * up, 1), jnp.float32)

    fwd = jax.jit(lambda lr_, bic_, w_, b_: newcarn_forward(lr_, bic_, w_, b_, plan, cfg))
    out = jax.block_until_ready(fwd(lr, bic, w_all, b_all))

    assert out.shape == (N, H * up, W * up, 1)
    assert bool(jnp.all(jnp.isfinite(out)))

    # check against an unfused plain-JAX reference using the same bf16-dot math
    ref = newcarn_ref(lr, bic, raw, cfg)
    err = float(jnp.max(jnp.abs(out - ref)))
    assert err < 2e-2, f"mismatch vs reference: max abs err {err}"

    print("KERNEL_OK")
</pallas_src>

<mosaic_0001>
module attributes {stable_mosaic.version = 11 : i64} {
  func.func @kernel(%arg0: i32, %arg1: memref<1x1x288xf32, #tpu.memory_space<vmem>>, %arg2: memref<1x4x288xf32, #tpu.memory_space<vmem>>, %arg3: memref<1x288xf32, #tpu.memory_space<vmem>>, %arg4: memref<128x72xbf16, #tpu.memory_space<vmem>>, %arg5: memref<136x1xf32, #tpu.memory_space<vmem>>, %arg6: memref<1x4x288xf32, #tpu.memory_space<vmem>>, %arg7: memref<8x512xf32, #tpu.memory_space<vmem>>, %arg8: memref<72x288xf32, #tpu.memory_space<vmem>>) attributes {dimension_semantics = [#tpu.dimension_semantics<parallel>], iteration_bounds = array<i64: 2>, scalar_prefetch = 0 : i64, scratch_operands = 2 : i64, tpu.core_type = #tpu.core_type<tc>, window_params = [{transform_indices = @transform_0, window_bounds = array<i64: 1, 1, 288>}, {transform_indices = @transform_1, window_bounds = array<i64: 1, 4, 288>}, {pipeline_mode = #tpu.pipeline_mode<synchronous>, transform_indices = @transform_2, window_bounds = array<i64: 1, 288>}, {pipeline_mode = #tpu.pipeline_mode<synchronous>, transform_indices = @transform_3, window_bounds = array<i64: 128, 72>}, {pipeline_mode = #tpu.pipeline_mode<synchronous>, transform_indices = @transform_4, window_bounds = array<i64: 136, 1>}, {transform_indices = @transform_5, window_bounds = array<i64: 1, 4, 288>}]} {
    %cst = arith.constant 0.000000e+00 : f32
    %0 = vector.broadcast %cst : f32 to vector<8x512xf32>
    %c0 = arith.constant 0 : index
    %c0_0 = arith.constant 0 : index
    %1 = vector.load %arg7[%c0, %c0_0] : memref<8x512xf32, #tpu.memory_space<vmem>>, vector<8x512xf32>
    tpu.vector_store %arg7[%c0, %c0_0], %0 {strides = array<i32>} : memref<8x512xf32, #tpu.memory_space<vmem>>, vector<8x512xf32>,
    %c0_1 = arith.constant 0 : index
    %c0_2 = arith.constant 0 : index
    %2 = vector.load %arg3[%c0_1, %c0_2] : memref<1x288xf32, #tpu.memory_space<vmem>>, vector<1x288xf32>
    %c0_3 = arith.constant 0 : index
    %c0_4 = arith.constant 0 : index
    %c0_5 = arith.constant 0 : index
    %3 = vector.load %arg1[%c0_3, %c0_4, %c0_5] : memref<1x1x288xf32, #tpu.memory_space<vmem>>, vector<1x1x288xf32>
    %4 = vector.shape_cast %3 : vector<1x1x288xf32> to vector<1x288xf32>
    %c0_6 = arith.constant 0 : index
    %c128 = arith.constant 128 : index
    %5 = vector.load %arg7[%c0_6, %c128] : memref<8x512xf32, #tpu.memory_space<vmem>>, vector<1x288xf32>
    tpu.vector_store %arg7[%c0_6, %c128], %4 {strides = array<i32>} : memref<8x512xf32, #tpu.memory_space<vmem>>, vector<1x288xf32>,
    %c0_7 = arith.constant 0 : index
    %c109 = arith.constant 109 : index
    %6 = vector.load %arg7[%c0_7, %c109] : memref<8x512xf32, #tpu.memory_space<vmem>>, vector<1x288xf32>
    %c0_8 = arith.constant 0 : index
    %c0_9 = arith.constant 0 : index
    %7 = vector.load %arg8[%c0_8, %c0_9] : memref<72x288xf32, #tpu.memory_space<vmem>>, vector<1x288xf32>
    tpu.vector_store %arg8[%c0_8, %c0_9], %6 {strides = array<i32>} : memref<72x288xf32, #tpu.memory_space<vmem>>, vector<1x288xf32>,
    %c0_10 = arith.constant 0 : index
    %c110 = arith.constant 110 : index
    %8 = vector.load %arg7[%c0_10, %c110] : memref<8x512xf32, #tpu.memory_space<vmem>>, vector<1x288xf32>
    %c1 = arith.constant 1 : index
    %c0_11 = arith.constant 0 : index
    %9 = vector.load %arg8[%c1, %c0_11] : memref<72x288xf32, #tpu.memory_space<vmem>>, vector<1x288xf32>
    tpu.vector_store %arg8[%c1, %c0_11], %8 {strides = array<i32>} : memref<72x288xf32, #tpu.memory_space<vmem>>, vector<1x288xf32>,
    %c0_12 = arith.constant 0 : index
    %c111 = arith.constant 111 : index
    %10 = vector.load %arg7[%c0_12, %c111] : memref<8x512xf32, #tpu.memory_space<vmem>>, vector<1x288xf32>
    %c2 = arith.constant 2 : index
    %c0_13 = arith.constant 0 : index
    %11 = vector.load %arg8[%c2, %c0_13] : memref<72x288xf32, #tpu.memory_space<vmem>>, vector<1x288xf32>
    tpu.vector_store %arg8[%c2, %c0_13], %10 {strides = array<i32>} : memref<72x288xf32, #tpu.memory_space<vmem>>, vector<1x288xf32>,
    %c0_14 = arith.constant 0 : index
    %c127 = arith.constant 127 : index
    %12 = vector.load %arg7[%c0_14, %c127] : memref<8x512xf32, #tpu.memory_space<vmem>>, vector<1x288xf32>
    %c3 = arith.constant 3 : index
    %c0_15 = arith.constant 0 : index
    %13 = vector.load %arg8[%c3, %c0_15] : memref<72x288xf32, #tpu.memory_space<vmem>>, vector<1x288xf32>
    tpu.vector_store %arg8[%c3, %c0_15], %12 {strides = array<i32>} : memref<72x288xf32, #tpu.memory_space<vmem>>, vector<1x288xf32>,
    %c0_16 = arith.constant 0 : index
    %c128_17 = arith.constant 128 : index
    %14 = vector.load %arg7[%c0_16, %c128_17] : memref<8x512xf32, #tpu.memory_space<vmem>>, vector<1x288xf32>
    %c4 = arith.constant 4 : index
    %c0_18 = arith.constant 0 : index
    %15 = vector.load %arg8[%c4, %c0_18] : memref<72x288xf32, #tpu.memory_space<vmem>>, vector<1x288xf32>
    tpu.vector_store %arg8[%c4, %c0_18], %14 {strides = array<i32>} : memref<72x288xf32, #tpu.memory_space<vmem>>, vector<1x288xf32>,
    %c0_19 = arith.constant 0 : index
    %c129 = arith.constant 129 : index
    %16 = vector.load %arg7[%c0_19, %c129] : memref<8x512xf32, #tpu.memory_space<vmem>>, vector<1x288xf32>
    %c5 = arith.constant 5 : index
    %c0_20 = arith.constant 0 : index
    %17 = vector.load %arg8[%c5, %c0_20] : memref<72x288xf32, #tpu.memory_space<vmem>>, vector<1x288xf32>
    tpu.vector_store %arg8[%c5, %c0_20], %16 {strides = array<i32>} : memref<72x288xf32, #tpu.memory_space<vmem>>, vector<1x288xf32>,
    %c0_21 = arith.constant 0 : index
    %c145 = arith.constant 145 : index
    %18 = vector.load %arg7[%c0_21, %c145] : memref<8x512xf32, #tpu.memory_space<vmem>>, vector<1x288xf32>
    %c6 = arith.constant 6 : index
    %c0_22 = arith.constant 0 : index
    %19 = vector.load %arg8[%c6, %c0_22] : memref<72x288xf32, #tpu.memory_space<vmem>>, vector<1x288xf32>
    tpu.vector_store %arg8[%c6, %c0_22], %18 {strides = array<i32>} : memref<72x288xf32, #tpu.memory_space<vmem>>, vector<1x288xf32>,
    %c0_23 = arith.constant 0 : index
    %c146 = arith.constant 146 : index
    %20 = vector.load %arg7[%c0_23, %c146] : memref<8x512xf32, #tpu.memory_space<vmem>>, vector<1x288xf32>
    %c7 = arith.constant 7 : index
    %c0_24 = arith.constant 0 : index
    %21 = vector.load %arg8[%c7, %c0_24] : memref<72x288xf32, #tpu.memory_space<vmem>>, vector<1x288xf32>
    tpu.vector_store %arg8[%c7, %c0_24], %20 {strides = array<i32>} : memref<72x288xf32, #tpu.memory_space<vmem>>, vector<1x288xf32>,
    %c0_25 = arith.constant 0 : index
    %c147 = arith.constant 147 : index
    %22 = vector.load %arg7[%c0_25, %c147] : memref<8x512xf32, #tpu.memory_space<vmem>>, vector<1x288xf32>
    %c8 = arith.constant 8 : index
    %c0_26 = arith.constant 0 : index
    %23 = vector.load %arg8[%c8, %c0_26] : memref<72x288xf32, #tpu.memory_space<vmem>>, vector<1x288xf32>
    tpu.vector_store %arg8[%c8, %c0_26], %22 {strides = array<i32>} : memref<72x288xf32, #tpu.memory_space<vmem>>, vector<1x288xf32>,
    %c0_27 = arith.constant 0 : index
    %c0_28 = arith.constant 0 : index
    %24 = vector.load %arg4[%c0_27, %c0_28] : memref<128x72xbf16, #tpu.memory_space<vmem>>, vector<8x9xbf16>
    %c0_29 = arith.constant 0 : index
    %c0_30 = arith.constant 0 : index
    %25 = vector.load %arg8[%c0_29, %c0_30] : memref<72x288xf32, #tpu.memory_space<vmem>>, vector<9x288xf32>
    %26 = arith.truncf %25 : vector<9x288xf32> to vector<9x288xbf16>
    %cst_31 = arith.constant dense<0.000000e+00> : vector<8x288xf32>
    %27 = tpu.matmul %24, %26, %cst_31 {dimension_numbers = #tpu.dot_dimension_numbers<[1], [0], [0], [1], [0, 0, 1, 1], [], []>} : vector<8x9xbf16>, vector<9x288xbf16>, vector<8x288xf32> -> vector<8x288xf32>
    %c0_32 = arith.constant 0 : index
    %c0_33 = arith.constant 0 : index
    %28 = vector.load %arg5[%c0_32, %c0_33] : memref<136x1xf32, #tpu.memory_space<vmem>>, vector<8x1xf32>
    %29 = vector.broadcast %28 : vector<8x1xf32> to vector<8x288xf32>
    %30 = arith.addf %27, %29 : vector<8x288xf32>
    %c8_34 = arith.constant 8 : index
    %c0_35 = arith.constant 0 : index
    %31 = vector.load %arg5[%c8_34, %c0_35] : memref<136x1xf32, #tpu.memory_space<vmem>>, vector<8x1xf32>
    %cst_36 = arith.constant 0.000000e+00 : f32
    %32 = vector.broadcast %cst_36 : f32 to vector<8x288xf32>
    %33 = arith.cmpf oge, %30, %32 : vector<8x288xf32>
    %34 = vector.broadcast %31 : vector<8x1xf32> to vector<8x288xf32>
    %35 = arith.mulf %30, %34 : vector<8x288xf32>
    %36 = arith.select %33, %30, %35 : vector<8x288xi1>, vector<8x288xf32>
    %37 = vector.broadcast %2 : vector<1x288xf32> to vector<8x288xf32>
    %38 = arith.mulf %36, %37 : vector<8x288xf32>
    %c0_37 = arith.constant 0 : index
    %c128_38 = arith.constant 128 : index
    %39 = vector.load %arg7[%c0_37, %c128_38] : memref<8x512xf32, #tpu.memory_space<vmem>>, vector<8x288xf32>
    tpu.vector_store %arg7[%c0_37, %c128_38], %38 {strides = array<i32>} : memref<8x512xf32, #tpu.memory_space<vmem>>, vector<8x288xf32>,
    %c0_39 = arith.constant 0 : index
    %c109_40 = arith.constant 109 : index
    %40 = vector.load %arg7[%c0_39, %c109_40] : memref<8x512xf32, #tpu.memory_space<vmem>>, vector<8x288xf32>
    %c0_41 = arith.constant 0 : index
    %c0_42 = arith.constant 0 : index
    %41 = vector.load %arg8[%c0_41, %c0_42] : memref<72x288xf32, #tpu.memory_space<vmem>>, vector<8x288xf32>
    tpu.vector_store %arg8[%c0_41, %c0_42], %40 {strides = array<i32>} : memref<72x288xf32, #tpu.memory_space<vmem>>, vector<8x288xf32>,
    %c0_43 = arith.constant 0 : index
    %c110_44 = arith.constant 110 : index
    %42 = vector.load %arg7[%c0_43, %c110_44] : memref<8x512xf32, #tpu.memory_space<vmem>>, vector<8x288xf32>
    %c8_45 = arith.constant 8 : index
    %c0_46 = arith.constant 0 : index
    %43 = vector.load %arg8[%c8_45, %c0_46] : memref<72x288xf32, #tpu.memory_space<vmem>>, vector<8x288xf32>
    tpu.vector_store %arg8[%c8_45, %c0_46], %42 {strides = array<i32>} : memref<72x288xf32, #tpu.memory_space<vmem>>, vector<8x288xf32>,
    %c0_47 = arith.constant 0 : index
    %c111_48 = arith.constant 111 : index
    %44 = vector.load %arg7[%c0_47, %c111_48] : memref<8x512xf32, #tpu.memory_space<vmem>>, vector<8x288xf32>
    %c16 = arith.constant 16 : index
    %c0_49 = arith.constant 0 : index
    %45 = vector.load %arg8[%c16, %c0_49] : memref<72x288xf32, #tpu.memory_space<vmem>>, vector<8x288xf32>
    tpu.vector_store %arg8[%c16, %c0_49], %44 {strides = array<i32>} : memref<72x288xf32, #tpu.memory_space<vmem>>, vector<8x288xf32>,
    %c0_50 = arith.constant 0 : index
    %c127_51 = arith.constant 127 : index
    %46 = vector.load %arg7[%c0_50, %c127_51] : memref<8x512xf32, #tpu.memory_space<vmem>>, vector<8x288xf32>
    %c24 = arith.constant 24 : index
    %c0_52 = arith.constant 0 : index
    %47 = vector.load %arg8[%c24, %c0_52] : memref<72x288xf32, #tpu.memory_space<vmem>>, vector<8x288xf32>
    tpu.vector_store %arg8[%c24, %c0_52], %46 {strides = array<i32>} : memref<72x288xf32, #tpu.memory_space<vmem>>, vector<8x288xf32>,
    %c0_53 = arith.constant 0 : index
    %c128_54 = arith.constant 128 : index
    %48 = vector.load %arg7[%c0_53, %c128_54] : memref<8x512xf32, #tpu.memory_space<vmem>>, vector<8x288xf32>
    %c32 = arith.constant 32 : index
    %c0_55 = arith.constant 0 : index
    %49 = vector.load %arg8[%c32, %c0_55] : memref<72x288xf32, #tpu.memory_space<vmem>>, vector<8x288xf32>
    tpu.vector_store %arg8[%c32, %c0_55], %48 {strides = array<i32>} : memref<72x288xf32, #tpu.memory_space<vmem>>, vector<8x288xf32>,
    %c0_56 = arith.constant 0 : index
    %c129_57 = arith.constant 129 : index
    %50 = vector.load %arg7[%c0_56, %c129_57] : memref<8x512xf32, #tpu.memory_space<vmem>>, vector<8x288xf32>
    %c40 = arith.constant 40 : index
    %c0_58 = arith.constant 0 : index
    %51 = vector.load %arg8[%c40, %c0_58] : memref<72x288xf32, #tpu.memory_space<vmem>>, vector<8x288xf32>
    tpu.vector_store %arg8[%c40, %c0_58], %50 {strides = array<i32>} : memref<72x288xf32, #tpu.memory_space<vmem>>, vector<8x288xf32>,
    %c0_59 = arith.constant 0 : index
    %c145_60 = arith.constant 145 : index
    %52 = vector.load %arg7[%c0_59, %c145_60] : memref<8x512xf32, #tpu.memory_space<vmem>>, vector<8x288xf32>
    %c48 = arith.constant 48 : index
    %c0_61 = arith.constant 0 : index
    %53 = vector.load %arg8[%c48, %c0_61] : memref<72x288xf32, #tpu.memory_space<vmem>>, vector<8x288xf32>
    tpu.vector_store %arg8[%c48, %c0_61], %52 {strides = array<i32>} : memref<72x288xf32, #tpu.memory_space<vmem>>, vector<8x288xf32>,
    %c0_62 = arith.constant 0 : index
    %c146_63 = arith.constant 146 : index
    %54 = vector.load %arg7[%c0_62, %c146_63] : memref<8x512xf32, #tpu.memory_space<vmem>>, vector<8x288xf32>
    %c56 = arith.constant 56 : index
    %c0_64 = arith.constant 0 : index
    %55 = vector.load %arg8[%c56, %c0_64] : memref<72x288xf32, #tpu.memory_space<vmem>>, vector<8x288xf32>
    tpu.vector_store %arg8[%c56, %c0_64], %54 {strides = array<i32>} : memref<72x288xf32, #tpu.memory_space<vmem>>, vector<8x288xf32>,
    %c0_65 = arith.constant 0 : index
    %c147_66 = arith.constant 147 : index
    %56 = vector.load %arg7[%c0_65, %c147_66] : memref<8x512xf32, #tpu.memory_space<vmem>>, vector<8x288xf32>
    %c64 = arith.constant 64 : index
    %c0_67 = arith.constant 0 : index
    %57 = vector.load %arg8[%c64, %c0_67] : memref<72x288xf32, #tpu.memory_space<vmem>>, vector<8x288xf32>
    tpu.vector_store %arg8[%c64, %c0_67], %56 {strides = array<i32>} : memref<72x288xf32, #tpu.memory_space<vmem>>, vector<8x288xf32>,
    %c8_68 = arith.constant 8 : index
    %c0_69 = arith.constant 0 : index
    %58 = vector.load %arg4[%c8_68, %c0_69] : memref<128x72xbf16, #tpu.memory_space<vmem>>, vector<36x72xbf16>
    %c0_70 = arith.constant 0 : index
    %c0_71 = arith.constant 0 : index
    %59 = vector.load %arg8[%c0_70, %c0_71] : memref<72x288xf32, #tpu.memory_space<vmem>>, vector<72x288xf32>
    %60 = arith.truncf %59 : vector<72x288xf32> to vector<72x288xbf16>
    %cst_72 = arith.constant dense<0.000000e+00> : vector<36x288xf32>
    %61 = tpu.matmul %58, %60, %cst_72 {dimension_numbers = #tpu.dot_dimension_numbers<[1], [0], [0], [1], [0, 0, 1, 1], [], []>} : vector<36x72xbf16>, vector<72x288xbf16>, vector<36x288xf32> -> vector<36x288xf32>
    %c16_73 = arith.constant 16 : index
    %c0_74 = arith.constant 0 : index
    %62 = vector.load %arg5[%c16_73, %c0_74] : memref<136x1xf32, #tpu.memory_space<vmem>>, vector<36x1xf32>
    %63 = vector.broadcast %62 : vector<36x1xf32> to vector<36x288xf32>
    %64 = arith.addf %61, %63 : vector<36x288xf32>
    %65 = vector.extract_strided_slice %64 {offsets = [32, 0], sizes = [4, 288], strides = [1, 1]} : vector<36x288xf32> to vector<4x288xf32>
    %cst_75 = arith.constant dense<0xFF800000> : vector<288xf32>
    %66 = vector.multi_reduction <maximumf>, %65, %cst_75 [0] : vector<4x288xf32> to vector<288xf32>
    %67 = vector.shape_cast %66 : vector<288xf32> to vector<1x288xf32>
    %68 = vector.broadcast %67 : vector<1x288xf32> to vector<4x288xf32>
    %69 = arith.subf %65, %68 : vector<4x288xf32>
    %70 = math.exp %69 : vector<4x288xf32>
    %cst_76 = arith.constant dense<0.000000e+00> : vector<288xf32>
    %71 = vector.multi_reduction <add>, %70, %cst_76 [0] : vector<4x288xf32> to vector<288xf32>
    %72 = vector.shape_cast %71 : vector<288xf32> to vector<1x288xf32>
    %73 = vector.broadcast %72 : vector<1x288xf32> to vector<4x288xf32>
    %74 = arith.divf %70, %73 : vector<4x288xf32>
    %75 = vector.extract_strided_slice %64 {offsets = [0, 0], sizes = [8, 288], strides = [1, 1]} : vector<36x288xf32> to vector<8x288xf32>
    %76 = vector.extract_strided_slice %74 {offsets = [0, 0], sizes = [1, 288], strides = [1, 1]} : vector<4x288xf32> to vector<1x288xf32>
    %77 = vector.broadcast %76 : vector<1x288xf32> to vector<8x288xf32>
    %78 = arith.mulf %75, %77 : vector<8x288xf32>
    %79 = vector.extract_strided_slice %64 {offsets = [8, 0], sizes = [8, 288], strides = [1, 1]} : vector<36x288xf32> to vector<8x288xf32>
    %80 = vector.extract_strided_slice %74 {offsets = [1, 0], sizes = [1, 288], strides = [1, 1]} : vector<4x288xf32> to vector<1x288xf32>
    %81 = vector.broadcast %80 : vector<1x288xf32> to vector<8x288xf32>
    %82 = arith.mulf %79, %81 : vector<8x288xf32>
    %83 = arith.addf %78, %82 : vector<8x288xf32>
    %84 = vector.extract_strided_slice %64 {offsets = [16, 0], sizes = [8, 288], strides = [1, 1]} : vector<36x288xf32> to vector<8x288xf32>
    %85 = vector.extract_strided_slice %74 {offsets = [2, 0], sizes = [1, 288], strides = [1, 1]} : vector<4x288xf32> to vector<1x288xf32>
    %86 = vector.broadcast %85 : vector<1x288xf32> to vector<8x288xf32>
    %87 = arith.mulf %84, %86 : vector<8x288xf32>
    %88 = arith.addf %83, %87 : vector<8x288xf32>
    %89 = vector.extract_strided_slice %64 {offsets = [24, 0], sizes = [8, 288], strides = [1, 1]} : vector<36x288xf32> to vector<8x288xf32>
    %90 = vector.extract_strided_slice %74 {offsets = [3, 0], sizes = [1, 288], strides = [1, 1]} : vector<4x288xf32> to vector<1x288xf32>
    %91 = vector.broadcast %90 : vector<1x288xf32> to vector<8x288xf32>
    %92 = arith.mulf %89, %91 : vector<8x288xf32>
    %93 = arith.addf %88, %92 : vector<8x288xf32>
    %94 = vector.broadcast %2 : vector<1x288xf32> to vector<8x288xf32>
    %95 = arith.mulf %93, %94 : vector<8x288xf32>
    %c0_77 = arith.constant 0 : index
    %c128_78 = arith.constant 128 : index
    %96 = vector.load %arg7[%c0_77, %c128_78] : memref<8x512xf32, #tpu.memory_space<vmem>>, vector<8x288xf32>
    tpu.vector_store %arg7[%c0_77, %c128_78], %95 {strides = array<i32>} : memref<8x512xf32, #tpu.memory_space<vmem>>, vector<8x288xf32>,
    %c0_79 = arith.constant 0 : index
    %c109_80 = arith.constant 109 : index
    %97 = vector.load %arg7[%c0_79, %c109_80] : memref<8x512xf32, #tpu.memory_space<vmem>>, vector<8x288xf32>
    %c0_81 = arith.constant 0 : index
    %c0_82 = arith.constant 0 : index
    %98 = vector.load %arg8[%c0_81, %c0_82] : memref<72x288xf32, #tpu.memory_space<vmem>>, vector<8x288xf32>
    tpu.vector_store %arg8[%c0_81, %c0_82], %97 {strides = array<i32>} : memref<72x288xf32, #tpu.memory_space<vmem>>, vector<8x288xf32>,
    %c0_83 = arith.constant 0 : index
    %c110_84 = arith.constant 110 : index
    %99 = vector.load %arg7[%c0_83, %c110_84] : memref<8x512xf32, #tpu.memory_space<vmem>>, vector<8x288xf32>
    %c8_85 = arith.constant 8 : index
    %c0_86 = arith.constant 0 : index
    %100 = vector.load %arg8[%c8_85, %c0_86] : memref<72x288xf32, #tpu.memory_space<vmem>>, vector<8x288xf32>
    tpu.vector_store %arg8[%c8_85, %c0_86], %99 {strides = array<i32>} : memref<72x288xf32, #tpu.memory_space<vmem>>, vector<8x288xf32>,
    %c0_87 = arith.constant 0 : index
    %c111_88 = arith.constant 111 : index
    %101 = vector.load %arg7[%c0_87, %c111_88] : memref<8x512xf32, #tpu.memory_space<vmem>>, vector<8x288xf32>
    %c16_89 = arith.constant 16 : index
    %c0_90 = arith.constant 0 : index
    %102 = vector.load %arg8[%c16_89, %c0_90] : memref<72x288xf32, #tpu.memory_space<vmem>>, vector<8x288xf32>
    tpu.vector_store %arg8[%c16_89, %c0_90], %101 {strides = array<i32>} : memref<72x288xf32, #tpu.memory_space<vmem>>, vector<8x288xf32>,
    %c0_91 = arith.constant 0 : index
    %c127_92 = arith.constant 127 : index
    %103 = vector.load %arg7[%c0_91, %c127_92] : memref<8x512xf32, #tpu.memory_space<vmem>>, vector<8x288xf32>
    %c24_93 = arith.constant 24 : index
    %c0_94 = arith.constant 0 : index
    %104 = vector.load %arg8[%c24_93, %c0_94] : memref<72x288xf32, #tpu.memory_space<vmem>>, vector<8x288xf32>
    tpu.vector_store %arg8[%c24_93, %c0_94], %103 {strides = array<i32>} : memref<72x288xf32, #tpu.memory_space<vmem>>, vector<8x288xf32>,
    %c0_95 = arith.constant 0 : index
    %c128_96 = arith.constant 128 : index
    %105 = vector.load %arg7[%c0_95, %c128_96] : memref<8x512xf32, #tpu.memory_space<vmem>>, vector<8x288xf32>
    %c32_97 = arith.constant 32 : index
    %c0_98 = arith.constant 0 : index
    %106 = vector.load %arg8[%c32_97, %c0_98] : memref<72x288xf32, #tpu.memory_space<vmem>>, vector<8x288xf32>
    tpu.vector_store %arg8[%c32_97, %c0_98], %105 {strides = array<i32>} : memref<72x288xf32, #tpu.memory_space<vmem>>, vector<8x288xf32>,
    %c0_99 = arith.constant 0 : index
    %c129_100 = arith.constant 129 : index
    %107 = vector.load %arg7[%c0_99, %c129_100] : memref<8x512xf32, #tpu.memory_space<vmem>>, vector<8x288xf32>
    %c40_101 = arith.constant 40 : index
    %c0_102 = arith.constant 0 : index
    %108 = vector.load %arg8[%c40_101, %c0_102] : memref<72x288xf32, #tpu.memory_space<vmem>>, vector<8x288xf32>
    tpu.vector_store %arg8[%c40_101, %c0_102], %107 {strides = array<i32>} : memref<72x288xf32, #tpu.memory_space<vmem>>, vector<8x288xf32>,
    %c0_103 = arith.constant 0 : index
    %c145_104 = arith.constant 145 : index
    %109 = vector.load %arg7[%c0_103, %c145_104] : memref<8x512xf32, #tpu.memory_space<vmem>>, vector<8x288xf32>
    %c48_105 = arith.constant 48 : index
    %c0_106 = arith.constant 0 : index
    %110 = vector.load %arg8[%c48_105, %c0_106] : memref<72x288xf32, #tpu.memory_space<vmem>>, vector<8x288xf32>
    tpu.vector_store %arg8[%c48_105, %c0_106], %109 {strides = array<i32>} : memref<72x288xf32, #tpu.memory_space<vmem>>, vector<8x288xf32>,
    %c0_107 = arith.constant 0 : index
    %c146_108 = arith.constant 146 : index
    %111 = vector.load %arg7[%c0_107, %c146_108] : memref<8x512xf32, #tpu.memory_space<vmem>>, vector<8x288xf32>
    %c56_109 = arith.constant 56 : index
    %c0_110 = arith.constant 0 : index
    %112 = vector.load %arg8[%c56_109, %c0_110] : memref<72x288xf32, #tpu.memory_space<vmem>>, vector<8x288xf32>
    tpu.vector_store %arg8[%c56_109, %c0_110], %111 {strides = array<i32>} : memref<72x288xf32, #tpu.memory_space<vmem>>, vector<8x288xf32>,
    %c0_111 = arith.constant 0 : index
    %c147_112 = arith.constant 147 : index
    %113 = vector.load %arg7[%c0_111, %c147_112] : memref<8x512xf32, #tpu.memory_space<vmem>>, vector<8x288xf32>
    %c64_113 = arith.constant 64 : index
    %c0_114 = arith.constant 0 : index
    %114 = vector.load %arg8[%c64_113, %c0_114] : memref<72x288xf32, #tpu.memory_space<vmem>>, vector<8x288xf32>
    tpu.vector_store %arg8[%c64_113, %c0_114], %113 {strides = array<i32>} : memref<72x288xf32, #tpu.memory_space<vmem>>, vector<8x288xf32>,
    %c48_115 = arith.constant 48 : index
    %c0_116 = arith.constant 0 : index
    %115 = vector.load %arg4[%c48_115, %c0_116] : memref<128x72xbf16, #tpu.memory_space<vmem>>, vector<8x72xbf16>
    %c0_117 = arith.constant 0 : index
    %c0_118 = arith.constant 0 : index
    %116 = vector.load %arg8[%c0_117, %c0_118] : memref<72x288xf32, #tpu.memory_space<vmem>>, vector<72x288xf32>
    %117 = arith.truncf %116 : vector<72x288xf32> to vector<72x288xbf16>
    %cst_119 = arith.constant dense<0.000000e+00> : vector<8x288xf32>
    %118 = tpu.matmul %115, %117, %cst_119 {dimension_numbers = #tpu.dot_dimension_numbers<[1], [0], [0], [1], [0, 0, 1, 1], [], []>} : vector<8x72xbf16>, vector<72x288xbf16>, vector<8x288xf32> -> vector<8x288xf32>
    %c56_120 = arith.constant 56 : index
    %c0_121 = arith.constant 0 : index
    %119 = vector.load %arg5[%c56_120, %c0_121] : memref<136x1xf32, #tpu.memory_space<vmem>>, vector<8x1xf32>
    %120 = vector.broadcast %119 : vector<8x1xf32> to vector<8x288xf32>
    %121 = arith.addf %118, %120 : vector<8x288xf32>
    %122 = arith.addf %121, %36 : vector<8x288xf32>
    %123 = vector.broadcast %2 : vector<1x288xf32> to vector<8x288xf32>
    %124 = arith.mulf %122, %123 : vector<8x288xf32>
    %c0_122 = arith.constant 0 : index
    %c128_123 = arith.constant 128 : index
    %125 = vector.load %arg7[%c0_122, %c128_123] : memref<8x512xf32, #tpu.memory_space<vmem>>, vector<8x288xf32>
    tpu.vector_store %arg7[%c0_122, %c128_123], %124 {strides = array<i32>} : memref<8x512xf32, #tpu.memory_space<vmem>>, vector<8x288xf32>,
    %c0_124 = arith.constant 0 : index
    %c109_125 = arith.constant 109 : index
    %126 = vector.load %arg7[%c0_124, %c109_125] : memref<8x512xf32, #tpu.memory_space<vmem>>, vector<8x288xf32>
    %c0_126 = arith.constant 0 : index
    %c0_127 = arith.constant 0 : index
    %127 = vector.load %arg8[%c0_126, %c0_127] : memref<72x288xf32, #tpu.memory_space<vmem>>, vector<8x288xf32>
    tpu.vector_store %arg8[%c0_126, %c0_127], %126 {strides = array<i32>} : memref<72x288xf32, #tpu.memory_space<vmem>>, vector<8x288xf32>,
    %c0_128 = arith.constant 0 : index
    %c110_129 = arith.constant 110 : index
    %128 = vector.load %arg7[%c0_128, %c110_129] : memref<8x512xf32, #tpu.memory_space<vmem>>, vector<8x288xf32>
    %c8_130 = arith.constant 8 : index
    %c0_131 = arith.constant 0 : index
    %129 = vector.load %arg8[%c8_130, %c0_131] : memref<72x288xf32, #tpu.memory_space<vmem>>, vector<8x288xf32>
    tpu.vector_store %arg8[%c8_130, %c0_131], %128 {strides = array<i32>} : memref<72x288xf32, #tpu.memory_space<vmem>>, vector<8x288xf32>,
    %c0_132 = arith.constant 0 : index
    %c111_133 = arith.constant 111 : index
    %130 = vector.load %arg7[%c0_132, %c111_133] : memref<8x512xf32, #tpu.memory_space<vmem>>, vector<8x288xf32>
    %c16_134 = arith.constant 16 : index
    %c0_135 = arith.constant 0 : index
    %131 = vector.load %arg8[%c16_134, %c0_135] : memref<72x288xf32, #tpu.memory_space<vmem>>, vector<8x288xf32>
    tpu.vector_store %arg8[%c16_134, %c0_135], %130 {strides = array<i32>} : memref<72x288xf32, #tpu.memory_space<vmem>>, vector<8x288xf32>,
    %c0_136 = arith.constant 0 : index
    %c127_137 = arith.constant 127 : index
    %132 = vector.load %arg7[%c0_136, %c127_137] : memref<8x512xf32, #tpu.memory_space<vmem>>, vector<8x288xf32>
    %c24_138 = arith.constant 24 : index
    %c0_139 = arith.constant 0 : index
    %133 = vector.load %arg8[%c24_138, %c0_139] : memref<72x288xf32, #tpu.memory_space<vmem>>, vector<8x288xf32>
    tpu.vector_store %arg8[%c24_138, %c0_139], %132 {strides = array<i32>} : memref<72x288xf32, #tpu.memory_space<vmem>>, vector<8x288xf32>,
    %c0_140 = arith.constant 0 : index
    %c128_141 = arith.constant 128 : index
    %134 = vector.load %arg7[%c0_140, %c128_141] : memref<8x512xf32, #tpu.memory_space<vmem>>, vector<8x288xf32>
    %c32_142 = arith.constant 32 : index
    %c0_143 = arith.constant 0 : index
    %135 = vector.load %arg8[%c32_142, %c0_143] : memref<72x288xf32, #tpu.memory_space<vmem>>, vector<8x288xf32>
    tpu.vector_store %arg8[%c32_142, %c0_143], %134 {strides = array<i32>} : memref<72x288xf32, #tpu.memory_space<vmem>>, vector<8x288xf32>,
    %c0_144 = arith.constant 0 : index
    %c129_145 = arith.constant 129 : index
    %136 = vector.load %arg7[%c0_144, %c129_145] : memref<8x512xf32, #tpu.memory_space<vmem>>, vector<8x288xf32>
    %c40_146 = arith.constant 40 : index
    %c0_147 = arith.constant 0 : index
    %137 = vector.load %arg8[%c40_146, %c0_147] : memref<72x288xf32, #tpu.memory_space<vmem>>, vector<8x288xf32>
    tpu.vector_store %arg8[%c40_146, %c0_147], %136 {strides = array<i32>} : memref<72x288xf32, #tpu.memory_space<vmem>>, vector<8x288xf32>,
    %c0_148 = arith.constant 0 : index
    %c145_149 = arith.constant 145 : index
    %138 = vector.load %arg7[%c0_148, %c145_149] : memref<8x512xf32, #tpu.memory_space<vmem>>, vector<8x288xf32>
    %c48_150 = arith.constant 48 : index
    %c0_151 = arith.constant 0 : index
    %139 = vector.load %arg8[%c48_150, %c0_151] : memref<72x288xf32, #tpu.memory_space<vmem>>, vector<8x288xf32>
    tpu.vector_store %arg8[%c48_150, %c0_151], %138 {strides = array<i32>} : memref<72x288xf32, #tpu.memory_space<vmem>>, vector<8x288xf32>,
    %c0_152 = arith.constant 0 : index
    %c146_153 = arith.constant 146 : index
    %140 = vector.load %arg7[%c0_152, %c146_153] : memref<8x512xf32, #tpu.memory_space<vmem>>, vector<8x288xf32>
    %c56_154 = arith.constant 56 : index
    %c0_155 = arith.constant 0 : index
    %141 = vector.load %arg8[%c56_154, %c0_155] : memref<72x288xf32, #tpu.memory_space<vmem>>, vector<8x288xf32>
    tpu.vector_store %arg8[%c56_154, %c0_155], %140 {strides = array<i32>} : memref<72x288xf32, #tpu.memory_space<vmem>>, vector<8x288xf32>,
    %c0_156 = arith.constant 0 : index
    %c147_157 = arith.constant 147 : index
    %142 = vector.load %arg7[%c0_156, %c147_157] : memref<8x512xf32, #tpu.memory_space<vmem>>, vector<8x288xf32>
    %c64_158 = arith.constant 64 : index
    %c0_159 = arith.constant 0 : index
    %143 = vector.load %arg8[%c64_158, %c0_159] : memref<72x288xf32, #tpu.memory_space<vmem>>, vector<8x288xf32>
    tpu.vector_store %arg8[%c64_158, %c0_159], %142 {strides = array<i32>} : memref<72x288xf32, #tpu.memory_space<vmem>>, vector<8x288xf32>,
    %c56_160 = arith.constant 56 : index
    %c0_161 = arith.constant 0 : index
    %144 = vector.load %arg4[%c56_160, %c0_161] : memref<128x72xbf16, #tpu.memory_space<vmem>>, vector<36x72xbf16>
    %c0_162 = arith.constant 0 : index
    %c0_163 = arith.constant 0 : index
    %145 = vector.load %arg8[%c0_162, %c0_163] : memref<72x288xf32, #tpu.memory_space<vmem>>, vector<72x288xf32>
    %146 = arith.truncf %145 : vector<72x288xf32> to vector<72x288xbf16>
    %cst_164 = arith.constant dense<0.000000e+00> : vector<36x288xf32>
    %147 = tpu.matmul %144, %146, %cst_164 {dimension_numbers = #tpu.dot_dimension_numbers<[1], [0], [0], [1], [0, 0, 1, 1], [], []>} : vector<36x72xbf16>, vector<72x288xbf16>, vector<36x288xf32> -> vector<36x288xf32>
    %c64_165 = arith.constant 64 : index
    %c0_166 = arith.constant 0 : index
    %148 = vector.load %arg5[%c64_165, %c0_166] : memref<136x1xf32, #tpu.memory_space<vmem>>, vector<36x1xf32>
    %149 = vector.broadcast %148 : vector<36x1xf32> to vector<36x288xf32>
    %150 = arith.addf %147, %149 : vector<36x288xf32>
    %151 = vector.extract_strided_slice %150 {offsets = [32, 0], sizes = [4, 288], strides = [1, 1]} : vector<36x288xf32> to vector<4x288xf32>
    %cst_167 = arith.constant dense<0xFF800000> : vector<288xf32>
    %152 = vector.multi_reduction <maximumf>, %151, %cst_167 [0] : vector<4x288xf32> to vector<288xf32>
    %153 = vector.shape_cast %152 : vector<288xf32> to vector<1x288xf32>
    %154 = vector.broadcast %153 : vector<1x288xf32> to vector<4x288xf32>
    %155 = arith.subf %151, %154 : vector<4x288xf32>
    %156 = math.exp %155 : vector<4x288xf32>
    %cst_168 = arith.constant dense<0.000000e+00> : vector<288xf32>
    %157 = vector.multi_reduction <add>, %156, %cst_168 [0] : vector<4x288xf32> to vector<288xf32>
    %158 = vector.shape_cast %157 : vector<288xf32> to vector<1x288xf32>
    %159 = vector.broadcast %158 : vector<1x288xf32> to vector<4x288xf32>
    %160 = arith.divf %156, %159 : vector<4x288xf32>
    %161 = vector.extract_strided_slice %150 {offsets = [0, 0], sizes = [8, 288], strides = [1, 1]} : vector<36x288xf32> to vector<8x288xf32>
    %162 = vector.extract_strided_slice %160 {offsets = [0, 0], sizes = [1, 288], strides = [1, 1]} : vector<4x288xf32> to vector<1x288xf32>
    %163 = vector.broadcast %162 : vector<1x288xf32> to vector<8x288xf32>
    %164 = arith.mulf %161, %163 : vector<8x288xf32>
    %165 = vector.extract_strided_slice %150 {offsets = [8, 0], sizes = [8, 288], strides = [1, 1]} : vector<36x288xf32> to vector<8x288xf32>
    %166 = vector.extract_strided_slice %160 {offsets = [1, 0], sizes = [1, 288], strides = [1, 1]} : vector<4x288xf32> to vector<1x288xf32>
    %167 = vector.broadcast %166 : vector<1x288xf32> to vector<8x288xf32>
    %168 = arith.mulf %165, %167 : vector<8x288xf32>
    %169 = arith.addf %164, %168 : vector<8x288xf32>
    %170 = vector.extract_strided_slice %150 {offsets = [16, 0], sizes = [8, 288], strides = [1, 1]} : vector<36x288xf32> to vector<8x288xf32>
    %171 = vector.extract_strided_slice %160 {offsets = [2, 0], sizes = [1, 288], strides = [1, 1]} : vector<4x288xf32> to vector<1x288xf32>
    %172 = vector.broadcast %171 : vector<1x288xf32> to vector<8x288xf32>
    %173 = arith.mulf %170, %172 : vector<8x288xf32>
    %174 = arith.addf %169, %173 : vector<8x288xf32>
    %175 = vector.extract_strided_slice %150 {offsets = [24, 0], sizes = [8, 288], strides = [1, 1]} : vector<36x288xf32> to vector<8x288xf32>
    %176 = vector.extract_strided_slice %160 {offsets = [3, 0], sizes = [1, 288], strides = [1, 1]} : vector<4x288xf32> to vector<1x288xf32>
    %177 = vector.broadcast %176 : vector<1x288xf32> to vector<8x288xf32>
    %178 = arith.mulf %175, %177 : vector<8x288xf32>
    %179 = arith.addf %174, %178 : vector<8x288xf32>
    %180 = arith.addf %179, %122 : vector<8x288xf32>
    %181 = vector.broadcast %2 : vector<1x288xf32> to vector<8x288xf32>
    %182 = arith.mulf %180, %181 : vector<8x288xf32>
    %c0_169 = arith.constant 0 : index
    %c128_170 = arith.constant 128 : index
    %183 = vector.load %arg7[%c0_169, %c128_170] : memref<8x512xf32, #tpu.memory_space<vmem>>, vector<8x288xf32>
    tpu.vector_store %arg7[%c0_169, %c128_170], %182 {strides = array<i32>} : memref<8x512xf32, #tpu.memory_space<vmem>>, vector<8x288xf32>,
    %c0_171 = arith.constant 0 : index
    %c109_172 = arith.constant 109 : index
    %184 = vector.load %arg7[%c0_171, %c109_172] : memref<8x512xf32, #tpu.memory_space<vmem>>, vector<8x288xf32>
    %c0_173 = arith.constant 0 : index
    %c0_174 = arith.constant 0 : index
    %185 = vector.load %arg8[%c0_173, %c0_174] : memref<72x288xf32, #tpu.memory_space<vmem>>, vector<8x288xf32>
    tpu.vector_store %arg8[%c0_173, %c0_174], %184 {strides = array<i32>} : memref<72x288xf32, #tpu.memory_space<vmem>>, vector<8x288xf32>,
    %c0_175 = arith.constant 0 : index
    %c110_176 = arith.constant 110 : index
    %186 = vector.load %arg7[%c0_175, %c110_176] : memref<8x512xf32, #tpu.memory_space<vmem>>, vector<8x288xf32>
    %c8_177 = arith.constant 8 : index
    %c0_178 = arith.constant 0 : index
    %187 = vector.load %arg8[%c8_177, %c0_178] : memref<72x288xf32, #tpu.memory_space<vmem>>, vector<8x288xf32>
    tpu.vector_store %arg8[%c8_177, %c0_178], %186 {strides = array<i32>} : memref<72x288xf32, #tpu.memory_space<vmem>>, vector<8x288xf32>,
    %c0_179 = arith.constant 0 : index
    %c111_180 = arith.constant 111 : index
    %188 = vector.load %arg7[%c0_179, %c111_180] : memref<8x512xf32, #tpu.memory_space<vmem>>, vector<8x288xf32>
    %c16_181 = arith.constant 16 : index
    %c0_182 = arith.constant 0 : index
    %189 = vector.load %arg8[%c16_181, %c0_182] : memref<72x288xf32, #tpu.memory_space<vmem>>, vector<8x288xf32>
    tpu.vector_store %arg8[%c16_181, %c0_182], %188 {strides = array<i32>} : memref<72x288xf32, #tpu.memory_space<vmem>>, vector<8x288xf32>,
    %c0_183 = arith.constant 0 : index
    %c127_184 = arith.constant 127 : index
    %190 = vector.load %arg7[%c0_183, %c127_184] : memref<8x512xf32, #tpu.memory_space<vmem>>, vector<8x288xf32>
    %c24_185 = arith.constant 24 : index
    %c0_186 = arith.constant 0 : index
    %191 = vector.load %arg8[%c24_185, %c0_186] : memref<72x288xf32, #tpu.memory_space<vmem>>, vector<8x288xf32>
    tpu.vector_store %arg8[%c24_185, %c0_186], %190 {strides = array<i32>} : memref<72x288xf32, #tpu.memory_space<vmem>>, vector<8x288xf32>,
    %c0_187 = arith.constant 0 : index
    %c128_188 = arith.constant 128 : index
    %192 = vector.load %arg7[%c0_187, %c128_188] : memref<8x512xf32, #tpu.memory_space<vmem>>, vector<8x288xf32>
    %c32_189 = arith.constant 32 : index
    %c0_190 = arith.constant 0 : index
    %193 = vector.load %arg8[%c32_189, %c0_190] : memref<72x288xf32, #tpu.memory_space<vmem>>, vector<8x288xf32>
    tpu.vector_store %arg8[%c32_189, %c0_190], %192 {strides = array<i32>} : memref<72x288xf32, #tpu.memory_space<vmem>>, vector<8x288xf32>,
    %c0_191 = arith.constant 0 : index
    %c129_192 = arith.constant 129 : index
    %194 = vector.load %arg7[%c0_191, %c129_192] : memref<8x512xf32, #tpu.memory_space<vmem>>, vector<8x288xf32>
    %c40_193 = arith.constant 40 : index
    %c0_194 = arith.constant 0 : index
    %195 = vector.load %arg8[%c40_193, %c0_194] : memref<72x288xf32, #tpu.memory_space<vmem>>, vector<8x288xf32>
    tpu.vector_store %arg8[%c40_193, %c0_194], %194 {strides = array<i32>} : memref<72x288xf32, #tpu.memory_space<vmem>>, vector<8x288xf32>,
    %c0_195 = arith.constant 0 : index
    %c145_196 = arith.constant 145 : index
    %196 = vector.load %arg7[%c0_195, %c145_196] : memref<8x512xf32, #tpu.memory_space<vmem>>, vector<8x288xf32>
    %c48_197 = arith.constant 48 : index
    %c0_198 = arith.constant 0 : index
    %197 = vector.load %arg8[%c48_197, %c0_198] : memref<72x288xf32, #tpu.memory_space<vmem>>, vector<8x288xf32>
    tpu.vector_store %arg8[%c48_197, %c0_198], %196 {strides = array<i32>} : memref<72x288xf32, #tpu.memory_space<vmem>>, vector<8x288xf32>,
    %c0_199 = arith.constant 0 : index
    %c146_200 = arith.constant 146 : index
    %198 = vector.load %arg7[%c0_199, %c146_200] : memref<8x512xf32, #tpu.memory_space<vmem>>, vector<8x288xf32>
    %c56_201 = arith.constant 56 : index
    %c0_202 = arith.constant 0 : index
    %199 = vector.load %arg8[%c56_201, %c0_202] : memref<72x288xf32, #tpu.memory_space<vmem>>, vector<8x288xf32>
    tpu.vector_store %arg8[%c56_201, %c0_202], %198 {strides = array<i32>} : memref<72x288xf32, #tpu.memory_space<vmem>>, vector<8x288xf32>,
    %c0_203 = arith.constant 0 : index
    %c147_204 = arith.constant 147 : index
    %200 = vector.load %arg7[%c0_203, %c147_204] : memref<8x512xf32, #tpu.memory_space<vmem>>, vector<8x288xf32>
    %c64_205 = arith.constant 64 : index
    %c0_206 = arith.constant 0 : index
    %201 = vector.load %arg8[%c64_205, %c0_206] : memref<72x288xf32, #tpu.memory_space<vmem>>, vector<8x288xf32>
    tpu.vector_store %arg8[%c64_205, %c0_206], %200 {strides = array<i32>} : memref<72x288xf32, #tpu.memory_space<vmem>>, vector<8x288xf32>,
    %c96 = arith.constant 96 : index
    %c0_207 = arith.constant 0 : index
    %202 = vector.load %arg4[%c96, %c0_207] : memref<128x72xbf16, #tpu.memory_space<vmem>>, vector<20x72xbf16>
    %c0_208 = arith.constant 0 : index
    %c0_209 = arith.constant 0 : index
    %203 = vector.load %arg8[%c0_208, %c0_209] : memref<72x288xf32, #tpu.memory_space<vmem>>, vector<72x288xf32>
    %204 = arith.truncf %203 : vector<72x288xf32> to vector<72x288xbf16>
    %cst_210 = arith.constant dense<0.000000e+00> : vector<20x288xf32>
    %205 = tpu.matmul %202, %204, %cst_210 {dimension_numbers = #tpu.dot_dimension_numbers<[1], [0], [0], [1], [0, 0, 1, 1], [], []>} : vector<20x72xbf16>, vector<72x288xbf16>, vector<20x288xf32> -> vector<20x288xf32>
    %c104 = arith.constant 104 : index
    %c0_211 = arith.constant 0 : index
    %206 = vector.load %arg5[%c104, %c0_211] : memref<136x1xf32, #tpu.memory_space<vmem>>, vector<20x1xf32>
    %207 = vector.broadcast %206 : vector<20x1xf32> to vector<20x288xf32>
    %208 = arith.addf %205, %207 : vector<20x288xf32>
    %209 = vector.extract_strided_slice %208 {offsets = [16, 0], sizes = [4, 288], strides = [1, 1]} : vector<20x288xf32> to vector<4x288xf32>
    %cst_212 = arith.constant dense<0xFF800000> : vector<288xf32>
    %210 = vector.multi_reduction <maximumf>, %209, %cst_212 [0] : vector<4x288xf32> to vector<288xf32>
    %211 = vector.shape_cast %210 : vector<288xf32> to vector<1x288xf32>
    %212 = vector.broadcast %211 : vector<1x288xf32> to vector<4x288xf32>
    %213 = arith.subf %209, %212 : vector<4x288xf32>
    %214 = math.exp %213 : vector<4x288xf32>
    %cst_213 = arith.constant dense<0.000000e+00> : vector<288xf32>
    %215 = vector.multi_reduction <add>, %214, %cst_213 [0] : vector<4x288xf32> to vector<288xf32>
    %216 = vector.shape_cast %215 : vector<288xf32> to vector<1x288xf32>
    %217 = vector.broadcast %216 : vector<1x288xf32> to vector<4x288xf32>
    %218 = arith.divf %214, %217 : vector<4x288xf32>
    %219 = vector.extract_strided_slice %208 {offsets = [0, 0], sizes = [4, 288], strides = [1, 1]} : vector<20x288xf32> to vector<4x288xf32>
    %220 = vector.extract_strided_slice %218 {offsets = [0, 0], sizes = [1, 288], strides = [1, 1]} : vector<4x288xf32> to vector<1x288xf32>
    %221 = vector.broadcast %220 : vector<1x288xf32> to vector<4x288xf32>
    %222 = arith.mulf %219, %221 : vector<4x288xf32>
    %223 = vector.extract_strided_slice %208 {offsets = [4, 0], sizes = [4, 288], strides = [1, 1]} : vector<20x288xf32> to vector<4x288xf32>
    %224 = vector.extract_strided_slice %218 {offsets = [1, 0], sizes = [1, 288], strides = [1, 1]} : vector<4x288xf32> to vector<1x288xf32>
    %225 = vector.broadcast %224 : vector<1x288xf32> to vector<4x288xf32>
    %226 = arith.mulf %223, %225 : vector<4x288xf32>
    %227 = arith.addf %222, %226 : vector<4x288xf32>
    %228 = vector.extract_strided_slice %208 {offsets = [8, 0], sizes = [4, 288], strides = [1, 1]} : vector<20x288xf32> to vector<4x288xf32>
    %229 = vector.extract_strided_slice %218 {offsets = [2, 0], sizes = [1, 288], strides = [1, 1]} : vector<4x288xf32> to vector<1x288xf32>
    %230 = vector.broadcast %229 : vector<1x288xf32> to vector<4x288xf32>
    %231 = arith.mulf %228, %230 : vector<4x288xf32>
    %232 = arith.addf %227, %231 : vector<4x288xf32>
    %233 = vector.extract_strided_slice %208 {offsets = [12, 0], sizes = [4, 288], strides = [1, 1]} : vector<20x288xf32> to vector<4x288xf32>
    %234 = vector.extract_strided_slice %218 {offsets = [3, 0], sizes = [1, 288], strides = [1, 1]} : vector<4x288xf32> to vector<1x288xf32>
    %235 = vector.broadcast %234 : vector<1x288xf32> to vector<4x288xf32>
    %236 = arith.mulf %233, %235 : vector<4x288xf32>
    %237 = arith.addf %232, %236 : vector<4x288xf32>
    %238 = vector.broadcast %2 : vector<1x288xf32> to vector<4x288xf32>
    %239 = arith.mulf %237, %238 : vector<4x288xf32>
    %c0_214 = arith.constant 0 : index
    %c128_215 = arith.constant 128 : index
    %240 = vector.load %arg7[%c0_214, %c128_215] : memref<8x512xf32, #tpu.memory_space<vmem>>, vector<4x288xf32>
    tpu.vector_store %arg7[%c0_214, %c128_215], %239 {strides = array<i32>} : memref<8x512xf32, #tpu.memory_space<vmem>>, vector<4x288xf32>,
    %c0_216 = arith.constant 0 : index
    %c109_217 = arith.constant 109 : index
    %241 = vector.load %arg7[%c0_216, %c109_217] : memref<8x512xf32, #tpu.memory_space<vmem>>, vector<4x288xf32>
    %c0_218 = arith.constant 0 : index
    %c0_219 = arith.constant 0 : index
    %242 = vector.load %arg8[%c0_218, %c0_219] : memref<72x288xf32, #tpu.memory_space<vmem>>, vector<4x288xf32>
    tpu.vector_store %arg8[%c0_218, %c0_219], %241 {strides = array<i32>} : memref<72x288xf32, #tpu.memory_space<vmem>>, vector<4x288xf32>,
    %c0_220 = arith.constant 0 : index
    %c110_221 = arith.constant 110 : index
    %243 = vector.load %arg7[%c0_220, %c110_221] : memref<8x512xf32, #tpu.memory_space<vmem>>, vector<4x288xf32>
    %c4_222 = arith.constant 4 : index
    %c0_223 = arith.constant 0 : index
    %244 = vector.load %arg8[%c4_222, %c0_223] : memref<72x288xf32, #tpu.memory_space<vmem>>, vector<4x288xf32>
    tpu.vector_store %arg8[%c4_222, %c0_223], %243 {strides = array<i32>} : memref<72x288xf32, #tpu.memory_space<vmem>>, vector<4x288xf32>,
    %c0_224 = arith.constant 0 : index
    %c111_225 = arith.constant 111 : index
    %245 = vector.load %arg7[%c0_224, %c111_225] : memref<8x512xf32, #tpu.memory_space<vmem>>, vector<4x288xf32>
    %c8_226 = arith.constant 8 : index
    %c0_227 = arith.constant 0 : index
    %246 = vector.load %arg8[%c8_226, %c0_227] : memref<72x288xf32, #tpu.memory_space<vmem>>, vector<4x288xf32>
    tpu.vector_store %arg8[%c8_226, %c0_227], %245 {strides = array<i32>} : memref<72x288xf32, #tpu.memory_space<vmem>>, vector<4x288xf32>,
    %c0_228 = arith.constant 0 : index
    %c127_229 = arith.constant 127 : index
    %247 = vector.load %arg7[%c0_228, %c127_229] : memref<8x512xf32, #tpu.memory_space<vmem>>, vector<4x288xf32>
    %c12 = arith.constant 12 : index
    %c0_230 = arith.constant 0 : index
    %248 = vector.load %arg8[%c12, %c0_230] : memref<72x288xf32, #tpu.memory_space<vmem>>, vector<4x288xf32>
    tpu.vector_store %arg8[%c12, %c0_230], %247 {strides = array<i32>} : memref<72x288xf32, #tpu.memory_space<vmem>>, vector<4x288xf32>,
    %c0_231 = arith.constant 0 : index
    %c128_232 = arith.constant 128 : index
    %249 = vector.load %arg7[%c0_231, %c128_232] : memref<8x512xf32, #tpu.memory_space<vmem>>, vector<4x288xf32>
    %c16_233 = arith.constant 16 : index
    %c0_234 = arith.constant 0 : index
    %250 = vector.load %arg8[%c16_233, %c0_234] : memref<72x288xf32, #tpu.memory_space<vmem>>, vector<4x288xf32>
    tpu.vector_store %arg8[%c16_233, %c0_234], %249 {strides = array<i32>} : memref<72x288xf32, #tpu.memory_space<vmem>>, vector<4x288xf32>,
    %c0_235 = arith.constant 0 : index
    %c129_236 = arith.constant 129 : index
    %251 = vector.load %arg7[%c0_235, %c129_236] : memref<8x512xf32, #tpu.memory_space<vmem>>, vector<4x288xf32>
    %c20 = arith.constant 20 : index
    %c0_237 = arith.constant 0 : index
    %252 = vector.load %arg8[%c20, %c0_237] : memref<72x288xf32, #tpu.memory_space<vmem>>, vector<4x288xf32>
    tpu.vector_store %arg8[%c20, %c0_237], %251 {strides = array<i32>} : memref<72x288xf32, #tpu.memory_space<vmem>>, vector<4x288xf32>,
    %c0_238 = arith.constant 0 : index
    %c145_239 = arith.constant 145 : index
    %253 = vector.load %arg7[%c0_238, %c145_239] : memref<8x512xf32, #tpu.memory_space<vmem>>, vector<4x288xf32>
    %c24_240 = arith.constant 24 : index
    %c0_241 = arith.constant 0 : index
    %254 = vector.load %arg8[%c24_240, %c0_241] : memref<72x288xf32, #tpu.memory_space<vmem>>, vector<4x288xf32>
    tpu.vector_store %arg8[%c24_240, %c0_241], %253 {strides = array<i32>} : memref<72x288xf32, #tpu.memory_space<vmem>>, vector<4x288xf32>,
    %c0_242 = arith.constant 0 : index
    %c146_243 = arith.constant 146 : index
    %255 = vector.load %arg7[%c0_242, %c146_243] : memref<8x512xf32, #tpu.memory_space<vmem>>, vector<4x288xf32>
    %c28 = arith.constant 28 : index
    %c0_244 = arith.constant 0 : index
    %256 = vector.load %arg8[%c28, %c0_244] : memref<72x288xf32, #tpu.memory_space<vmem>>, vector<4x288xf32>
    tpu.vector_store %arg8[%c28, %c0_244], %255 {strides = array<i32>} : memref<72x288xf32, #tpu.memory_space<vmem>>, vector<4x288xf32>,
    %c0_245 = arith.constant 0 : index
    %c147_246 = arith.constant 147 : index
    %257 = vector.load %arg7[%c0_245, %c147_246] : memref<8x512xf32, #tpu.memory_space<vmem>>, vector<4x288xf32>
    %c32_247 = arith.constant 32 : index
    %c0_248 = arith.constant 0 : index
    %258 = vector.load %arg8[%c32_247, %c0_248] : memref<72x288xf32, #tpu.memory_space<vmem>>, vector<4x288xf32>
    tpu.vector_store %arg8[%c32_247, %c0_248], %257 {strides = array<i32>} : memref<72x288xf32, #tpu.memory_space<vmem>>, vector<4x288xf32>,
    %c120 = arith.constant 120 : index
    %c0_249 = arith.constant 0 : index
    %259 = vector.load %arg4[%c120, %c0_249] : memref<128x72xbf16, #tpu.memory_space<vmem>>, vector<4x36xbf16>
    %c0_250 = arith.constant 0 : index
    %c0_251 = arith.constant 0 : index
    %260 = vector.load %arg8[%c0_250, %c0_251] : memref<72x288xf32, #tpu.memory_space<vmem>>, vector<36x288xf32>
    %261 = arith.truncf %260 : vector<36x288xf32> to vector<36x288xbf16>
    %cst_252 = arith.constant dense<0.000000e+00> : vector<4x288xf32>
    %262 = tpu.matmul %259, %261, %cst_252 {dimension_numbers = #tpu.dot_dimension_numbers<[1], [0], [0], [1], [0, 0, 1, 1], [], []>} : vector<4x36xbf16>, vector<36x288xbf16>, vector<4x288xf32> -> vector<4x288xf32>
    %c128_253 = arith.constant 128 : index
    %c0_254 = arith.constant 0 : index
    %263 = vector.load %arg5[%c128_253, %c0_254] : memref<136x1xf32, #tpu.memory_space<vmem>>, vector<4x1xf32>
    %264 = vector.broadcast %263 : vector<4x1xf32> to vector<4x288xf32>
    %265 = arith.addf %262, %264 : vector<4x288xf32>
    %c0_255 = arith.constant 0 : index
    %c0_256 = arith.constant 0 : index
    %c0_257 = arith.constant 0 : index
    %266 = vector.load %arg2[%c0_255, %c0_256, %c0_257] : memref<1x4x288xf32, #tpu.memory_space<vmem>>, vector<1x4x288xf32>
    %267 = vector.shape_cast %266 : vector<1x4x288xf32> to vector<4x288xf32>
    %268 = arith.addf %265, %267 : vector<4x288xf32>
    %c0_258 = arith.constant 0 : index
    %c0_259 = arith.constant 0 : index
    %c0_260 = arith.constant 0 : index
    %269 = vector.load %arg6[%c0_258, %c0_259, %c0_260] : memref<1x4x288xf32, #tpu.memory_space<vmem>>, vector<1x4x288xf32>
    %270 = vector.shape_cast %269 : vector<1x4x288xf32> to vector<4x288xf32>
    %271 = vector.shape_cast %268 : vector<4x288xf32> to vector<1x4x288xf32>
    tpu.vector_store %arg6[%c0_258, %c0_259, %c0_260], %271 {strides = array<i32>} : memref<1x4x288xf32, #tpu.memory_space<vmem>>, vector<1x4x288xf32>,
    return
  }
  func.func @transform_0(%arg0: i32) -> (i32, i32, i32) {
    %c0_i32 = arith.constant 0 : i32
    %c0_i32_0 = arith.constant 0 : i32
    %c0_i32_1 = arith.constant 0 : i32
    return %arg0, %c0_i32, %c0_i32_0 : i32, i32, i32
  }
  func.func @transform_1(%arg0: i32) -> (i32, i32, i32) {
    %c0_i32 = arith.constant 0 : i32
    %c0_i32_0 = arith.constant 0 : i32
    %c0_i32_1 = arith.constant 0 : i32
    return %arg0, %c0_i32, %c0_i32_0 : i32, i32, i32
  }
  func.func @transform_2(%arg0: i32) -> (i32, i32) {
    %c0_i32 = arith.constant 0 : i32
    %c0_i32_0 = arith.constant 0 : i32
    %c0_i32_1 = arith.constant 0 : i32
    return %c0_i32, %c0_i32_0 : i32, i32
  }
  func.func @transform_3(%arg0: i32) -> (i32, i32) {
    %c0_i32 = arith.constant 0 : i32
    %c0_i32_0 = arith.constant 0 : i32
    %c0_i32_1 = arith.constant 0 : i32
    return %c0_i32, %c0_i32_0 : i32, i32
  }
  func.func @transform_4(%arg0: i32) -> (i32, i32) {
    %c0_i32 = arith.constant 0 : i32
    %c0_i32_0 = arith.constant 0 : i32
    %c0_i32_1 = arith.constant 0 : i32
    return %c0_i32, %c0_i32_0 : i32, i32
  }
  func.func @transform_5(%arg0: i32) -> (i32, i32, i32) {
    %c0_i32 = arith.constant 0 : i32
    %c0_i32_0 = arith.constant 0 : i32
    %c0_i32_1 = arith.constant 0 : i32
    return %arg0, %c0_i32, %c0_i32_0 : i32, i32, i32
  }
}

</mosaic_0001>

<llo_original>
// kernel: _lambda_.1
$region0: #{_lambda_.1}
  #allocation0 [shape = 'u32[]', space=smem, size = 0x4, offset = 0x4, fixed_abs, tag = 'smem constant byte address 0x4 - core index']
  #allocation1 [shape = 'u32[144,128]{1,0:T(1,128)}', space=vmem, size = 0x12000, scoped, tag = 'internal scratch']
  #allocation2 [shape = 'f32[8,512]{1,0:T(8,128)}', space=vmem, size = 0x4000, scoped, tag = 'scratch operand']
  #allocation3 [shape = 'f32[72,288]{1,0:T(8,128)}', space=vmem, size = 0x1b000, scoped, tag = 'scratch operand']
  %s0 = inlined_call_operand.vmem [shape: f32[2,1,288], index: 0, kind: input, shape index: {}]
  %s1 = inlined_call_operand.vmem [shape: f32[2,4,288], index: 1, kind: input, shape index: {}]
  %s2 = inlined_call_operand.vmem [shape: f32[1,288], index: 2, kind: input, shape index: {}]
  %s3 = inlined_call_operand.vmem [shape: bf16[128,72], index: 3, kind: input, shape index: {}]
  %s4 = inlined_call_operand.vmem [shape: f32[136,1], index: 4, kind: input, shape index: {}]
  %s5 = inlined_call_operand.vmem [shape: f32[2,4,288], index: 5, kind: output, shape index: {}]
  %s6 = sld [smem:[#allocation0]]
  $region53: #{_lambda_.1} parent=0
    _
  %s8 = ssub.s32 1, %s6
  %s9 = scalar_select 0, %s8, %s6
  loop: start=0, step=1, limit=4
  $region2: #{_lambda_.1} parent=0 // loop_pre_header
    _
  $region3: #{_lambda_.1} parent=0 // loop_header
    %s11 = sphi 0, %s15
    %p12 = scmp.ge.s32.totalorder %s11, 4
    %s21 = sphi 0, %s23
    %s24 = sphi 0, %s21
    %s25 = sphi 0, %s24
    %s41 = sphi 0, %s25
    %s47 = sphi 0, %s49
    %s50 = sphi 0, %s47
    %s51 = sphi 0, %s50
    %s67 = sphi 0, %s51
    %s71 = sphi 0, %s71
    %s73 = sphi 0, %s71
    %s74 = sphi 0, %s73
    %s88 = sphi 0, %s74
    %s92 = sphi 0, %s92
    %s94 = sphi 0, %s92
    %s95 = sphi 0, %s94
    %s109 = sphi 0, %s95
    %s113 = sphi 0, %s113
    %s115 = sphi 0, %s113
    %s116 = sphi 0, %s115
    %s130 = sphi 0, %s116
    %s136 = sphi 0, %s138
    %s139 = sphi 0, %s136
    %s140 = sphi 0, %s139
    %s156 = sphi 0, %s140
  $region4: #{_lambda_.1} parent=0 // loop_header_branch
    %14 = sbr.rel (%p12) target = $region8
  $region5: #{_lambda_.1} parent=0 // loop_body
    %s16 = ssub.s32 %s11, 1
    %s17 = ssub.s32 %s11, 2
    %s18 = sadd.s32 %s11, 1
    %s19 = ssub.s32 %s11, %s18
    %p20 = scmp.eq.s32.totalorder %s19, 0
    %s22 = sadd.s32 %s21, 1
    %s23 = scalar_select %p20, %s21, %s22
    %p26 = pneg %p20
    %p27 = scmp.eq.s32.totalorder %s11, 1
    %p28 = por %p26, %p27
    %p29 = scmp.ne.s32.totalorder %s21, %s24
    %p30 = scmp.eq.s32.totalorder %s11, 0
    %p31 = por %p29, %p30
    %p32 = scmp.ne.s32.totalorder %s21, %s24
    %p33 = scmp.eq.s32.totalorder %s16, 1
    %p34 = por %p32, %p33
    %p35 = scmp.ne.s32.totalorder %s24, %s25
    %p36 = scmp.eq.s32.totalorder %s16, 0
    %p37 = por %p35, %p36
    %p38 = scmp.ne.s32.totalorder %s24, %s25
    %p39 = scmp.eq.s32.totalorder %s17, 1
    %p40 = por %p38, %p39
    %p42 = scmp.ne.s32.totalorder %s25, %s41
    %p43 = scmp.eq.s32.totalorder %s17, 0
    %p44 = por %p42, %p43
    %s45 = ssub.s32 %s11, %s18
    %p46 = scmp.eq.s32.totalorder %s45, 0
    %s48 = sadd.s32 %s47, 1
    %s49 = scalar_select %p46, %s47, %s48
    %p52 = pneg %p46
    %p53 = scmp.eq.s32.totalorder %s11, 1
    %p54 = por %p52, %p53
    %p55 = scmp.ne.s32.totalorder %s47, %s50
    %p56 = scmp.eq.s32.totalorder %s11, 0
    %p57 = por %p55, %p56
    %p58 = scmp.ne.s32.totalorder %s47, %s50
    %p59 = scmp.eq.s32.totalorder %s16, 1
    %p60 = por %p58, %p59
    %p61 = scmp.ne.s32.totalorder %s50, %s51
    %p62 = scmp.eq.s32.totalorder %s16, 0
    %p63 = por %p61, %p62
    %p64 = scmp.ne.s32.totalorder %s50, %s51
    %p65 = scmp.eq.s32.totalorder %s17, 1
    %p66 = por %p64, %p65
    %p68 = scmp.ne.s32.totalorder %s51, %s67
    %p69 = scmp.eq.s32.totalorder %s17, 0
    %p70 = por %p68, %p69
    %s72 = sadd.s32 %s71, 1
    %p75 = scmp.eq.s32.totalorder %s11, 1
    %p76 = scmp.ne.s32.totalorder %s71, %s73
    %p77 = scmp.eq.s32.totalorder %s11, 0
    %p78 = por %p76, %p77
    %p79 = scmp.ne.s32.totalorder %s71, %s73
    %p80 = scmp.eq.s32.totalorder %s16, 1
    %p81 = por %p79, %p80
    %p82 = scmp.ne.s32.totalorder %s73, %s74
    %p83 = scmp.eq.s32.totalorder %s16, 0
    %p84 = por %p82, %p83
    %p85 = scmp.ne.s32.totalorder %s73, %s74
    %p86 = scmp.eq.s32.totalorder %s17, 1
    %p87 = por %p85, %p86
    %p89 = scmp.ne.s32.totalorder %s74, %s88
    %p90 = scmp.eq.s32.totalorder %s17, 0
    %p91 = por %p89, %p90
    %s93 = sadd.s32 %s92, 1
    %p96 = scmp.eq.s32.totalorder %s11, 1
    %p97 = scmp.ne.s32.totalorder %s92, %s94
    %p98 = scmp.eq.s32.totalorder %s11, 0
    %p99 = por %p97, %p98
    %p100 = scmp.ne.s32.totalorder %s92, %s94
    %p101 = scmp.eq.s32.totalorder %s16, 1
    %p102 = por %p100, %p101
    %p103 = scmp.ne.s32.totalorder %s94, %s95
    %p104 = scmp.eq.s32.totalorder %s16, 0
    %p105 = por %p103, %p104
    %p106 = scmp.ne.s32.totalorder %s94, %s95
    %p107 = scmp.eq.s32.totalorder %s17, 1
    %p108 = por %p106, %p107
    %p110 = scmp.ne.s32.totalorder %s95, %s109
    %p111 = scmp.eq.s32.totalorder %s17, 0
    %p112 = por %p110, %p111
    %s114 = sadd.s32 %s113, 1
    %p117 = scmp.eq.s32.totalorder %s11, 1
    %p118 = scmp.ne.s32.totalorder %s113, %s115
    %p119 = scmp.eq.s32.totalorder %s11, 0
    %p120 = por %p118, %p119
    %p121 = scmp.ne.s32.totalorder %s113, %s115
    %p122 = scmp.eq.s32.totalorder %s16, 1
    %p123 = por %p121, %p122
    %p124 = scmp.ne.s32.totalorder %s115, %s116
    %p125 = scmp.eq.s32.totalorder %s16, 0
    %p126 = por %p124, %p125
    %p127 = scmp.ne.s32.totalorder %s115, %s116
    %p128 = scmp.eq.s32.totalorder %s17, 1
    %p129 = por %p127, %p128
    %p131 = scmp.ne.s32.totalorder %s116, %s130
    %p132 = scmp.eq.s32.totalorder %s17, 0
    %p133 = por %p131, %p132
    %s134 = ssub.s32 %s11, %s18
    %p135 = scmp.eq.s32.totalorder %s134, 0
    %s137 = sadd.s32 %s136, 1
    %s138 = scalar_select %p135, %s136, %s137
    %p141 = pneg %p135
    %p142 = scmp.eq.s32.totalorder %s11, 1
    %p143 = por %p141, %p142
    %p144 = scmp.ne.s32.totalorder %s136, %s139
    %p145 = scmp.eq.s32.totalorder %s11, 0
    %p146 = por %p144, %p145
    %p147 = scmp.ne.s32.totalorder %s136, %s139
    %p148 = scmp.eq.s32.totalorder %s16, 1
    %p149 = por %p147, %p148
    %p150 = scmp.ne.s32.totalorder %s139, %s140
    %p151 = scmp.eq.s32.totalorder %s16, 0
    %p152 = por %p150, %p151
    %p153 = scmp.ne.s32.totalorder %s139, %s140
    %p154 = scmp.eq.s32.totalorder %s17, 1
    %p155 = por %p153, %p154
    %p157 = scmp.ne.s32.totalorder %s140, %s156
    %p158 = scmp.eq.s32.totalorder %s17, 0
    %p159 = por %p157, %p158
    %p160 = scmp.le.s32.totalorder 1, %s11
    %p161 = scmp.lt.s32.totalorder %s11, 3
    %p162 = pnand %p160, %p161
    %p163 = pneg %p162
    // Predicated region
    $region9: #{_lambda_.1} parent=5 // pred_check
      _
    $region10: #{_lambda_.1} parent=5 // pred_check_branch
      %165 = sbr.rel (%p162) target = $region12
    $region11: #{_lambda_.1} parent=5 // pred_region
      %s166 = ssub.s32 %s11, 1
      // Predicated region
      $region13: #{_lambda_.1} parent=11 // pred_check
        %p167 = pneg %p84
      $region14: #{_lambda_.1} parent=11 // pred_check_branch
        %169 = sbr.rel (%p167) target = $region16
      $region15: #{_lambda_.1} parent=11 // pred_region
        _
      $region16: #{_lambda_.1} parent=11 // pred_fallthru
        _
      // Predicated region
      $region17: #{_lambda_.1} parent=11 // pred_check
        %p170 = pneg %p105
      $region18: #{_lambda_.1} parent=11 // pred_check_branch
        %172 = sbr.rel (%p170) target = $region20
      $region19: #{_lambda_.1} parent=11 // pred_region
        _
      $region20: #{_lambda_.1} parent=11 // pred_fallthru
        _
      // Predicated region
      $region21: #{_lambda_.1} parent=11 // pred_check
        %p173 = pneg %p126
      $region22: #{_lambda_.1} parent=11 // pred_check_branch
        %175 = sbr.rel (%p173) target = $region24
      $region23: #{_lambda_.1} parent=11 // pred_region
        _
      $region24: #{_lambda_.1} parent=11 // pred_fallthru
        _
    $region12: #{_lambda_.1} parent=5 // pred_fallthru
      _
    %p176 = scmp.lt.s32.totalorder %s11, 2
    // Predicated region
    $region25: #{_lambda_.1} parent=5 // pred_check
      %p177 = pneg %p176
    $region26: #{_lambda_.1} parent=5 // pred_check_branch
      %179 = sbr.rel (%p177) target = $region28
    $region27: #{_lambda_.1} parent=5 // pred_region
      // Predicated region
      $region29: #{_lambda_.1} parent=27 // pred_check
        %p180 = pneg %p31
      $region30: #{_lambda_.1} parent=27 // pred_check_branch
        %182 = sbr.rel (%p180) target = $region32
      $region31: #{_lambda_.1} parent=27 // pred_region
        %p183 = scmp.lt.s32.totalorder %s11, 1
        %s184 = scalar_select %p183, %s11, 1
        %s185 = smul.addr %s184, 3
        %s186 = scalar_lea.vmem %s0, %s185
      $region32: #{_lambda_.1} parent=27 // pred_fallthru
        _
      // Predicated region
      $region33: #{_lambda_.1} parent=27 // pred_check
        %p187 = pneg %p57
      $region34: #{_lambda_.1} parent=27 // pred_check_branch
        %189 = sbr.rel (%p187) target = $region36
      $region35: #{_lambda_.1} parent=27 // pred_region
        %p190 = scmp.lt.s32.totalorder %s11, 1
        %s191 = scalar_select %p190, %s11, 1
        %s192 = smul.addr %s191, 3
        %s193 = smul.addr %s192, 4
        %s194 = scalar_lea.vmem %s1, %s193
      $region36: #{_lambda_.1} parent=27 // pred_fallthru
        _
    $region28: #{_lambda_.1} parent=5 // pred_fallthru
      _
    %p195 = scmp.le.s32.totalorder 1, %s11
    %p196 = scmp.lt.s32.totalorder %s11, 3
    %p197 = pnand %p195, %p196
    %p198 = pneg %p197
    // Predicated region
    $region37: #{_lambda_.1} parent=5 // pred_check
      _
    $region38: #{_lambda_.1} parent=5 // pred_check_branch
      %200 = sbr.rel (%p197) target = $region40
    $region39: #{_lambda_.1} parent=5 // pred_region
      %s201 = ssub.s32 %s11, 1
      %p202 = scmp.lt.s32.totalorder %s16, 1
      %s203 = scalar_select %p202, %s16, 1
      %s204 = smul.addr %s203, 3
      %s205 = scalar_lea.vmem %s0, %s204
      %p206 = pneg %p37
      %p207 = pneg %p34
      %p208 = scmp.lt.s32.totalorder %s16, 1
      %s209 = scalar_select %p208, %s16, 1
      %s210 = smul.addr %s209, 3
      %s211 = smul.addr %s210, 4
      %s212 = scalar_lea.vmem %s1, %s211
      %p213 = pneg %p63
      %p214 = pneg %p60
      %p215 = pneg %p84
      %p216 = pneg %p81
      %p217 = pneg %p105
      %p218 = pneg %p102
      %p219 = pneg %p126
      %p220 = pneg %p123
      %p221 = pneg %p152
      %p222 = pneg %p149
      %p223 = scmp.lt.s32.totalorder %s16, 1
      %s224 = scalar_select %p223, %s16, 1
      %s225 = smul.addr %s224, 3
      %s226 = smul.addr %s225, 4
      %s227 = scalar_lea.vmem %s5, %s226
      %p228 = scmp.lt.s32.totalorder %s16, 1
      %s229 = scalar_select %p228, %s16, 1
      %s230 = smul.addr %s229, 3
      %s231 = scalar_lea.vmem %s0, %s230
      %p232 = scmp.lt.s32.totalorder %s16, 1
      %s233 = scalar_select %p232, %s16, 1
      %s234 = smul.addr %s233, 3
      %s235 = smul.addr %s234, 4
      %s236 = scalar_lea.vmem %s1, %s235
      %p237 = scmp.lt.s32.totalorder %s16, 1
      %s238 = scalar_select %p237, %s16, 1
      %s239 = smul.addr %s238, 3
      %s240 = smul.addr %s239, 4
      %s241 = scalar_lea.vmem %s5, %s240
      %243 = vst [vmem:[#allocation2] sm:$0xff] 0.0
      %244 = vst [vmem:[#allocation2 + $0x8] sm:$0xff] 0.0
      %245 = vst [vmem:[#allocation2 + $0x10] sm:$0xff] 0.0
      %246 = vst [vmem:[#allocation2 + $0x18] sm:$0xff] 0.0
      %v247 = vld [vmem:[%s2] sm:$0x7]
      %v248 = vld [vmem:[%s231] sm:$0x7]
      %v249 = vlaneseq
      %vm250 = vcmp.ge.s32.totalorder %v249, 0
      %vm251 = vcmp.lt.s32.totalorder %v249, 288
      %vm252 = vmand %vm250, %vm251
      %s253 = scalar_lea.vmem [#allocation2], 8
      %254 = vst.msk [vmem:[%s253] ss:$8 sm:$0x7] %vm252, %v248
      %255 = vst.msk [vmem:[%s253] ss:$8 sm:$0x0] %vm252, %v248
      %v256 = vld [vmem:[#allocation2] ss:$8 sm:$0xf]
      %258 = vrot.lane.b32.xlu0 %v256, 19
      %v259 = vpop.permute.xlu0 %258
      %v260 = vrot.slane %v259, 1
      %vm261 = vcmask 154624
      %v262 = vsel %vm261, %v259, %v260
      %264 = vst.msk [vmem:[#allocation3] ss:$8 sm:$0x7] %vm252, %v262
      %265 = vst.msk [vmem:[#allocation3] ss:$8 sm:$0x0] %vm252, %v262
      %v266 = vld [vmem:[#allocation2] ss:$8 sm:$0xf]
      %268 = vrot.lane.b32.xlu0 %v266, 18
      %v269 = vpop.permute.xlu0 %268
      %v270 = vrot.slane %v269, 1
      %vm271 = vcmask 146432
      %v272 = vsel %vm271, %v269, %v270
      %s274 = scalar_lea.vmem [#allocation3], 1
      %275 = vst.msk [vmem:[%s274] ss:$8 sm:$0x7] %vm252, %v272
      %276 = vst.msk [vmem:[%s274] ss:$8 sm:$0x0] %vm252, %v272
      %v277 = vld [vmem:[#allocation2] ss:$8 sm:$0xf]
      %279 = vrot.lane.b32.xlu0 %v277, 17
      %v280 = vpop.permute.xlu0 %279
      %v281 = vrot.slane %v280, 1
      %vm282 = vcmask 138240
      %v283 = vsel %vm282, %v280, %v281
      %s285 = scalar_lea.vmem [#allocation3], 2
      %286 = vst.msk [vmem:[%s285] ss:$8 sm:$0x7] %vm252, %v283
      %287 = vst.msk [vmem:[%s285] ss:$8 sm:$0x0] %vm252, %v283
      %v288 = vld [vmem:[#allocation2] ss:$8 sm:$0xf]
      %290 = vrot.lane.b32.xlu0 %v288, 1
      %v291 = vpop.permute.xlu0 %290
      %v292 = vrot.slane %v291, 1
      %vm293 = vcmask 7168
      %v294 = vsel %vm293, %v291, %v292
      %s296 = scalar_lea.vmem [#allocation3], 3
      %297 = vst.msk [vmem:[%s296] ss:$8 sm:$0x7] %vm252, %v294
      %298 = vst.msk [vmem:[%s296] ss:$8 sm:$0x0] %vm252, %v294
      %v299 = vld [vmem:[%s253] ss:$8 sm:$0x7]
      %s300 = scalar_lea.vmem [#allocation3], 4
      %301 = vst.msk [vmem:[%s300] ss:$8 sm:$0x7] %vm252, %v299
      %302 = vst.msk [vmem:[%s300] ss:$8 sm:$0x0] %vm252, %v299
      %v303 = vld [vmem:[%s253] ss:$8 sm:$0x7]
      %305 = vrot.lane.b32.xlu0 %v303, 127
      %v306 = vpop.permute.xlu0 %305
      %v307 = vrot.slane %v306, 1
      %vm308 = vcmask 1039360
      %v309 = vsel %vm308, %v306, %v307
      %s311 = scalar_lea.vmem [#allocation3], 5
      %312 = vst.msk [vmem:[%s311] ss:$8 sm:$0x7] %vm252, %v309
      %313 = vst.msk [vmem:[%s311] ss:$8 sm:$0x0] %vm252, %v309
      %v314 = vld [vmem:[%s253] ss:$8 sm:$0x7]
      %316 = vrot.lane.b32.xlu0 %v314, 111
      %v317 = vpop.permute.xlu0 %316
      %v318 = vrot.slane %v317, 1
      %vm319 = vcmask 908288
      %v320 = vsel %vm319, %v317, %v318
      %s322 = scalar_lea.vmem [#allocation3], 6
      %323 = vst.msk [vmem:[%s322] ss:$8 sm:$0x7] %vm252, %v320
      %324 = vst.msk [vmem:[%s322] ss:$8 sm:$0x0] %vm252, %v320
      %v325 = vld [vmem:[%s253] ss:$8 sm:$0x7]
      %327 = vrot.lane.b32.xlu0 %v325, 110
      %v328 = vpop.permute.xlu0 %327
      %v329 = vrot.slane %v328, 1
      %vm330 = vcmask 900096
      %v331 = vsel %vm330, %v328, %v329
      %s333 = scalar_lea.vmem [#allocation3], 7
      %334 = vst.msk [vmem:[%s333] ss:$8 sm:$0x7] %vm252, %v331
      %335 = vst.msk [vmem:[%s333] ss:$8 sm:$0x0] %vm252, %v331
      %v336 = vld [vmem:[%s253] ss:$8 sm:$0x7]
      %338 = vrot.lane.b32.xlu0 %v336, 109
      %v339 = vpop.permute.xlu0 %338
      %v340 = vrot.slane %v339, 1
      %vm341 = vcmask 891904
      %v342 = vsel %vm341, %v339, %v340
      %s344 = scalar_lea.vmem [#allocation3], 24
      %345 = vst.msk [vmem:[%s344] ss:$8 sm:$0x7] %vm252, %v342
      %346 = vst.msk [vmem:[%s344] ss:$8 sm:$0x0] %vm252, %v342
      %v347 = vld [vmem:[%s3] sm:$0xf]
      %v348 = vld [vmem:[#allocation3] sm:$0xff]
      %v349 = vld [vmem:[#allocation3 + $0x8] sm:$0xff]
      %v350 = vld [vmem:[#allocation3 + $0x10] sm:$0xff]
      %v351 = vld [vmem:[#allocation3 + $0x18] sm:$0x1]
      %v352 = vld [vmem:[#allocation3 + $0x20] sm:$0x1]
      %v353 = vld [vmem:[#allocation3 + $0x28] sm:$0x1]
      %v354 = vpack.c.bf16 %v351, %v348
      %v355 = vpack.c.bf16 %v352, %v349
      %v356 = vpack.c.bf16 %v353, %v350
      %v357 = vld [vmem:[%s4] sm:$0xff]
      %359 = vset.pattern.permute.xlu0 0
      %360 = vperm.xlu0 %359, %v357
      %v361 = vpop.permute.xlu0 %360
      %vm363 = vcmask 72704
      %v365 = vsel %vm363, %v347, 0
      %vm367 = vcmask 1043456
      %vm368 = vcmask 1044480
      %v369 = vsel %vm367, 4294967295, 65535
      %v370 = vsel %vm368, %v369, 0
      %v372 = vand.u32 %v354, %v370
      %v375 = vand.u32 %v355, %v370
      %v378 = vand.u32 %v356, %v370
      %380 = vmatprep.subr.bf16.mxu0 %v375
      %381 = vmatpush1.bf16.msra.mxu0 %v372
      %382 = vmatprep.subr.bf16.mxu0 0
      %383 = vmatpush1.bf16.msra.mxu0 0
      %384 = vmatprep.subr.bf16.mxu0 0
      %385 = vmatpush1.bf16.msra.mxu0 0
      %386 = vmatprep.subr.bf16.mxu0 0
      %387 = vmatpush1.bf16.msra.mxu0 0
      %388 = vmatprep.subr.bf16.mxu0 0
      %389 = vmatpush1.bf16.msra.mxu0 0
      %390 = vmatprep.subr.bf16.mxu0 0
      %391 = vmatpush1.bf16.msra.mxu0 0
      %392 = vmatprep.subr.bf16.mxu0 0
      %393 = vmatpush1.bf16.msra.mxu0 0
      %394 = vmatprep.subr.bf16.mxu0 0
      %395 = vmatpush1.bf16.msra.mxu0 0
      %396 = vmatprep.subr.bf16.mxu0 0
      %397 = vmatpush1.bf16.msra.mxu0 0
      %398 = vmatprep.subr.bf16.mxu0 0
      %399 = vmatpush1.bf16.msra.mxu0 0
      %400 = vmatprep.subr.bf16.mxu0 0
      %401 = vmatpush1.bf16.msra.mxu0 0
      %402 = vmatprep.subr.bf16.mxu0 0
      %403 = vmatpush1.bf16.msra.mxu0 0
      %404 = vmatprep.subr.bf16.mxu0 0
      %405 = vmatpush1.bf16.msra.mxu0 0
      %406 = vmatprep.subr.bf16.mxu0 0
      %407 = vmatpush1.bf16.msra.mxu0 0
      %408 = vmatprep.subr.bf16.mxu0 0
      %409 = vmatpush1.bf16.msra.mxu0 0
      %410 = vmatprep.subr.bf16.mxu0 0
      %411 = vmatpush1.bf16.msra.mxu0 0
      %412 = vmatprep.mubr.bf16.mxu0 0
      %413 = vmatmul.mubr.bf16.gmra.mrb[0].mxu0 %v365
      %v414 = vpop.f32.mrb[0].mxu0
      %v415 = vadd.f32 %v361, %v414
      %v416 = vpop.f32.mrb[0].mxu0
      %v417 = vadd.f32 %v361, %v416
      %v418 = vpop.f32.mrb[0].mxu0
      %v419 = vpop.f32.mrb[0].mxu0
      %420 = vdwg.mxu0
      %421 = vmatprep.subr.bf16.mxu0 0
      %422 = vmatpush1.bf16.msra.mxu0 %v378
      %423 = vmatprep.subr.bf16.mxu0 0
      %424 = vmatpush1.bf16.msra.mxu0 0
      %425 = vmatprep.subr.bf16.mxu0 0
      %426 = vmatpush1.bf16.msra.mxu0 0
      %427 = vmatprep.subr.bf16.mxu0 0
      %428 = vmatpush1.bf16.msra.mxu0 0
      %429 = vmatprep.subr.bf16.mxu0 0
      %430 = vmatpush1.bf16.msra.mxu0 0
      %431 = vmatprep.subr.bf16.mxu0 0
      %432 = vmatpush1.bf16.msra.mxu0 0
      %433 = vmatprep.subr.bf16.mxu0 0
      %434 = vmatpush1.bf16.msra.mxu0 0
      %435 = vmatprep.subr.bf16.mxu0 0
      %436 = vmatpush1.bf16.msra.mxu0 0
      %437 = vmatprep.subr.bf16.mxu0 0
      %438 = vmatpush1.bf16.msra.mxu0 0
      %439 = vmatprep.subr.bf16.mxu0 0
      %440 = vmatpush1.bf16.msra.mxu0 0
      %441 = vmatprep.subr.bf16.mxu0 0
      %442 = vmatpush1.bf16.msra.mxu0 0
      %443 = vmatprep.subr.bf16.mxu0 0
      %444 = vmatpush1.bf16.msra.mxu0 0
      %445 = vmatprep.subr.bf16.mxu0 0
      %446 = vmatpush1.bf16.msra.mxu0 0
      %447 = vmatprep.subr.bf16.mxu0 0
      %448 = vmatpush1.bf16.msra.mxu0 0
      %449 = vmatprep.subr.bf16.mxu0 0
      %450 = vmatpush1.bf16.msra.mxu0 0
      %451 = vmatprep.subr.bf16.mxu0 0
      %452 = vmatpush1.bf16.msra.mxu0 0
      %453 = vmatprep.mubr.bf16.mxu0 0
      %454 = vmatmul.mubr.bf16.gmra.mrb[0].mxu0 %v365
      %v455 = vpop.f32.mrb[0].mxu0
      %v456 = vadd.f32 %v361, %v455
      %v457 = vpop.f32.mrb[0].mxu0
      %v458 = vpop.f32.mrb[0].mxu0
      %v459 = vpop.f32.mrb[0].mxu0
      %460 = vdwg.mxu0
      %v461 = vld [vmem:[%s4 + $0x8] sm:$0xff]
      %vm462 = vcmp.ge.f32.partialorder %v415, 0.0
      %vm463 = vcmp.ge.f32.partialorder %v417, 0.0
      %vm464 = vcmp.ge.f32.partialorder %v456, 0.0
      %466 = vset.pattern.permute.xlu0 0
      %467 = vperm.xlu0 %466, %v461
      %v468 = vpop.permute.xlu0 %467
      %v470 = vmul.f32 %v415, %v468
      %v471 = vmul.f32 %v417, %v468
      %v472 = vmul.f32 %v456, %v468
      %v473 = vsel %vm462, %v415, %v470
      %v474 = vsel %vm463, %v417, %v471
      %v475 = vsel %vm464, %v456, %v472
      %v477 = vlaneseq
      %v478 = vshrl.u32 %v477, 7
      %v479 = vsub.s32 0, %v478
      %v480 = vrot.slane %v247, %v479
      %v481 = vlaneseq
      %v482 = vshrl.u32 %v481, 7
      %v483 = vsub.s32 1, %v482
      %v484 = vrot.slane %v247, %v483
      %v485 = vlaneseq
      %v486 = vshrl.u32 %v485, 7
      %v487 = vsub.s32 2, %v486
      %v488 = vrot.slane %v247, %v487
      %v492 = vmul.f32 %v473, %v480
      %v493 = vmul.f32 %v474, %v484
      %v494 = vmul.f32 %v475, %v488
      %495 = vst [vmem:[#allocation2 + $0x8] sm:$0xff] %v492
      %496 = vst [vmem:[#allocation2 + $0x10] sm:$0xff] %v493
      %vm497 = vcmask 261120
      %498 = vst.msk [vmem:[#allocation2 + $0x18] sm:$0xff] %vm497, %v494
      %v499 = vld [vmem:[#allocation2] sm:$0xff]
      %v500 = vld [vmem:[#allocation2 + $0x8] sm:$0xff]
      %v501 = vld [vmem:[#allocation2 + $0x10] sm:$0xff]
      %v502 = vld [vmem:[#allocation2 + $0x18] sm:$0xff]
      %507 = vrot.lane.b32.xlu0 %v499, 19
      %v508 = vpop.permute.xlu0 %507
      %509 = vrot.lane.b32.xlu0 %v500, 19
      %v510 = vpop.permute.xlu0 %509
      %511 = vrot.lane.b32.xlu0 %v501, 19
      %v512 = vpop.permute.xlu0 %511
      %513 = vrot.lane.b32.xlu0 %v502, 19
      %v514 = vpop.permute.xlu0 %513
      %v515 = vsel %vm261, %v508, %v510
      %v516 = vsel %vm261, %v510, %v512
      %v517 = vsel %vm261, %v512, %v514
      %521 = vst [vmem:[#allocation3] sm:$0xff] %v515
      %522 = vst [vmem:[#allocation3 + $0x8] sm:$0xff] %v516
      %523 = vst.msk [vmem:[#allocation3 + $0x10] sm:$0xff] %vm497, %v517
      %v524 = vld [vmem:[#allocation2] sm:$0xff]
      %v525 = vld [vmem:[#allocation2 + $0x8] sm:$0xff]
      %v526 = vld [vmem:[#allocation2 + $0x10] sm:$0xff]
      %v527 = vld [vmem:[#allocation2 + $0x18] sm:$0xff]
      %532 = vrot.lane.b32.xlu0 %v524, 18
      %v533 = vpop.permute.xlu0 %532
      %534 = vrot.lane.b32.xlu0 %v525, 18
      %v535 = vpop.permute.xlu0 %534
      %536 = vrot.lane.b32.xlu0 %v526, 18
      %v537 = vpop.permute.xlu0 %536
      %538 = vrot.lane.b32.xlu0 %v527, 18
      %v539 = vpop.permute.xlu0 %538
      %v540 = vsel %vm271, %v533, %v535
      %v541 = vsel %vm271, %v535, %v537
      %v542 = vsel %vm271, %v537, %v539
      %546 = vst [vmem:[#allocation3 + $0x18] sm:$0xff] %v540
      %547 = vst [vmem:[#allocation3 + $0x20] sm:$0xff] %v541
      %548 = vst.msk [vmem:[#allocation3 + $0x28] sm:$0xff] %vm497, %v542
      %v549 = vld [vmem:[#allocation2] sm:$0xff]
      %v550 = vld [vmem:[#allocation2 + $0x8] sm:$0xff]
      %v551 = vld [vmem:[#allocation2 + $0x10] sm:$0xff]
      %v552 = vld [vmem:[#allocation2 + $0x18] sm:$0xff]
      %557 = vrot.lane.b32.xlu0 %v549, 17
      %v558 = vpop.permute.xlu0 %557
      %559 = vrot.lane.b32.xlu0 %v550, 17
      %v560 = vpop.permute.xlu0 %559
      %561 = vrot.lane.b32.xlu0 %v551, 17
      %v562 = vpop.permute.xlu0 %561
      %563 = vrot.lane.b32.xlu0 %v552, 17
      %v564 = vpop.permute.xlu0 %563
      %v565 = vsel %vm282, %v558, %v560
      %v566 = vsel %vm282, %v560, %v562
      %v567 = vsel %vm282, %v562, %v564
      %571 = vst [vmem:[#allocation3 + $0x30] sm:$0xff] %v565
      %572 = vst [vmem:[#allocation3 + $0x38] sm:$0xff] %v566
      %573 = vst.msk [vmem:[#allocation3 + $0x40] sm:$0xff] %vm497, %v567
      %v574 = vld [vmem:[#allocation2] sm:$0xff]
      %v575 = vld [vmem:[#allocation2 + $0x8] sm:$0xff]
      %v576 = vld [vmem:[#allocation2 + $0x10] sm:$0xff]
      %v577 = vld [vmem:[#allocation2 + $0x18] sm:$0xff]
      %582 = vrot.lane.b32.xlu0 %v574, 1
      %v583 = vpop.permute.xlu0 %582
      %584 = vrot.lane.b32.xlu0 %v575, 1
      %v585 = vpop.permute.xlu0 %584
      %586 = vrot.lane.b32.xlu0 %v576, 1
      %v587 = vpop.permute.xlu0 %586
      %588 = vrot.lane.b32.xlu0 %v577, 1
      %v589 = vpop.permute.xlu0 %588
      %v590 = vsel %vm293, %v583, %v585
      %v591 = vsel %vm293, %v585, %v587
      %v592 = vsel %vm293, %v587, %v589
      %596 = vst [vmem:[#allocation3 + $0x48] sm:$0xff] %v590
      %597 = vst [vmem:[#allocation3 + $0x50] sm:$0xff] %v591
      %598 = vst.msk [vmem:[#allocation3 + $0x58] sm:$0xff] %vm497, %v592
      %v599 = vld [vmem:[#allocation2 + $0x8] sm:$0xff]
      %v600 = vld [vmem:[#allocation2 + $0x10] sm:$0xff]
      %v601 = vld [vmem:[#allocation2 + $0x18] sm:$0xff]
      %602 = vst [vmem:[#allocation3 + $0x60] sm:$0xff] %v599
      %603 = vst [vmem:[#allocation3 + $0x68] sm:$0xff] %v600
      %604 = vst.msk [vmem:[#allocation3 + $0x70] sm:$0xff] %vm497, %v601
      %v605 = vld [vmem:[#allocation2 + $0x8] sm:$0xff]
      %v606 = vld [vmem:[#allocation2 + $0x10] sm:$0xff]
      %v607 = vld [vmem:[#allocation2 + $0x18] sm:$0xff]
      %611 = vrot.lane.b32.xlu0 %v605, 127
      %v612 = vpop.permute.xlu0 %611
      %613 = vrot.lane.b32.xlu0 %v606, 127
      %v614 = vpop.permute.xlu0 %613
      %615 = vrot.lane.b32.xlu0 %v607, 127
      %v616 = vpop.permute.xlu0 %615
      %v617 = vsel %vm308, %v612, %v614
      %v618 = vsel %vm308, %v614, %v616
      %622 = vst [vmem:[#allocation3 + $0x78] sm:$0xff] %v617
      %623 = vst [vmem:[#allocation3 + $0x80] sm:$0xff] %v618
      %624 = vst.msk [vmem:[#allocation3 + $0x88] sm:$0xff] %vm497, %v616
      %v625 = vld [vmem:[#allocation2 + $0x8] sm:$0xff]
      %v626 = vld [vmem:[#allocation2 + $0x10] sm:$0xff]
      %v627 = vld [vmem:[#allocation2 + $0x18] sm:$0xff]
      %631 = vrot.lane.b32.xlu0 %v625, 111
      %v632 = vpop.permute.xlu0 %631
      %633 = vrot.lane.b32.xlu0 %v626, 111
      %v634 = vpop.permute.xlu0 %633
      %635 = vrot.lane.b32.xlu0 %v627, 111
      %v636 = vpop.permute.xlu0 %635
      %v637 = vsel %vm319, %v632, %v634
      %v638 = vsel %vm319, %v634, %v636
      %642 = vst [vmem:[#allocation3 + $0x90] sm:$0xff] %v637
      %643 = vst [vmem:[#allocation3 + $0x98] sm:$0xff] %v638
      %644 = vst.msk [vmem:[#allocation3 + $0xa0] sm:$0xff] %vm497, %v636
      %v645 = vld [vmem:[#allocation2 + $0x8] sm:$0xff]
      %v646 = vld [vmem:[#allocation2 + $0x10] sm:$0xff]
      %v647 = vld [vmem:[#allocation2 + $0x18] sm:$0xff]
      %651 = vrot.lane.b32.xlu0 %v645, 110
      %v652 = vpop.permute.xlu0 %651
      %653 = vrot.lane.b32.xlu0 %v646, 110
      %v654 = vpop.permute.xlu0 %653
      %655 = vrot.lane.b32.xlu0 %v647, 110
      %v656 = vpop.permute.xlu0 %655
      %v657 = vsel %vm330, %v652, %v654
      %v658 = vsel %vm330, %v654, %v656
      %662 = vst [vmem:[#allocation3 + $0xa8] sm:$0xff] %v657
      %663 = vst [vmem:[#allocation3 + $0xb0] sm:$0xff] %v658
      %664 = vst.msk [vmem:[#allocation3 + $0xb8] sm:$0xff] %vm497, %v656
      %v665 = vld [vmem:[#allocation2 + $0x8] sm:$0xff]
      %v666 = vld [vmem:[#allocation2 + $0x10] sm:$0xff]
      %v667 = vld [vmem:[#allocation2 + $0x18] sm:$0xff]
      %671 = vrot.lane.b32.xlu0 %v665, 109
      %v672 = vpop.permute.xlu0 %671
      %673 = vrot.lane.b32.xlu0 %v666, 109
      %v674 = vpop.permute.xlu0 %673
      %675 = vrot.lane.b32.xlu0 %v667, 109
      %v676 = vpop.permute.xlu0 %675
      %v677 = vsel %vm341, %v672, %v674
      %v678 = vsel %vm341, %v674, %v676
      %682 = vst [vmem:[#allocation3 + $0xc0] sm:$0xff] %v677
      %683 = vst [vmem:[#allocation3 + $0xc8] sm:$0xff] %v678
      %684 = vst.msk [vmem:[#allocation3 + $0xd0] sm:$0xff] %vm497, %v676
      %v685 = vld [vmem:[%s3 + $0x4] sm:$0xf]
      %v686 = vld [vmem:[%s3 + $0x8] sm:$0xf]
      %v687 = vld [vmem:[%s3 + $0xc] sm:$0xf]
      %v688 = vld [vmem:[%s3 + $0x10] sm:$0xf]
      %v689 = vld [vmem:[%s3 + $0x14] sm:$0x3]
      %v690 = vld [vmem:[#allocation3] sm:$0xff]
      %v691 = vld [vmem:[#allocation3 + $0x8] sm:$0xff]
      %v692 = vld [vmem:[#allocation3 + $0x10] sm:$0xff]
      %v693 = vld [vmem:[#allocation3 + $0x18] sm:$0xff]
      %v694 = vld [vmem:[#allocation3 + $0x20] sm:$0xff]
      %v695 = vld [vmem:[#allocation3 + $0x28] sm:$0xff]
      %v696 = vld [vmem:[#allocation3 + $0x30] sm:$0xff]
      %v697 = vld [vmem:[#allocation3 + $0x38] sm:$0xff]
      %v698 = vld [vmem:[#allocation3 + $0x40] sm:$0xff]
      %v699 = vld [vmem:[#allocation3 + $0x48] sm:$0xff]
      %v700 = vld [vmem:[#allocation3 + $0x50] sm:$0xff]
      %v701 = vld [vmem:[#allocation3 + $0x58] sm:$0xff]
      %v702 = vld [vmem:[#allocation3 + $0x60] sm:$0xff]
      %v703 = vld [vmem:[#allocation3 + $0x68] sm:$0xff]
      %v704 = vld [vmem:[#allocation3 + $0x70] sm:$0xff]
      %v705 = vld [vmem:[#allocation3 + $0x78] sm:$0xff]
      %v706 = vld [vmem:[#allocation3 + $0x80] sm:$0xff]
      %v707 = vld [vmem:[#allocation3 + $0x88] sm:$0xff]
      %v708 = vld [vmem:[#allocation3 + $0x90] sm:$0xff]
      %v709 = vld [vmem:[#allocation3 + $0x98] sm:$0xff]
      %v710 = vld [vmem:[#allocation3 + $0xa0] sm:$0xff]
      %v711 = vld [vmem:[#allocation3 + $0xa8] sm:$0xff]
      %v712 = vld [vmem:[#allocation3 + $0xb0] sm:$0xff]
      %v713 = vld [vmem:[#allocation3 + $0xb8] sm:$0xff]
      %v714 = vld [vmem:[#allocation3 + $0xc0] sm:$0xff]
      %v715 = vld [vmem:[#allocation3 + $0xc8] sm:$0xff]
      %v716 = vld [vmem:[#allocation3 + $0xd0] sm:$0xff]
      %v717 = vpack.c.bf16 %v693, %v690
      %v718 = vpack.c.bf16 %v694, %v691
      %v719 = vpack.c.bf16 %v695, %v692
      %v720 = vpack.c.bf16 %v699, %v696
      %v721 = vpack.c.bf16 %v700, %v697
      %v722 = vpack.c.bf16 %v701, %v698
      %v723 = vpack.c.bf16 %v705, %v702
      %v724 = vpack.c.bf16 %v706, %v703
      %v725 = vpack.c.bf16 %v707, %v704
      %v726 = vpack.c.bf16 %v711, %v708
      %v727 = vpack.c.bf16 %v712, %v709
      %v728 = vpack.c.bf16 %v713, %v710
      %v729 = vpack.c.bf16 %v714, %v714
      %v730 = vpack.c.bf16 %v715, %v715
      %v731 = vpack.c.bf16 %v716, %v716
      %v732 = vld [vmem:[%s4 + $0x10] sm:$0xff]
      %v733 = vld [vmem:[%s4 + $0x18] sm:$0xff]
      %v734 = vld [vmem:[%s4 + $0x20] sm:$0xff]
      %v735 = vld [vmem:[%s4 + $0x28] sm:$0xff]
      %v736 = vld [vmem:[%s4 + $0x30] sm:$0xf]
      %738 = vset.pattern.permute.xlu0 0
      %739 = vperm.xlu0 %738, %v732
      %v740 = vpop.permute.xlu0 %739
      %743 = vset.pattern.permute.xlu0 0
      %744 = vperm.xlu0 %743, %v733
      %v745 = vpop.permute.xlu0 %744
      %748 = vset.pattern.permute.xlu0 0
      %749 = vperm.xlu0 %748, %v734
      %v750 = vpop.permute.xlu0 %749
      %753 = vset.pattern.permute.xlu0 0
      %754 = vperm.xlu0 %753, %v735
      %v755 = vpop.permute.xlu0 %754
      %758 = vset.pattern.permute.xlu0 0
      %759 = vperm.xlu0 %758, %v736
      %v760 = vpop.permute.xlu0 %759
      %v767 = vunpack.c.l.b16 %v685
      %v768 = vunpack.c.l.b16 %v686
      %v769 = vunpack.c.l.b16 %v687
      %v770 = vunpack.c.l.b16 %v688
      %v771 = vunpack.c.l.b16 %v689
      %v772 = vpack.c.b16 %v768, %v767
      %v773 = vpack.c.b16 %v770, %v769
      %v774 = vpack.c.b16 %v771, %v771
      %vm775 = vcmask 588800
      %v777 = vsel %vm775, %v772, 0
      %v780 = vsel %vm775, %v773, 0
      %v783 = vsel %vm775, %v774, 0
      %v786 = vsel %vm367, %v729, 0
      %v789 = vsel %vm367, %v730, 0
      %v792 = vsel %vm367, %v731, 0
      %794 = vmatprep.subr.bf16.mxu0 %v718
      %795 = vmatpush1.bf16.msra.mxu0 %v717
      %796 = vmatprep.subr.bf16.mxu0 %v721
      %797 = vmatpush1.bf16.msra.mxu0 %v720
      %798 = vmatprep.subr.bf16.mxu0 %v724
      %799 = vmatpush1.bf16.msra.mxu0 %v723
      %800 = vmatprep.subr.bf16.mxu0 %v727
      %801 = vmatpush1.bf16.msra.mxu0 %v726
      %802 = vmatprep.subr.bf16.mxu0 %v789
      %803 = vmatpush1.bf16.msra.mxu0 %v786
      %804 = vmatprep.subr.bf16.mxu0 0
      %805 = vmatpush1.bf16.msra.mxu0 0
      %806 = vmatprep.subr.bf16.mxu0 0
      %807 = vmatpush1.bf16.msra.mxu0 0
      %808 = vmatprep.subr.bf16.mxu0 0
      %809 = vmatpush1.bf16.msra.mxu0 0
      %810 = vmatprep.subr.bf16.mxu0 0
      %811 = vmatpush1.bf16.msra.mxu0 0
      %812 = vmatprep.subr.bf16.mxu0 0
      %813 = vmatpush1.bf16.msra.mxu0 0
      %814 = vmatprep.subr.bf16.mxu0 0
      %815 = vmatpush1.bf16.msra.mxu0 0
      %816 = vmatprep.subr.bf16.mxu0 0
      %817 = vmatpush1.bf16.msra.mxu0 0
      %818 = vmatprep.subr.bf16.mxu0 0
      %819 = vmatpush1.bf16.msra.mxu0 0
      %820 = vmatprep.subr.bf16.mxu0 0
      %821 = vmatpush1.bf16.msra.mxu0 0
      %822 = vmatprep.subr.bf16.mxu0 0
      %823 = vmatpush1.bf16.msra.mxu0 0
      %824 = vmatprep.subr.bf16.mxu0 0
      %825 = vmatpush1.bf16.msra.mxu0 0
      %826 = vmatprep.mubr.bf16.mxu0 0
      %827 = vmatmul.mubr.bf16.gmra.mrb[0].mxu0 %v777
      %v828 = vpop.f32.mrb[0].mxu0
      %v829 = vadd.f32 %v740, %v828
      %v830 = vpop.f32.mrb[0].mxu0
      %v831 = vadd.f32 %v740, %v830
      %v832 = vpop.f32.mrb[0].mxu0
      %v833 = vadd.f32 %v745, %v832
      %v834 = vpop.f32.mrb[0].mxu0
      %v835 = vadd.f32 %v745, %v834
      %836 = vmatprep.mubr.bf16.mxu0 0
      %837 = vmatmul.mubr.bf16.gmra.mrb[0].mxu0 %v780
      %v838 = vpop.f32.mrb[0].mxu0
      %v839 = vadd.f32 %v750, %v838
      %v840 = vpop.f32.mrb[0].mxu0
      %v841 = vadd.f32 %v750, %v840
      %v842 = vpop.f32.mrb[0].mxu0
      %v843 = vadd.f32 %v755, %v842
      %v844 = vpop.f32.mrb[0].mxu0
      %v845 = vadd.f32 %v755, %v844
      %846 = vmatprep.mubr.bf16.mxu0 0
      %847 = vmatmul.mubr.bf16.gmra.mrb[0].mxu0 %v783
      %v848 = vpop.f32.mrb[0].mxu0
      %v849 = vadd.f32 %v760, %v848
      %v850 = vpop.f32.mrb[0].mxu0
      %v851 = vadd.f32 %v760, %v850
      %v852 = vpop.f32.mrb[0].mxu0
      %v853 = vpop.f32.mrb[0].mxu0
      %854 = vdwg.mxu0
      %855 = vmatprep.subr.bf16.mxu0 0
      %856 = vmatpush1.bf16.msra.mxu0 %v719
      %857 = vmatprep.subr.bf16.mxu0 0
      %858 = vmatpush1.bf16.msra.mxu0 %v722
      %859 = vmatprep.subr.bf16.mxu0 0
      %860 = vmatpush1.bf16.msra.mxu0 %v725
      %861 = vmatprep.subr.bf16.mxu0 0
      %862 = vmatpush1.bf16.msra.mxu0 %v728
      %863 = vmatprep.subr.bf16.mxu0 0
      %864 = vmatpush1.bf16.msra.mxu0 %v792
      %865 = vmatprep.subr.bf16.mxu0 0
      %866 = vmatpush1.bf16.msra.mxu0 0
      %867 = vmatprep.subr.bf16.mxu0 0
      %868 = vmatpush1.bf16.msra.mxu0 0
      %869 = vmatprep.subr.bf16.mxu0 0
      %870 = vmatpush1.bf16.msra.mxu0 0
      %871 = vmatprep.subr.bf16.mxu0 0
      %872 = vmatpush1.bf16.msra.mxu0 0
      %873 = vmatprep.subr.bf16.mxu0 0
      %874 = vmatpush1.bf16.msra.mxu0 0
      %875 = vmatprep.subr.bf16.mxu0 0
      %876 = vmatpush1.bf16.msra.mxu0 0
      %877 = vmatprep.subr.bf16.mxu0 0
      %878 = vmatpush1.bf16.msra.mxu0 0
      %879 = vmatprep.subr.bf16.mxu0 0
      %880 = vmatpush1.bf16.msra.mxu0 0
      %881 = vmatprep.subr.bf16.mxu0 0
      %882 = vmatpush1.bf16.msra.mxu0 0
      %883 = vmatprep.subr.bf16.mxu0 0
      %884 = vmatpush1.bf16.msra.mxu0 0
      %885 = vmatprep.subr.bf16.mxu0 0
      %886 = vmatpush1.bf16.msra.mxu0 0
      %887 = vmatprep.mubr.bf16.mxu0 0
      %888 = vmatmul.mubr.bf16.gmra.mrb[0].mxu0 %v777
      %v889 = vpop.f32.mrb[0].mxu0
      %v890 = vadd.f32 %v740, %v889
      %v891 = vpop.f32.mrb[0].mxu0
      %v892 = vpop.f32.mrb[0].mxu0
      %v893 = vadd.f32 %v745, %v892
      %v894 = vpop.f32.mrb[0].mxu0
      %895 = vmatprep.mubr.bf16.mxu0 0
      %896 = vmatmul.mubr.bf16.gmra.mrb[0].mxu0 %v780
      %v897 = vpop.f32.mrb[0].mxu0
      %v898 = vadd.f32 %v750, %v897
      %v899 = vpop.f32.mrb[0].mxu0
      %v900 = vpop.f32.mrb[0].mxu0
      %v901 = vadd.f32 %v755, %v900
      %v902 = vpop.f32.mrb[0].mxu0
      %903 = vmatprep.mubr.bf16.mxu0 0
      %904 = vmatmul.mubr.bf16.gmra.mrb[0].mxu0 %v783
      %v905 = vpop.f32.mrb[0].mxu0
      %v906 = vadd.f32 %v760, %v905
      %v907 = vpop.f32.mrb[0].mxu0
      %v908 = vpop.f32.mrb[0].mxu0
      %v909 = vpop.f32.mrb[0].mxu0
      %910 = vdwg.mxu0
      %v911 = vsel %vm367, %v849, -inf
      %v912 = vrot.slane %v911, 4
      %v913 = vmax.f32 %v911, %v912
      %v914 = vrot.slane %v913, 2
      %v915 = vmax.f32 %v913, %v914
      %v916 = vrot.slane %v915, 1
      %v917 = vmax.f32 %v915, %v916
      %v918 = vsel %vm367, %v851, -inf
      %v919 = vrot.slane %v918, 4
      %v920 = vmax.f32 %v918, %v919
      %v921 = vrot.slane %v920, 2
      %v922 = vmax.f32 %v920, %v921
      %v923 = vrot.slane %v922, 1
      %v924 = vmax.f32 %v922, %v923
      %vm925 = vcmask 257024
      %v926 = vsel %vm925, %v906, -inf
      %v927 = vrot.slane %v926, 4
      %v928 = vmax.f32 %v926, %v927
      %v929 = vrot.slane %v928, 2
      %v930 = vmax.f32 %v928, %v929
      %v931 = vrot.slane %v930, 1
      %v932 = vmax.f32 %v930, %v931
      %v933 = vsub.f32 %v849, %v917
      %v934 = vsub.f32 %v851, %v924
      %v935 = vsub.f32 %v906, %v932
      %v936 = vmul.f32 %v933, 1.442695
      %v937 = vpow.pop %v936
      %v938 = vmul.f32 %v934, 1.442695
      %v939 = vpow.pop %v938
      %v940 = vmul.f32 %v935, 1.442695
      %v941 = vpow.pop %v940
      %v942 = vsel %vm367, %v937, 0.0
      %v943 = vrot.slane %v942, 4
      %v944 = vadd.f32 %v942, %v943
      %v945 = vrot.slane %v944, 2
      %v946 = vadd.f32 %v944, %v945
      %v947 = vrot.slane %v946, 1
      %v948 = vadd.f32 %v946, %v947
      %v949 = vsel %vm367, %v939, 0.0
      %v950 = vrot.slane %v949, 4
      %v951 = vadd.f32 %v949, %v950
      %v952 = vrot.slane %v951, 2
      %v953 = vadd.f32 %v951, %v952
      %v954 = vrot.slane %v953, 1
      %v955 = vadd.f32 %v953, %v954
      %v956 = vsel %vm925, %v941, 0.0
      %v957 = vrot.slane %v956, 4
      %v958 = vadd.f32 %v956, %v957
      %v959 = vrot.slane %v958, 2
      %v960 = vadd.f32 %v958, %v959
      %v961 = vrot.slane %v960, 1
      %v962 = vadd.f32 %v960, %v961
      %v963 = vrcp.pop %v948
      %v964 = vmul.f32 %v937, %v963
      %v965 = vrcp.pop %v955
      %v966 = vmul.f32 %v939, %v965
      %v967 = vrcp.pop %v962
      %v968 = vmul.f32 %v941, %v967
      %v969 = vlaneseq
      %v970 = vshrl.u32 %v969, 7
      %v971 = vsub.s32 0, %v970
      %v972 = vrot.slane %v964, %v971
      %v973 = vlaneseq
      %v974 = vshrl.u32 %v973, 7
      %v975 = vsub.s32 0, %v974
      %v976 = vrot.slane %v966, %v975
      %v977 = vlaneseq
      %v978 = vshrl.u32 %v977, 7
      %v979 = vsub.s32 0, %v978
      %v980 = vrot.slane %v968, %v979
      %v981 = vmul.f32 %v829, %v972
      %v982 = vmul.f32 %v831, %v976
      %v983 = vmul.f32 %v890, %v980
      %v984 = vlaneseq
      %v985 = vshrl.u32 %v984, 7
      %v986 = vsub.s32 1, %v985
      %v987 = vrot.slane %v964, %v986
      %v988 = vlaneseq
      %v989 = vshrl.u32 %v988, 7
      %v990 = vsub.s32 1, %v989
      %v991 = vrot.slane %v966, %v990
      %v992 = vlaneseq
      %v993 = vshrl.u32 %v992, 7
      %v994 = vsub.s32 1, %v993
      %v995 = vrot.slane %v968, %v994
      %v996 = vmul.f32 %v833, %v987
      %v997 = vmul.f32 %v835, %v991
      %v998 = vmul.f32 %v893, %v995
      %v999 = vadd.f32 %v981, %v996
      %v1000 = vadd.f32 %v982, %v997
      %v1001 = vadd.f32 %v983, %v998
      %v1002 = vlaneseq
      %v1003 = vshrl.u32 %v1002, 7
      %v1004 = vsub.s32 2, %v1003
      %v1005 = vrot.slane %v964, %v1004
      %v1006 = vlaneseq
      %v1007 = vshrl.u32 %v1006, 7
      %v1008 = vsub.s32 2, %v1007
      %v1009 = vrot.slane %v966, %v1008
      %v1010 = vlaneseq
      %v1011 = vshrl.u32 %v1010, 7
      %v1012 = vsub.s32 2, %v1011
      %v1013 = vrot.slane %v968, %v1012
      %v1014 = vmul.f32 %v839, %v1005
      %v1015 = vmul.f32 %v841, %v1009
      %v1016 = vmul.f32 %v898, %v1013
      %v1017 = vadd.f32 %v999, %v1014
      %v1018 = vadd.f32 %v1000, %v1015
      %v1019 = vadd.f32 %v1001, %v1016
      %v1020 = vlaneseq
      %v1021 = vshrl.u32 %v1020, 7
      %v1022 = vsub.s32 3, %v1021
      %v1023 = vrot.slane %v964, %v1022
      %v1024 = vlaneseq
      %v1025 = vshrl.u32 %v1024, 7
      %v1026 = vsub.s32 3, %v1025
      %v1027 = vrot.slane %v966, %v1026
      %v1028 = vlaneseq
      %v1029 = vshrl.u32 %v1028, 7
      %v1030 = vsub.s32 3, %v1029
      %v1031 = vrot.slane %v968, %v1030
      %v1032 = vmul.f32 %v843, %v1023
      %v1033 = vmul.f32 %v845, %v1027
      %v1034 = vmul.f32 %v901, %v1031
      %v1035 = vadd.f32 %v1017, %v1032
      %v1036 = vadd.f32 %v1018, %v1033
      %v1037 = vadd.f32 %v1019, %v1034
      %v1038 = vmul.f32 %v1035, %v480
      %v1039 = vmul.f32 %v1036, %v484
      %v1040 = vmul.f32 %v1037, %v488
      %1041 = vst [vmem:[#allocation2 + $0x8] sm:$0xff] %v1038
      %1042 = vst [vmem:[#allocation2 + $0x10] sm:$0xff] %v1039
      %1043 = vst.msk [vmem:[#allocation2 + $0x18] sm:$0xff] %vm497, %v1040
      %v1044 = vld [vmem:[#allocation2] sm:$0xff]
      %v1045 = vld [vmem:[#allocation2 + $0x8] sm:$0xff]
      %v1046 = vld [vmem:[#allocation2 + $0x10] sm:$0xff]
      %v1047 = vld [vmem:[#allocation2 + $0x18] sm:$0xff]
      %1052 = vrot.lane.b32.xlu0 %v1044, 19
      %v1053 = vpop.permute.xlu0 %1052
      %1054 = vrot.lane.b32.xlu0 %v1045, 19
      %v1055 = vpop.permute.xlu0 %1054
      %1056 = vrot.lane.b32.xlu0 %v1046, 19
      %v1057 = vpop.permute.xlu0 %1056
      %1058 = vrot.lane.b32.xlu0 %v1047, 19
      %v1059 = vpop.permute.xlu0 %1058
      %v1060 = vsel %vm261, %v1053, %v1055
      %v1061 = vsel %vm261, %v1055, %v1057
      %v1062 = vsel %vm261, %v1057, %v1059
      %1066 = vst [vmem:[#allocation3] sm:$0xff] %v1060
      %1067 = vst [vmem:[#allocation3 + $0x8] sm:$0xff] %v1061
      %1068 = vst.msk [vmem:[#allocation3 + $0x10] sm:$0xff] %vm497, %v1062
      %v1069 = vld [vmem:[#allocation2] sm:$0xff]
      %v1070 = vld [vmem:[#allocation2 + $0x8] sm:$0xff]
      %v1071 = vld [vmem:[#allocation2 + $0x10] sm:$0xff]
      %v1072 = vld [vmem:[#allocation2 + $0x18] sm:$0xff]
      %1077 = vrot.lane.b32.xlu0 %v1069, 18
      %v1078 = vpop.permute.xlu0 %1077
      %1079 = vrot.lane.b32.xlu0 %v1070, 18
      %v1080 = vpop.permute.xlu0 %1079
      %1081 = vrot.lane.b32.xlu0 %v1071, 18
      %v1082 = vpop.permute.xlu0 %1081
      %1083 = vrot.lane.b32.xlu0 %v1072, 18
      %v1084 = vpop.permute.xlu0 %1083
      %v1085 = vsel %vm271, %v1078, %v1080
      %v1086 = vsel %vm271, %v1080, %v1082
      %v1087 = vsel %vm271, %v1082, %v1084
      %1091 = vst [vmem:[#allocation3 + $0x18] sm:$0xff] %v1085
      %1092 = vst [vmem:[#allocation3 + $0x20] sm:$0xff] %v1086
      %1093 = vst.msk [vmem:[#allocation3 + $0x28] sm:$0xff] %vm497, %v1087
      %v1094 = vld [vmem:[#allocation2] sm:$0xff]
      %v1095 = vld [vmem:[#allocation2 + $0x8] sm:$0xff]
      %v1096 = vld [vmem:[#allocation2 + $0x10] sm:$0xff]
      %v1097 = vld [vmem:[#allocation2 + $0x18] sm:$0xff]
      %1102 = vrot.lane.b32.xlu0 %v1094, 17
      %v1103 = vpop.permute.xlu0 %1102
      %1104 = vrot.lane.b32.xlu0 %v1095, 17
      %v1105 = vpop.permute.xlu0 %1104
      %1106 = vrot.lane.b32.xlu0 %v1096, 17
      %v1107 = vpop.permute.xlu0 %1106
      %1108 = vrot.lane.b32.xlu0 %v1097, 17
      %v1109 = vpop.permute.xlu0 %1108
      %v1110 = vsel %vm282, %v1103, %v1105
      %v1111 = vsel %vm282, %v1105, %v1107
      %v1112 = vsel %vm282, %v1107, %v1109
      %1116 = vst [vmem:[#allocation3 + $0x30] sm:$0xff] %v1110
      %1117 = vst [vmem:[#allocation3 + $0x38] sm:$0xff] %v1111
      %1118 = vst.msk [vmem:[#allocation3 + $0x40] sm:$0xff] %vm497, %v1112
      %v1119 = vld [vmem:[#allocation2] sm:$0xff]
      %v1120 = vld [vmem:[#allocation2 + $0x8] sm:$0xff]
      %v1121 = vld [vmem:[#allocation2 + $0x10] sm:$0xff]
      %v1122 = vld [vmem:[#allocation2 + $0x18] sm:$0xff]
      %1127 = vrot.lane.b32.xlu0 %v1119, 1
      %v1128 = vpop.permute.xlu0 %1127
      %1129 = vrot.lane.b32.xlu0 %v1120, 1
      %v1130 = vpop.permute.xlu0 %1129
      %1131 = vrot.lane.b32.xlu0 %v1121, 1
      %v1132 = vpop.permute.xlu0 %1131
      %1133 = vrot.lane.b32.xlu0 %v1122, 1
      %v1134 = vpop.permute.xlu0 %1133
      %v1135 = vsel %vm293, %v1128, %v1130
      %v1136 = vsel %vm293, %v1130, %v1132
      %v1137 = vsel %vm293, %v1132, %v1134
      %1141 = vst [vmem:[#allocation3 + $0x48] sm:$0xff] %v1135
      %1142 = vst [vmem:[#allocation3 + $0x50] sm:$0xff] %v1136
      %1143 = vst.msk [vmem:[#allocation3 + $0x58] sm:$0xff] %vm497, %v1137
      %v1144 = vld [vmem:[#allocation2 + $0x8] sm:$0xff]
      %v1145 = vld [vmem:[#allocation2 + $0x10] sm:$0xff]
      %v1146 = vld [vmem:[#allocation2 + $0x18] sm:$0xff]
      %1147 = vst [vmem:[#allocation3 + $0x60] sm:$0xff] %v1144
      %1148 = vst [vmem:[#allocation3 + $0x68] sm:$0xff] %v1145
      %1149 = vst.msk [vmem:[#allocation3 + $0x70] sm:$0xff] %vm497, %v1146
      %v1150 = vld [vmem:[#allocation2 + $0x8] sm:$0xff]
      %v1151 = vld [vmem:[#allocation2 + $0x10] sm:$0xff]
      %v1152 = vld [vmem:[#allocation2 + $0x18] sm:$0xff]
      %1156 = vrot.lane.b32.xlu0 %v1150, 127
      %v1157 = vpop.permute.xlu0 %1156
      %1158 = vrot.lane.b32.xlu0 %v1151, 127
      %v1159 = vpop.permute.xlu0 %1158
      %1160 = vrot.lane.b32.xlu0 %v1152, 127
      %v1161 = vpop.permute.xlu0 %1160
      %v1162 = vsel %vm308, %v1157, %v1159
      %v1163 = vsel %vm308, %v1159, %v1161
      %1167 = vst [vmem:[#allocation3 + $0x78] sm:$0xff] %v1162
      %1168 = vst [vmem:[#allocation3 + $0x80] sm:$0xff] %v1163
      %1169 = vst.msk [vmem:[#allocation3 + $0x88] sm:$0xff] %vm497, %v1161
      %v1170 = vld [vmem:[#allocation2 + $0x8] sm:$0xff]
      %v1171 = vld [vmem:[#allocation2 + $0x10] sm:$0xff]
      %v1172 = vld [vmem:[#allocation2 + $0x18] sm:$0xff]
      %1176 = vrot.lane.b32.xlu0 %v1170, 111
      %v1177 = vpop.permute.xlu0 %1176
      %1178 = vrot.lane.b32.xlu0 %v1171, 111
      %v1179 = vpop.permute.xlu0 %1178
      %1180 = vrot.lane.b32.xlu0 %v1172, 111
      %v1181 = vpop.permute.xlu0 %1180
      %v1182 = vsel %vm319, %v1177, %v1179
      %v1183 = vsel %vm319, %v1179, %v1181
      %1187 = vst [vmem:[#allocation3 + $0x90] sm:$0xff] %v1182
      %1188 = vst [vmem:[#allocation3 + $0x98] sm:$0xff] %v1183
      %1189 = vst.msk [vmem:[#allocation3 + $0xa0] sm:$0xff] %vm497, %v1181
      %v1190 = vld [vmem:[#allocation2 + $0x8] sm:$0xff]
      %v1191 = vld [vmem:[#allocation2 + $0x10] sm:$0xff]
      %v1192 = vld [vmem:[#allocation2 + $0x18] sm:$0xff]
      %1196 = vrot.lane.b32.xlu0 %v1190, 110
      %v1197 = vpop.permute.xlu0 %1196
      %1198 = vrot.lane.b32.xlu0 %v1191, 110
      %v1199 = vpop.permute.xlu0 %1198
      %1200 = vrot.lane.b32.xlu0 %v1192, 110
      %v1201 = vpop.permute.xlu0 %1200
      %v1202 = vsel %vm330, %v1197, %v1199
      %v1203 = vsel %vm330, %v1199, %v1201
      %1207 = vst [vmem:[#allocation3 + $0xa8] sm:$0xff] %v1202
      %1208 = vst [vmem:[#allocation3 + $0xb0] sm:$0xff] %v1203
      %1209 = vst.msk [vmem:[#allocation3 + $0xb8] sm:$0xff] %vm497, %v1201
      %v1210 = vld [vmem:[#allocation2 + $0x8] sm:$0xff]
      %v1211 = vld [vmem:[#allocation2 + $0x10] sm:$0xff]
      %v1212 = vld [vmem:[#allocation2 + $0x18] sm:$0xff]
      %1216 = vrot.lane.b32.xlu0 %v1210, 109
      %v1217 = vpop.permute.xlu0 %1216
      %1218 = vrot.lane.b32.xlu0 %v1211, 109
      %v1219 = vpop.permute.xlu0 %1218
      %1220 = vrot.lane.b32.xlu0 %v1212, 109
      %v1221 = vpop.permute.xlu0 %1220
      %v1222 = vsel %vm341, %v1217, %v1219
      %v1223 = vsel %vm341, %v1219, %v1221
      %1227 = vst [vmem:[#allocation3 + $0xc0] sm:$0xff] %v1222
      %1228 = vst [vmem:[#allocation3 + $0xc8] sm:$0xff] %v1223
      %1229 = vst.msk [vmem:[#allocation3 + $0xd0] sm:$0xff] %vm497, %v1221
      %v1230 = vld [vmem:[%s3 + $0x18] sm:$0xf]
      %v1231 = vld [vmem:[#allocation3] sm:$0xff]
      %v1232 = vld [vmem:[#allocation3 + $0x8] sm:$0xff]
      %v1233 = vld [vmem:[#allocation3 + $0x10] sm:$0xff]
      %v1234 = vld [vmem:[#allocation3 + $0x18] sm:$0xff]
      %v1235 = vld [vmem:[#allocation3 + $0x20] sm:$0xff]
      %v1236 = vld [vmem:[#allocation3 + $0x28] sm:$0xff]
      %v1237 = vld [vmem:[#allocation3 + $0x30] sm:$0xff]
      %v1238 = vld [vmem:[#allocation3 + $0x38] sm:$0xff]
      %v1239 = vld [vmem:[#allocation3 + $0x40] sm:$0xff]
      %v1240 = vld [vmem:[#allocation3 + $0x48] sm:$0xff]
      %v1241 = vld [vmem:[#allocation3 + $0x50] sm:$0xff]
      %v1242 = vld [vmem:[#allocation3 + $0x58] sm:$0xff]
      %v1243 = vld [vmem:[#allocation3 + $0x60] sm:$0xff]
      %v1244 = vld [vmem:[#allocation3 + $0x68] sm:$0xff]
      %v1245 = vld [vmem:[#allocation3 + $0x70] sm:$0xff]
      %v1246 = vld [vmem:[#allocation3 + $0x78] sm:$0xff]
      %v1247 = vld [vmem:[#allocation3 + $0x80] sm:$0xff]
      %v1248 = vld [vmem:[#allocation3 + $0x88] sm:$0xff]
      %v1249 = vld [vmem:[#allocation3 + $0x90] sm:$0xff]
      %v1250 = vld [vmem:[#allocation3 + $0x98] sm:$0xff]
      %v1251 = vld [vmem:[#allocation3 + $0xa0] sm:$0xff]
      %v1252 = vld [vmem:[#allocation3 + $0xa8] sm:$0xff]
      %v1253 = vld [vmem:[#allocation3 + $0xb0] sm:$0xff]
      %v1254 = vld [vmem:[#allocation3 + $0xb8] sm:$0xff]
      %v1255 = vld [vmem:[#allocation3 + $0xc0] sm:$0xff]
      %v1256 = vld [vmem:[#allocation3 + $0xc8] sm:$0xff]
      %v1257 = vld [vmem:[#allocation3 + $0xd0] sm:$0xff]
      %v1258 = vpack.c.bf16 %v1234, %v1231
      %v1259 = vpack.c.bf16 %v1235, %v1232
      %v1260 = vpack.c.bf16 %v1236, %v1233
      %v1261 = vpack.c.bf16 %v1240, %v1237
      %v1262 = vpack.c.bf16 %v1241, %v1238
      %v1263 = vpack.c.bf16 %v1242, %v1239
      %v1264 = vpack.c.bf16 %v1246, %v1243
      %v1265 = vpack.c.bf16 %v1247, %v1244
      %v1266 = vpack.c.bf16 %v1248, %v1245
      %v1267 = vpack.c.bf16 %v1252, %v1249
      %v1268 = vpack.c.bf16 %v1253, %v1250
      %v1269 = vpack.c.bf16 %v1254, %v1251
      %v1270 = vpack.c.bf16 %v1255, %v1255
      %v1271 = vpack.c.bf16 %v1256, %v1256
      %v1272 = vpack.c.bf16 %v1257, %v1257
      %v1273 = vld [vmem:[%s4 + $0x38] sm:$0xff]
      %1275 = vset.pattern.permute.xlu0 0
      %1276 = vperm.xlu0 %1275, %v1273
      %v1277 = vpop.permute.xlu0 %1276
      %v1280 = vsel %vm775, %v1230, 0
      %v1283 = vsel %vm367, %v1270, 0
      %v1286 = vsel %vm367, %v1271, 0
      %v1289 = vsel %vm367, %v1272, 0
      %1291 = vmatprep.subr.bf16.mxu0 %v1259
      %1292 = vmatpush1.bf16.msra.mxu0 %v1258
      %1293 = vmatprep.subr.bf16.mxu0 %v1262
      %1294 = vmatpush1.bf16.msra.mxu0 %v1261
      %1295 = vmatprep.subr.bf16.mxu0 %v1265
      %1296 = vmatpush1.bf16.msra.mxu0 %v1264
      %1297 = vmatprep.subr.bf16.mxu0 %v1268
      %1298 = vmatpush1.bf16.msra.mxu0 %v1267
      %1299 = vmatprep.subr.bf16.mxu0 %v1286
      %1300 = vmatpush1.bf16.msra.mxu0 %v1283
      %1301 = vmatprep.subr.bf16.mxu0 0
      %1302 = vmatpush1.bf16.msra.mxu0 0
      %1303 = vmatprep.subr.bf16.mxu0 0
      %1304 = vmatpush1.bf16.msra.mxu0 0
      %1305 = vmatprep.subr.bf16.mxu0 0
      %1306 = vmatpush1.bf16.msra.mxu0 0
      %1307 = vmatprep.subr.bf16.mxu0 0
      %1308 = vmatpush1.bf16.msra.mxu0 0
      %1309 = vmatprep.subr.bf16.mxu0 0
      %1310 = vmatpush1.bf16.msra.mxu0 0
      %1311 = vmatprep.subr.bf16.mxu0 0
      %1312 = vmatpush1.bf16.msra.mxu0 0
      %1313 = vmatprep.subr.bf16.mxu0 0
      %1314 = vmatpush1.bf16.msra.mxu0 0
      %1315 = vmatprep.subr.bf16.mxu0 0
      %1316 = vmatpush1.bf16.msra.mxu0 0
      %1317 = vmatprep.subr.bf16.mxu0 0
      %1318 = vmatpush1.bf16.msra.mxu0 0
      %1319 = vmatprep.subr.bf16.mxu0 0
      %1320 = vmatpush1.bf16.msra.mxu0 0
      %1321 = vmatprep.subr.bf16.mxu0 0
      %1322 = vmatpush1.bf16.msra.mxu0 0
      %1323 = vmatprep.mubr.bf16.mxu0 0
      %1324 = vmatmul.mubr.bf16.gmra.mrb[0].mxu0 %v1280
      %v1325 = vpop.f32.mrb[0].mxu0
      %v1326 = vadd.f32 %v1277, %v1325
      %v1327 = vpop.f32.mrb[0].mxu0
      %v1328 = vadd.f32 %v1277, %v1327
      %v1329 = vpop.f32.mrb[0].mxu0
      %v1330 = vpop.f32.mrb[0].mxu0
      %1331 = vdwg.mxu0
      %1332 = vmatprep.subr.bf16.mxu0 0
      %1333 = vmatpush1.bf16.msra.mxu0 %v1260
      %1334 = vmatprep.subr.bf16.mxu0 0
      %1335 = vmatpush1.bf16.msra.mxu0 %v1263
      %1336 = vmatprep.subr.bf16.mxu0 0
      %1337 = vmatpush1.bf16.msra.mxu0 %v1266
      %1338 = vmatprep.subr.bf16.mxu0 0
      %1339 = vmatpush1.bf16.msra.mxu0 %v1269
      %1340 = vmatprep.subr.bf16.mxu0 0
      %1341 = vmatpush1.bf16.msra.mxu0 %v1289
      %1342 = vmatprep.subr.bf16.mxu0 0
      %1343 = vmatpush1.bf16.msra.mxu0 0
      %1344 = vmatprep.subr.bf16.mxu0 0
      %1345 = vmatpush1.bf16.msra.mxu0 0
      %1346 = vmatprep.subr.bf16.mxu0 0
      %1347 = vmatpush1.bf16.msra.mxu0 0
      %1348 = vmatprep.subr.bf16.mxu0 0
      %1349 = vmatpush1.bf16.msra.mxu0 0
      %1350 = vmatprep.subr.bf16.mxu0 0
      %1351 = vmatpush1.bf16.msra.mxu0 0
      %1352 = vmatprep.subr.bf16.mxu0 0
      %1353 = vmatpush1.bf16.msra.mxu0 0
      %1354 = vmatprep.subr.bf16.mxu0 0
      %1355 = vmatpush1.bf16.msra.mxu0 0
      %1356 = vmatprep.subr.bf16.mxu0 0
      %1357 = vmatpush1.bf16.msra.mxu0 0
      %1358 = vmatprep.subr.bf16.mxu0 0
      %1359 = vmatpush1.bf16.msra.mxu0 0
      %1360 = vmatprep.subr.bf16.mxu0 0
      %1361 = vmatpush1.bf16.msra.mxu0 0
      %1362 = vmatprep.subr.bf16.mxu0 0
      %1363 = vmatpush1.bf16.msra.mxu0 0
      %1364 = vmatprep.mubr.bf16.mxu0 0
      %1365 = vmatmul.mubr.bf16.gmra.mrb[0].mxu0 %v1280
      %v1366 = vpop.f32.mrb[0].mxu0
      %v1367 = vadd.f32 %v1277, %v1366
      %v1368 = vpop.f32.mrb[0].mxu0
      %v1369 = vpop.f32.mrb[0].mxu0
      %v1370 = vpop.f32.mrb[0].mxu0
      %1371 = vdwg.mxu0
      %v1372 = vadd.f32 %v1326, %v473
      %v1373 = vadd.f32 %v1328, %v474
      %v1374 = vadd.f32 %v1367, %v475
      %v1375 = vmul.f32 %v1372, %v480
      %v1376 = vmul.f32 %v1373, %v484
      %v1377 = vmul.f32 %v1374, %v488
      %1378 = vst [vmem:[#allocation2 + $0x8] sm:$0xff] %v1375
      %1379 = vst [vmem:[#allocation2 + $0x10] sm:$0xff] %v1376
      %1380 = vst.msk [vmem:[#allocation2 + $0x18] sm:$0xff] %vm497, %v1377
      %v1381 = vld [vmem:[#allocation2] sm:$0xff]
      %v1382 = vld [vmem:[#allocation2 + $0x8] sm:$0xff]
      %v1383 = vld [vmem:[#allocation2 + $0x10] sm:$0xff]
      %v1384 = vld [vmem:[#allocation2 + $0x18] sm:$0xff]
      %1389 = vrot.lane.b32.xlu0 %v1381, 19
      %v1390 = vpop.permute.xlu0 %1389
      %1391 = vrot.lane.b32.xlu0 %v1382, 19
      %v1392 = vpop.permute.xlu0 %1391
      %1393 = vrot.lane.b32.xlu0 %v1383, 19
      %v1394 = vpop.permute.xlu0 %1393
      %1395 = vrot.lane.b32.xlu0 %v1384, 19
      %v1396 = vpop.permute.xlu0 %1395
      %v1397 = vsel %vm261, %v1390, %v1392
      %v1398 = vsel %vm261, %v1392, %v1394
      %v1399 = vsel %vm261, %v1394, %v1396
      %1403 = vst [vmem:[#allocation3] sm:$0xff] %v1397
      %1404 = vst [vmem:[#allocation3 + $0x8] sm:$0xff] %v1398
      %1405 = vst.msk [vmem:[#allocation3 + $0x10] sm:$0xff] %vm497, %v1399
      %v1406 = vld [vmem:[#allocation2] sm:$0xff]
      %v1407 = vld [vmem:[#allocation2 + $0x8] sm:$0xff]
      %v1408 = vld [vmem:[#allocation2 + $0x10] sm:$0xff]
      %v1409 = vld [vmem:[#allocation2 + $0x18] sm:$0xff]
      %1414 = vrot.lane.b32.xlu0 %v1406, 18
      %v1415 = vpop.permute.xlu0 %1414
      %1416 = vrot.lane.b32.xlu0 %v1407, 18
      %v1417 = vpop.permute.xlu0 %1416
      %1418 = vrot.lane.b32.xlu0 %v1408, 18
      %v1419 = vpop.permute.xlu0 %1418
      %1420 = vrot.lane.b32.xlu0 %v1409, 18
      %v1421 = vpop.permute.xlu0 %1420
      %v1422 = vsel %vm271, %v1415, %v1417
      %v1423 = vsel %vm271, %v1417, %v1419
      %v1424 = vsel %vm271, %v1419, %v1421
      %1428 = vst [vmem:[#allocation3 + $0x18] sm:$0xff] %v1422
      %1429 = vst [vmem:[#allocation3 + $0x20] sm:$0xff] %v1423
      %1430 = vst.msk [vmem:[#allocation3 + $0x28] sm:$0xff] %vm497, %v1424
      %v1431 = vld [vmem:[#allocation2] sm:$0xff]
      %v1432 = vld [vmem:[#allocation2 + $0x8] sm:$0xff]
      %v1433 = vld [vmem:[#allocation2 + $0x10] sm:$0xff]
      %v1434 = vld [vmem:[#allocation2 + $0x18] sm:$0xff]
      %1439 = vrot.lane.b32.xlu0 %v1431, 17
      %v1440 = vpop.permute.xlu0 %1439
      %1441 = vrot.lane.b32.xlu0 %v1432, 17
      %v1442 = vpop.permute.xlu0 %1441
      %1443 = vrot.lane.b32.xlu0 %v1433, 17
      %v1444 = vpop.permute.xlu0 %1443
      %1445 = vrot.lane.b32.xlu0 %v1434, 17
      %v1446 = vpop.permute.xlu0 %1445
      %v1447 = vsel %vm282, %v1440, %v1442
      %v1448 = vsel %vm282, %v1442, %v1444
      %v1449 = vsel %vm282, %v1444, %v1446
      %1453 = vst [vmem:[#allocation3 + $0x30] sm:$0xff] %v1447
      %1454 = vst [vmem:[#allocation3 + $0x38] sm:$0xff] %v1448
      %1455 = vst.msk [vmem:[#allocation3 + $0x40] sm:$0xff] %vm497, %v1449
      %v1456 = vld [vmem:[#allocation2] sm:$0xff]
      %v1457 = vld [vmem:[#allocation2 + $0x8] sm:$0xff]
      %v1458 = vld [vmem:[#allocation2 + $0x10] sm:$0xff]
      %v1459 = vld [vmem:[#allocation2 + $0x18] sm:$0xff]
      %1464 = vrot.lane.b32.xlu0 %v1456, 1
      %v1465 = vpop.permute.xlu0 %1464
      %1466 = vrot.lane.b32.xlu0 %v1457, 1
      %v1467 = vpop.permute.xlu0 %1466
      %1468 = vrot.lane.b32.xlu0 %v1458, 1
      %v1469 = vpop.permute.xlu0 %1468
      %1470 = vrot.lane.b32.xlu0 %v1459, 1
      %v1471 = vpop.permute.xlu0 %1470
      %v1472 = vsel %vm293, %v1465, %v1467
      %v1473 = vsel %vm293, %v1467, %v1469
      %v1474 = vsel %vm293, %v1469, %v1471
      %1478 = vst [vmem:[#allocation3 + $0x48] sm:$0xff] %v1472
      %1479 = vst [vmem:[#allocation3 + $0x50] sm:$0xff] %v1473
      %1480 = vst.msk [vmem:[#allocation3 + $0x58] sm:$0xff] %vm497, %v1474
      %v1481 = vld [vmem:[#allocation2 + $0x8] sm:$0xff]
      %v1482 = vld [vmem:[#allocation2 + $0x10] sm:$0xff]
      %v1483 = vld [vmem:[#allocation2 + $0x18] sm:$0xff]
      %1484 = vst [vmem:[#allocation3 + $0x60] sm:$0xff] %v1481
      %1485 = vst [vmem:[#allocation3 + $0x68] sm:$0xff] %v1482
      %1486 = vst.msk [vmem:[#allocation3 + $0x70] sm:$0xff] %vm497, %v1483
      %v1487 = vld [vmem:[#allocation2 + $0x8] sm:$0xff]
      %v1488 = vld [vmem:[#allocation2 + $0x10] sm:$0xff]
      %v1489 = vld [vmem:[#allocation2 + $0x18] sm:$0xff]
      %1493 = vrot.lane.b32.xlu0 %v1487, 127
      %v1494 = vpop.permute.xlu0 %1493
      %1495 = vrot.lane.b32.xlu0 %v1488, 127
      %v1496 = vpop.permute.xlu0 %1495
      %1497 = vrot.lane.b32.xlu0 %v1489, 127
      %v1498 = vpop.permute.xlu0 %1497
      %v1499 = vsel %vm308, %v1494, %v1496
      %v1500 = vsel %vm308, %v1496, %v1498
      %1504 = vst [vmem:[#allocation3 + $0x78] sm:$0xff] %v1499
      %1505 = vst [vmem:[#allocation3 + $0x80] sm:$0xff] %v1500
      %1506 = vst.msk [vmem:[#allocation3 + $0x88] sm:$0xff] %vm497, %v1498
      %v1507 = vld [vmem:[#allocation2 + $0x8] sm:$0xff]
      %v1508 = vld [vmem:[#allocation2 + $0x10] sm:$0xff]
      %v1509 = vld [vmem:[#allocation2 + $0x18] sm:$0xff]
      %1513 = vrot.lane.b32.xlu0 %v1507, 111
      %v1514 = vpop.permute.xlu0 %1513
      %1515 = vrot.lane.b32.xlu0 %v1508, 111
      %v1516 = vpop.permute.xlu0 %1515
      %1517 = vrot.lane.b32.xlu0 %v1509, 111
      %v1518 = vpop.permute.xlu0 %1517
      %v1519 = vsel %vm319, %v1514, %v1516
      %v1520 = vsel %vm319, %v1516, %v1518
      %1524 = vst [vmem:[#allocation3 + $0x90] sm:$0xff] %v1519
      %1525 = vst [vmem:[#allocation3 + $0x98] sm:$0xff] %v1520
      %1526 = vst.msk [vmem:[#allocation3 + $0xa0] sm:$0xff] %vm497, %v1518
      %v1527 = vld [vmem:[#allocation2 + $0x8] sm:$0xff]
      %v1528 = vld [vmem:[#allocation2 + $0x10] sm:$0xff]
      %v1529 = vld [vmem:[#allocation2 + $0x18] sm:$0xff]
      %1533 = vrot.lane.b32.xlu0 %v1527, 110
      %v1534 = vpop.permute.xlu0 %1533
      %1535 = vrot.lane.b32.xlu0 %v1528, 110
      %v1536 = vpop.permute.xlu0 %1535
      %1537 = vrot.lane.b32.xlu0 %v1529, 110
      %v1538 = vpop.permute.xlu0 %1537
      %v1539 = vsel %vm330, %v1534, %v1536
      %v1540 = vsel %vm330, %v1536, %v1538
      %1544 = vst [vmem:[#allocation3 + $0xa8] sm:$0xff] %v1539
      %1545 = vst [vmem:[#allocation3 + $0xb0] sm:$0xff] %v1540
      %1546 = vst.msk [vmem:[#allocation3 + $0xb8] sm:$0xff] %vm497, %v1538
      %v1547 = vld [vmem:[#allocation2 + $0x8] sm:$0xff]
      %v1548 = vld [vmem:[#allocation2 + $0x10] sm:$0xff]
      %v1549 = vld [vmem:[#allocation2 + $0x18] sm:$0xff]
      %1553 = vrot.lane.b32.xlu0 %v1547, 109
      %v1554 = vpop.permute.xlu0 %1553
      %1555 = vrot.lane.b32.xlu0 %v1548, 109
      %v1556 = vpop.permute.xlu0 %1555
      %1557 = vrot.lane.b32.xlu0 %v1549, 109
      %v1558 = vpop.permute.xlu0 %1557
      %v1559 = vsel %vm341, %v1554, %v1556
      %v1560 = vsel %vm341, %v1556, %v1558
      %1564 = vst [vmem:[#allocation3 + $0xc0] sm:$0xff] %v1559
      %1565 = vst [vmem:[#allocation3 + $0xc8] sm:$0xff] %v1560
      %1566 = vst.msk [vmem:[#allocation3 + $0xd0] sm:$0xff] %vm497, %v1558
      %v1567 = vld [vmem:[%s3 + $0x1c] sm:$0xf]
      %v1568 = vld [vmem:[%s3 + $0x20] sm:$0xf]
      %v1569 = vld [vmem:[%s3 + $0x24] sm:$0xf]
      %v1570 = vld [vmem:[%s3 + $0x28] sm:$0xf]
      %v1571 = vld [vmem:[%s3 + $0x2c] sm:$0x3]
      %v1572 = vld [vmem:[#allocation3] sm:$0xff]
      %v1573 = vld [vmem:[#allocation3 + $0x8] sm:$0xff]
      %v1574 = vld [vmem:[#allocation3 + $0x10] sm:$0xff]
      %v1575 = vld [vmem:[#allocation3 + $0x18] sm:$0xff]
      %v1576 = vld [vmem:[#allocation3 + $0x20] sm:$0xff]
      %v1577 = vld [vmem:[#allocation3 + $0x28] sm:$0xff]
      %v1578 = vld [vmem:[#allocation3 + $0x30] sm:$0xff]
      %v1579 = vld [vmem:[#allocation3 + $0x38] sm:$0xff]
      %v1580 = vld [vmem:[#allocation3 + $0x40] sm:$0xff]
      %v1581 = vld [vmem:[#allocation3 + $0x48] sm:$0xff]
      %v1582 = vld [vmem:[#allocation3 + $0x50] sm:$0xff]
      %v1583 = vld [vmem:[#allocation3 + $0x58] sm:$0xff]
      %v1584 = vld [vmem:[#allocation3 + $0x60] sm:$0xff]
      %v1585 = vld [vmem:[#allocation3 + $0x68] sm:$0xff]
      %v1586 = vld [vmem:[#allocation3 + $0x70] sm:$0xff]
      %v1587 = vld [vmem:[#allocation3 + $0x78] sm:$0xff]
      %v1588 = vld [vmem:[#allocation3 + $0x80] sm:$0xff]
      %v1589 = vld [vmem:[#allocation3 + $0x88] sm:$0xff]
      %v1590 = vld [vmem:[#allocation3 + $0x90] sm:$0xff]
      %v1591 = vld [vmem:[#allocation3 + $0x98] sm:$0xff]
      %v1592 = vld [vmem:[#allocation3 + $0xa0] sm:$0xff]
      %v1593 = vld [vmem:[#allocation3 + $0xa8] sm:$0xff]
      %v1594 = vld [vmem:[#allocation3 + $0xb0] sm:$0xff]
      %v1595 = vld [vmem:[#allocation3 + $0xb8] sm:$0xff]
      %v1596 = vld [vmem:[#allocation3 + $0xc0] sm:$0xff]
      %v1597 = vld [vmem:[#allocation3 + $0xc8] sm:$0xff]
      %v1598 = vld [vmem:[#allocation3 + $0xd0] sm:$0xff]
      %v1599 = vpack.c.bf16 %v1575, %v1572
      %v1600 = vpack.c.bf16 %v1576, %v1573
      %v1601 = vpack.c.bf16 %v1577, %v1574
      %v1602 = vpack.c.bf16 %v1581, %v1578
      %v1603 = vpack.c.bf16 %v1582, %v1579
      %v1604 = vpack.c.bf16 %v1583, %v1580
      %v1605 = vpack.c.bf16 %v1587, %v1584
      %v1606 = vpack.c.bf16 %v1588, %v1585
      %v1607 = vpack.c.bf16 %v1589, %v1586
      %v1608 = vpack.c.bf16 %v1593, %v1590
      %v1609 = vpack.c.bf16 %v1594, %v1591
      %v1610 = vpack.c.bf16 %v1595, %v1592
      %v1611 = vpack.c.bf16 %v1596, %v1596
      %v1612 = vpack.c.bf16 %v1597, %v1597
      %v1613 = vpack.c.bf16 %v1598, %v1598
      %v1614 = vld [vmem:[%s4 + $0x40] sm:$0xff]
      %v1615 = vld [vmem:[%s4 + $0x48] sm:$0xff]
      %v1616 = vld [vmem:[%s4 + $0x50] sm:$0xff]
      %v1617 = vld [vmem:[%s4 + $0x58] sm:$0xff]
      %v1618 = vld [vmem:[%s4 + $0x60] sm:$0xf]
      %1620 = vset.pattern.permute.xlu0 0
      %1621 = vperm.xlu0 %1620, %v1614
      %v1622 = vpop.permute.xlu0 %1621
      %1625 = vset.pattern.permute.xlu0 0
      %1626 = vperm.xlu0 %1625, %v1615
      %v1627 = vpop.permute.xlu0 %1626
      %1630 = vset.pattern.permute.xlu0 0
      %1631 = vperm.xlu0 %1630, %v1616
      %v1632 = vpop.permute.xlu0 %1631
      %1635 = vset.pattern.permute.xlu0 0
      %1636 = vperm.xlu0 %1635, %v1617
      %v1637 = vpop.permute.xlu0 %1636
      %1640 = vset.pattern.permute.xlu0 0
      %1641 = vperm.xlu0 %1640, %v1618
      %v1642 = vpop.permute.xlu0 %1641
      %v1649 = vunpack.c.l.b16 %v1567
      %v1650 = vunpack.c.l.b16 %v1568
      %v1651 = vunpack.c.l.b16 %v1569
      %v1652 = vunpack.c.l.b16 %v1570
      %v1653 = vunpack.c.l.b16 %v1571
      %v1654 = vpack.c.b16 %v1650, %v1649
      %v1655 = vpack.c.b16 %v1652, %v1651
      %v1656 = vpack.c.b16 %v1653, %v1653
      %v1658 = vsel %vm775, %v1654, 0
      %v1661 = vsel %vm775, %v1655, 0
      %v1664 = vsel %vm775, %v1656, 0
      %v1667 = vsel %vm367, %v1611, 0
      %v1670 = vsel %vm367, %v1612, 0
      %v1673 = vsel %vm367, %v1613, 0
      %1675 = vmatprep.subr.bf16.mxu0 %v1600
      %1676 = vmatpush1.bf16.msra.mxu0 %v1599
      %1677 = vmatprep.subr.bf16.mxu0 %v1603
      %1678 = vmatpush1.bf16.msra.mxu0 %v1602
      %1679 = vmatprep.subr.bf16.mxu0 %v1606
      %1680 = vmatpush1.bf16.msra.mxu0 %v1605
      %1681 = vmatprep.subr.bf16.mxu0 %v1609
      %1682 = vmatpush1.bf16.msra.mxu0 %v1608
      %1683 = vmatprep.subr.bf16.mxu0 %v1670
      %1684 = vmatpush1.bf16.msra.mxu0 %v1667
      %1685 = vmatprep.subr.bf16.mxu0 0
      %1686 = vmatpush1.bf16.msra.mxu0 0
      %1687 = vmatprep.subr.bf16.mxu0 0
      %1688 = vmatpush1.bf16.msra.mxu0 0
      %1689 = vmatprep.subr.bf16.mxu0 0
      %1690 = vmatpush1.bf16.msra.mxu0 0
      %1691 = vmatprep.subr.bf16.mxu0 0
      %1692 = vmatpush1.bf16.msra.mxu0 0
      %1693 = vmatprep.subr.bf16.mxu0 0
      %1694 = vmatpush1.bf16.msra.mxu0 0
      %1695 = vmatprep.subr.bf16.mxu0 0
      %1696 = vmatpush1.bf16.msra.mxu0 0
      %1697 = vmatprep.subr.bf16.mxu0 0
      %1698 = vmatpush1.bf16.msra.mxu0 0
      %1699 = vmatprep.subr.bf16.mxu0 0
      %1700 = vmatpush1.bf16.msra.mxu0 0
      %1701 = vmatprep.subr.bf16.mxu0 0
      %1702 = vmatpush1.bf16.msra.mxu0 0
      %1703 = vmatprep.subr.bf16.mxu0 0
      %1704 = vmatpush1.bf16.msra.mxu0 0
      %1705 = vmatprep.subr.bf16.mxu0 0
      %1706 = vmatpush1.bf16.msra.mxu0 0
      %1707 = vmatprep.mubr.bf16.mxu0 0
      %1708 = vmatmul.mubr.bf16.gmra.mrb[0].mxu0 %v1658
      %v1709 = vpop.f32.mrb[0].mxu0
      %v1710 = vadd.f32 %v1622, %v1709
      %v1711 = vpop.f32.mrb[0].mxu0
      %v1712 = vadd.f32 %v1622, %v1711
      %v1713 = vpop.f32.mrb[0].mxu0
      %v1714 = vadd.f32 %v1627, %v1713
      %v1715 = vpop.f32.mrb[0].mxu0
      %v1716 = vadd.f32 %v1627, %v1715
      %1717 = vmatprep.mubr.bf16.mxu0 0
      %1718 = vmatmul.mubr.bf16.gmra.mrb[0].mxu0 %v1661
      %v1719 = vpop.f32.mrb[0].mxu0
      %v1720 = vadd.f32 %v1632, %v1719
      %v1721 = vpop.f32.mrb[0].mxu0
      %v1722 = vadd.f32 %v1632, %v1721
      %v1723 = vpop.f32.mrb[0].mxu0
      %v1724 = vadd.f32 %v1637, %v1723
      %v1725 = vpop.f32.mrb[0].mxu0
      %v1726 = vadd.f32 %v1637, %v1725
      %1727 = vmatprep.mubr.bf16.mxu0 0
      %1728 = vmatmul.mubr.bf16.gmra.mrb[0].mxu0 %v1664
      %v1729 = vpop.f32.mrb[0].mxu0
      %v1730 = vadd.f32 %v1642, %v1729
      %v1731 = vpop.f32.mrb[0].mxu0
      %v1732 = vadd.f32 %v1642, %v1731
      %v1733 = vpop.f32.mrb[0].mxu0
      %v1734 = vpop.f32.mrb[0].mxu0
      %1735 = vdwg.mxu0
      %1736 = vmatprep.subr.bf16.mxu0 0
      %1737 = vmatpush1.bf16.msra.mxu0 %v1601
      %1738 = vmatprep.subr.bf16.mxu0 0
      %1739 = vmatpush1.bf16.msra.mxu0 %v1604
      %1740 = vmatprep.subr.bf16.mxu0 0
      %1741 = vmatpush1.bf16.msra.mxu0 %v1607
      %1742 = vmatprep.subr.bf16.mxu0 0
      %1743 = vmatpush1.bf16.msra.mxu0 %v1610
      %1744 = vmatprep.subr.bf16.mxu0 0
      %1745 = vmatpush1.bf16.msra.mxu0 %v1673
      %1746 = vmatprep.subr.bf16.mxu0 0
      %1747 = vmatpush1.bf16.msra.mxu0 0
      %1748 = vmatprep.subr.bf16.mxu0 0
      %1749 = vmatpush1.bf16.msra.mxu0 0
      %1750 = vmatprep.subr.bf16.mxu0 0
      %1751 = vmatpush1.bf16.msra.mxu0 0
      %1752 = vmatprep.subr.bf16.mxu0 0
      %1753 = vmatpush1.bf16.msra.mxu0 0
      %1754 = vmatprep.subr.bf16.mxu0 0
      %1755 = vmatpush1.bf16.msra.mxu0 0
      %1756 = vmatprep.subr.bf16.mxu0 0
      %1757 = vmatpush1.bf16.msra.mxu0 0
      %1758 = vmatprep.subr.bf16.mxu0 0
      %1759 = vmatpush1.bf16.msra.mxu0 0
      %1760 = vmatprep.subr.bf16.mxu0 0
      %1761 = vmatpush1.bf16.msra.mxu0 0
      %1762 = vmatprep.subr.bf16.mxu0 0
      %1763 = vmatpush1.bf16.msra.mxu0 0
      %1764 = vmatprep.subr.bf16.mxu0 0
      %1765 = vmatpush1.bf16.msra.mxu0 0
      %1766 = vmatprep.subr.bf16.mxu0 0
      %1767 = vmatpush1.bf16.msra.mxu0 0
      %1768 = vmatprep.mubr.bf16.mxu0 0
      %1769 = vmatmul.mubr.bf16.gmra.mrb[0].mxu0 %v1658
      %v1770 = vpop.f32.mrb[0].mxu0
      %v1771 = vadd.f32 %v1622, %v1770
      %v1772 = vpop.f32.mrb[0].mxu0
      %v1773 = vpop.f32.mrb[0].mxu0
      %v1774 = vadd.f32 %v1627, %v1773
      %v1775 = vpop.f32.mrb[0].mxu0
      %1776 = vmatprep.mubr.bf16.mxu0 0
      %1777 = vmatmul.mubr.bf16.gmra.mrb[0].mxu0 %v1661
      %v1778 = vpop.f32.mrb[0].mxu0
      %v1779 = vadd.f32 %v1632, %v1778
      %v1780 = vpop.f32.mrb[0].mxu0
      %v1781 = vpop.f32.mrb[0].mxu0
      %v1782 = vadd.f32 %v1637, %v1781
      %v1783 = vpop.f32.mrb[0].mxu0
      %1784 = vmatprep.mubr.bf16.mxu0 0
      %1785 = vmatmul.mubr.bf16.gmra.mrb[0].mxu0 %v1664
      %v1786 = vpop.f32.mrb[0].mxu0
      %v1787 = vadd.f32 %v1642, %v1786
      %v1788 = vpop.f32.mrb[0].mxu0
      %v1789 = vpop.f32.mrb[0].mxu0
      %v1790 = vpop.f32.mrb[0].mxu0
      %1791 = vdwg.mxu0
      %v1792 = vsel %vm367, %v1730, -inf
      %v1793 = vrot.slane %v1792, 4
      %v1794 = vmax.f32 %v1792, %v1793
      %v1795 = vrot.slane %v1794, 2
      %v1796 = vmax.f32 %v1794, %v1795
      %v1797 = vrot.slane %v1796, 1
      %v1798 = vmax.f32 %v1796, %v1797
      %v1799 = vsel %vm367, %v1732, -inf
      %v1800 = vrot.slane %v1799, 4
      %v1801 = vmax.f32 %v1799, %v1800
      %v1802 = vrot.slane %v1801, 2
      %v1803 = vmax.f32 %v1801, %v1802
      %v1804 = vrot.slane %v1803, 1
      %v1805 = vmax.f32 %v1803, %v1804
      %v1806 = vsel %vm925, %v1787, -inf
      %v1807 = vrot.slane %v1806, 4
      %v1808 = vmax.f32 %v1806, %v1807
      %v1809 = vrot.slane %v1808, 2
      %v1810 = vmax.f32 %v1808, %v1809
      %v1811 = vrot.slane %v1810, 1
      %v1812 = vmax.f32 %v1810, %v1811
      %v1813 = vsub.f32 %v1730, %v1798
      %v1814 = vsub.f32 %v1732, %v1805
      %v1815 = vsub.f32 %v1787, %v1812
      %v1816 = vmul.f32 %v1813, 1.442695
      %v1817 = vpow.pop %v1816
      %v1818 = vmul.f32 %v1814, 1.442695
      %v1819 = vpow.pop %v1818
      %v1820 = vmul.f32 %v1815, 1.442695
      %v1821 = vpow.pop %v1820
      %v1822 = vsel %vm367, %v1817, 0.0
      %v1823 = vrot.slane %v1822, 4
      %v1824 = vadd.f32 %v1822, %v1823
      %v1825 = vrot.slane %v1824, 2
      %v1826 = vadd.f32 %v1824, %v1825
      %v1827 = vrot.slane %v1826, 1
      %v1828 = vadd.f32 %v1826, %v1827
      %v1829 = vsel %vm367, %v1819, 0.0
      %v1830 = vrot.slane %v1829, 4
      %v1831 = vadd.f32 %v1829, %v1830
      %v1832 = vrot.slane %v1831, 2
      %v1833 = vadd.f32 %v1831, %v1832
      %v1834 = vrot.slane %v1833, 1
      %v1835 = vadd.f32 %v1833, %v1834
      %v1836 = vsel %vm925, %v1821, 0.0
      %v1837 = vrot.slane %v1836, 4
      %v1838 = vadd.f32 %v1836, %v1837
      %v1839 = vrot.slane %v1838, 2
      %v1840 = vadd.f32 %v1838, %v1839
      %v1841 = vrot.slane %v1840, 1
      %v1842 = vadd.f32 %v1840, %v1841
      %v1843 = vrcp.pop %v1828
      %v1844 = vmul.f32 %v1817, %v1843
      %v1845 = vrcp.pop %v1835
      %v1846 = vmul.f32 %v1819, %v1845
      %v1847 = vrcp.pop %v1842
      %v1848 = vmul.f32 %v1821, %v1847
      %v1849 = vlaneseq
      %v1850 = vshrl.u32 %v1849, 7
      %v1851 = vsub.s32 0, %v1850
      %v1852 = vrot.slane %v1844, %v1851
      %v1853 = vlaneseq
      %v1854 = vshrl.u32 %v1853, 7
      %v1855 = vsub.s32 0, %v1854
      %v1856 = vrot.slane %v1846, %v1855
      %v1857 = vlaneseq
      %v1858 = vshrl.u32 %v1857, 7
      %v1859 = vsub.s32 0, %v1858
      %v1860 = vrot.slane %v1848, %v1859
      %v1861 = vmul.f32 %v1710, %v1852
      %v1862 = vmul.f32 %v1712, %v1856
      %v1863 = vmul.f32 %v1771, %v1860
      %v1864 = vlaneseq
      %v1865 = vshrl.u32 %v1864, 7
      %v1866 = vsub.s32 1, %v1865
      %v1867 = vrot.slane %v1844, %v1866
      %v1868 = vlaneseq
      %v1869 = vshrl.u32 %v1868, 7
      %v1870 = vsub.s32 1, %v1869
      %v1871 = vrot.slane %v1846, %v1870
      %v1872 = vlaneseq
      %v1873 = vshrl.u32 %v1872, 7
      %v1874 = vsub.s32 1, %v1873
      %v1875 = vrot.slane %v1848, %v1874
      %v1876 = vmul.f32 %v1714, %v1867
      %v1877 = vmul.f32 %v1716, %v1871
      %v1878 = vmul.f32 %v1774, %v1875
      %v1879 = vadd.f32 %v1861, %v1876
      %v1880 = vadd.f32 %v1862, %v1877
      %v1881 = vadd.f32 %v1863, %v1878
      %v1882 = vlaneseq
      %v1883 = vshrl.u32 %v1882, 7
      %v1884 = vsub.s32 2, %v1883
      %v1885 = vrot.slane %v1844, %v1884
      %v1886 = vlaneseq
      %v1887 = vshrl.u32 %v1886, 7
      %v1888 = vsub.s32 2, %v1887
      %v1889 = vrot.slane %v1846, %v1888
      %v1890 = vlaneseq
      %v1891 = vshrl.u32 %v1890, 7
      %v1892 = vsub.s32 2, %v1891
      %v1893 = vrot.slane %v1848, %v1892
      %v1894 = vmul.f32 %v1720, %v1885
      %v1895 = vmul.f32 %v1722, %v1889
      %v1896 = vmul.f32 %v1779, %v1893
      %v1897 = vadd.f32 %v1879, %v1894
      %v1898 = vadd.f32 %v1880, %v1895
      %v1899 = vadd.f32 %v1881, %v1896
      %v1900 = vlaneseq
      %v1901 = vshrl.u32 %v1900, 7
      %v1902 = vsub.s32 3, %v1901
      %v1903 = vrot.slane %v1844, %v1902
      %v1904 = vlaneseq
      %v1905 = vshrl.u32 %v1904, 7
      %v1906 = vsub.s32 3, %v1905
      %v1907 = vrot.slane %v1846, %v1906
      %v1908 = vlaneseq
      %v1909 = vshrl.u32 %v1908, 7
      %v1910 = vsub.s32 3, %v1909
      %v1911 = vrot.slane %v1848, %v1910
      %v1912 = vmul.f32 %v1724, %v1903
      %v1913 = vmul.f32 %v1726, %v1907
      %v1914 = vmul.f32 %v1782, %v1911
      %v1915 = vadd.f32 %v1897, %v1912
      %v1916 = vadd.f32 %v1898, %v1913
      %v1917 = vadd.f32 %v1899, %v1914
      %v1918 = vadd.f32 %v1915, %v1372
      %v1919 = vadd.f32 %v1916, %v1373
      %v1920 = vadd.f32 %v1917, %v1374
      %v1921 = vmul.f32 %v1918, %v480
      %v1922 = vmul.f32 %v1919, %v484
      %v1923 = vmul.f32 %v1920, %v488
      %1924 = vst [vmem:[#allocation2 + $0x8] sm:$0xff] %v1921
      %1925 = vst [vmem:[#allocation2 + $0x10] sm:$0xff] %v1922
      %1926 = vst.msk [vmem:[#allocation2 + $0x18] sm:$0xff] %vm497, %v1923
      %v1927 = vld [vmem:[#allocation2] sm:$0xff]
      %v1928 = vld [vmem:[#allocation2 + $0x8] sm:$0xff]
      %v1929 = vld [vmem:[#allocation2 + $0x10] sm:$0xff]
      %v1930 = vld [vmem:[#allocation2 + $0x18] sm:$0xff]
      %1935 = vrot.lane.b32.xlu0 %v1927, 19
      %v1936 = vpop.permute.xlu0 %1935
      %1937 = vrot.lane.b32.xlu0 %v1928, 19
      %v1938 = vpop.permute.xlu0 %1937
      %1939 = vrot.lane.b32.xlu0 %v1929, 19
      %v1940 = vpop.permute.xlu0 %1939
      %1941 = vrot.lane.b32.xlu0 %v1930, 19
      %v1942 = vpop.permute.xlu0 %1941
      %v1943 = vsel %vm261, %v1936, %v1938
      %v1944 = vsel %vm261, %v1938, %v1940
      %v1945 = vsel %vm261, %v1940, %v1942
      %1949 = vst [vmem:[#allocation3] sm:$0xff] %v1943
      %1950 = vst [vmem:[#allocation3 + $0x8] sm:$0xff] %v1944
      %1951 = vst.msk [vmem:[#allocation3 + $0x10] sm:$0xff] %vm497, %v1945
      %v1952 = vld [vmem:[#allocation2] sm:$0xff]
      %v1953 = vld [vmem:[#allocation2 + $0x8] sm:$0xff]
      %v1954 = vld [vmem:[#allocation2 + $0x10] sm:$0xff]
      %v1955 = vld [vmem:[#allocation2 + $0x18] sm:$0xff]
      %1960 = vrot.lane.b32.xlu0 %v1952, 18
      %v1961 = vpop.permute.xlu0 %1960
      %1962 = vrot.lane.b32.xlu0 %v1953, 18
      %v1963 = vpop.permute.xlu0 %1962
      %1964 = vrot.lane.b32.xlu0 %v1954, 18
      %v1965 = vpop.permute.xlu0 %1964
      %1966 = vrot.lane.b32.xlu0 %v1955, 18
      %v1967 = vpop.permute.xlu0 %1966
      %v1968 = vsel %vm271, %v1961, %v1963
      %v1969 = vsel %vm271, %v1963, %v1965
      %v1970 = vsel %vm271, %v1965, %v1967
      %1974 = vst [vmem:[#allocation3 + $0x18] sm:$0xff] %v1968
      %1975 = vst [vmem:[#allocation3 + $0x20] sm:$0xff] %v1969
      %1976 = vst.msk [vmem:[#allocation3 + $0x28] sm:$0xff] %vm497, %v1970
      %v1977 = vld [vmem:[#allocation2] sm:$0xff]
      %v1978 = vld [vmem:[#allocation2 + $0x8] sm:$0xff]
      %v1979 = vld [vmem:[#allocation2 + $0x10] sm:$0xff]
      %v1980 = vld [vmem:[#allocation2 + $0x18] sm:$0xff]
      %1985 = vrot.lane.b32.xlu0 %v1977, 17
      %v1986 = vpop.permute.xlu0 %1985
      %1987 = vrot.lane.b32.xlu0 %v1978, 17
      %v1988 = vpop.permute.xlu0 %1987
      %1989 = vrot.lane.b32.xlu0 %v1979, 17
      %v1990 = vpop.permute.xlu0 %1989
      %1991 = vrot.lane.b32.xlu0 %v1980, 17
      %v1992 = vpop.permute.xlu0 %1991
      %v1993 = vsel %vm282, %v1986, %v1988
      %v1994 = vsel %vm282, %v1988, %v1990
      %v1995 = vsel %vm282, %v1990, %v1992
      %1999 = vst [vmem:[#allocation3 + $0x30] sm:$0xff] %v1993
      %2000 = vst [vmem:[#allocation3 + $0x38] sm:$0xff] %v1994
      %2001 = vst.msk [vmem:[#allocation3 + $0x40] sm:$0xff] %vm497, %v1995
      %v2002 = vld [vmem:[#allocation2] sm:$0xff]
      %v2003 = vld [vmem:[#allocation2 + $0x8] sm:$0xff]
      %v2004 = vld [vmem:[#allocation2 + $0x10] sm:$0xff]
      %v2005 = vld [vmem:[#allocation2 + $0x18] sm:$0xff]
      %2010 = vrot.lane.b32.xlu0 %v2002, 1
      %v2011 = vpop.permute.xlu0 %2010
      %2012 = vrot.lane.b32.xlu0 %v2003, 1
      %v2013 = vpop.permute.xlu0 %2012
      %2014 = vrot.lane.b32.xlu0 %v2004, 1
      %v2015 = vpop.permute.xlu0 %2014
      %2016 = vrot.lane.b32.xlu0 %v2005, 1
      %v2017 = vpop.permute.xlu0 %2016
      %v2018 = vsel %vm293, %v2011, %v2013
      %v2019 = vsel %vm293, %v2013, %v2015
      %v2020 = vsel %vm293, %v2015, %v2017
      %2024 = vst [vmem:[#allocation3 + $0x48] sm:$0xff] %v2018
      %2025 = vst [vmem:[#allocation3 + $0x50] sm:$0xff] %v2019
      %2026 = vst.msk [vmem:[#allocation3 + $0x58] sm:$0xff] %vm497, %v2020
      %v2027 = vld [vmem:[#allocation2 + $0x8] sm:$0xff]
      %v2028 = vld [vmem:[#allocation2 + $0x10] sm:$0xff]
      %v2029 = vld [vmem:[#allocation2 + $0x18] sm:$0xff]
      %2030 = vst [vmem:[#allocation3 + $0x60] sm:$0xff] %v2027
      %2031 = vst [vmem:[#allocation3 + $0x68] sm:$0xff] %v2028
      %2032 = vst.msk [vmem:[#allocation3 + $0x70] sm:$0xff] %vm497, %v2029
      %v2033 = vld [vmem:[#allocation2 + $0x8] sm:$0xff]
      %v2034 = vld [vmem:[#allocation2 + $0x10] sm:$0xff]
      %v2035 = vld [vmem:[#allocation2 + $0x18] sm:$0xff]
      %2039 = vrot.lane.b32.xlu0 %v2033, 127
      %v2040 = vpop.permute.xlu0 %2039
      %2041 = vrot.lane.b32.xlu0 %v2034, 127
      %v2042 = vpop.permute.xlu0 %2041
      %2043 = vrot.lane.b32.xlu0 %v2035, 127
      %v2044 = vpop.permute.xlu0 %2043
      %v2045 = vsel %vm308, %v2040, %v2042
      %v2046 = vsel %vm308, %v2042, %v2044
      %2050 = vst [vmem:[#allocation3 + $0x78] sm:$0xff] %v2045
      %2051 = vst [vmem:[#allocation3 + $0x80] sm:$0xff] %v2046
      %2052 = vst.msk [vmem:[#allocation3 + $0x88] sm:$0xff] %vm497, %v2044
      %v2053 = vld [vmem:[#allocation2 + $0x8] sm:$0xff]
      %v2054 = vld [vmem:[#allocation2 + $0x10] sm:$0xff]
      %v2055 = vld [vmem:[#allocation2 + $0x18] sm:$0xff]
      %2059 = vrot.lane.b32.xlu0 %v2053, 111
      %v2060 = vpop.permute.xlu0 %2059
      %2061 = vrot.lane.b32.xlu0 %v2054, 111
      %v2062 = vpop.permute.xlu0 %2061
      %2063 = vrot.lane.b32.xlu0 %v2055, 111
      %v2064 = vpop.permute.xlu0 %2063
      %v2065 = vsel %vm319, %v2060, %v2062
      %v2066 = vsel %vm319, %v2062, %v2064
      %2070 = vst [vmem:[#allocation3 + $0x90] sm:$0xff] %v2065
      %2071 = vst [vmem:[#allocation3 + $0x98] sm:$0xff] %v2066
      %2072 = vst.msk [vmem:[#allocation3 + $0xa0] sm:$0xff] %vm497, %v2064
      %v2073 = vld [vmem:[#allocation2 + $0x8] sm:$0xff]
      %v2074 = vld [vmem:[#allocation2 + $0x10] sm:$0xff]
      %v2075 = vld [vmem:[#allocation2 + $0x18] sm:$0xff]
      %2079 = vrot.lane.b32.xlu0 %v2073, 110
      %v2080 = vpop.permute.xlu0 %2079
      %2081 = vrot.lane.b32.xlu0 %v2074, 110
      %v2082 = vpop.permute.xlu0 %2081
      %2083 = vrot.lane.b32.xlu0 %v2075, 110
      %v2084 = vpop.permute.xlu0 %2083
      %v2085 = vsel %vm330, %v2080, %v2082
      %v2086 = vsel %vm330, %v2082, %v2084
      %2090 = vst [vmem:[#allocation3 + $0xa8] sm:$0xff] %v2085
      %2091 = vst [vmem:[#allocation3 + $0xb0] sm:$0xff] %v2086
      %2092 = vst.msk [vmem:[#allocation3 + $0xb8] sm:$0xff] %vm497, %v2084
      %v2093 = vld [vmem:[#allocation2 + $0x8] sm:$0xff]
      %v2094 = vld [vmem:[#allocation2 + $0x10] sm:$0xff]
      %v2095 = vld [vmem:[#allocation2 + $0x18] sm:$0xff]
      %2099 = vrot.lane.b32.xlu0 %v2093, 109
      %v2100 = vpop.permute.xlu0 %2099
      %2101 = vrot.lane.b32.xlu0 %v2094, 109
      %v2102 = vpop.permute.xlu0 %2101
      %2103 = vrot.lane.b32.xlu0 %v2095, 109
      %v2104 = vpop.permute.xlu0 %2103
      %v2105 = vsel %vm341, %v2100, %v2102
      %v2106 = vsel %vm341, %v2102, %v2104
      %2110 = vst [vmem:[#allocation3 + $0xc0] sm:$0xff] %v2105
      %2111 = vst [vmem:[#allocation3 + $0xc8] sm:$0xff] %v2106
      %2112 = vst.msk [vmem:[#allocation3 + $0xd0] sm:$0xff] %vm497, %v2104
      %v2113 = vld [vmem:[%s3 + $0x30] sm:$0xf]
      %v2114 = vld [vmem:[%s3 + $0x34] sm:$0xf]
      %v2115 = vld [vmem:[%s3 + $0x38] sm:$0x3]
      %v2116 = vld [vmem:[#allocation3] sm:$0xff]
      %v2117 = vld [vmem:[#allocation3 + $0x8] sm:$0xff]
      %v2118 = vld [vmem:[#allocation3 + $0x10] sm:$0xff]
      %v2119 = vld [vmem:[#allocation3 + $0x18] sm:$0xff]
      %v2120 = vld [vmem:[#allocation3 + $0x20] sm:$0xff]
      %v2121 = vld [vmem:[#allocation3 + $0x28] sm:$0xff]
      %v2122 = vld [vmem:[#allocation3 + $0x30] sm:$0xff]
      %v2123 = vld [vmem:[#allocation3 + $0x38] sm:$0xff]
      %v2124 = vld [vmem:[#allocation3 + $0x40] sm:$0xff]
      %v2125 = vld [vmem:[#allocation3 + $0x48] sm:$0xff]
      %v2126 = vld [vmem:[#allocation3 + $0x50] sm:$0xff]
      %v2127 = vld [vmem:[#allocation3 + $0x58] sm:$0xff]
      %v2128 = vld [vmem:[#allocation3 + $0x60] sm:$0xff]
      %v2129 = vld [vmem:[#allocation3 + $0x68] sm:$0xff]
      %v2130 = vld [vmem:[#allocation3 + $0x70] sm:$0xff]
      %v2131 = vld [vmem:[#allocation3 + $0x78] sm:$0xff]
      %v2132 = vld [vmem:[#allocation3 + $0x80] sm:$0xff]
      %v2133 = vld [vmem:[#allocation3 + $0x88] sm:$0xff]
      %v2134 = vld [vmem:[#allocation3 + $0x90] sm:$0xff]
      %v2135 = vld [vmem:[#allocation3 + $0x98] sm:$0xff]
      %v2136 = vld [vmem:[#allocation3 + $0xa0] sm:$0xff]
      %v2137 = vld [vmem:[#allocation3 + $0xa8] sm:$0xff]
      %v2138 = vld [vmem:[#allocation3 + $0xb0] sm:$0xff]
      %v2139 = vld [vmem:[#allocation3 + $0xb8] sm:$0xff]
      %v2140 = vld [vmem:[#allocation3 + $0xc0] sm:$0xff]
      %v2141 = vld [vmem:[#allocation3 + $0xc8] sm:$0xff]
      %v2142 = vld [vmem:[#allocation3 + $0xd0] sm:$0xff]
      %v2143 = vpack.c.bf16 %v2119, %v2116
      %v2144 = vpack.c.bf16 %v2120, %v2117
      %v2145 = vpack.c.bf16 %v2121, %v2118
      %v2146 = vpack.c.bf16 %v2125, %v2122
      %v2147 = vpack.c.bf16 %v2126, %v2123
      %v2148 = vpack.c.bf16 %v2127, %v2124
      %v2149 = vpack.c.bf16 %v2131, %v2128
      %v2150 = vpack.c.bf16 %v2132, %v2129
      %v2151 = vpack.c.bf16 %v2133, %v2130
      %v2152 = vpack.c.bf16 %v2137, %v2134
      %v2153 = vpack.c.bf16 %v2138, %v2135
      %v2154 = vpack.c.bf16 %v2139, %v2136
      %v2155 = vpack.c.bf16 %v2140, %v2140
      %v2156 = vpack.c.bf16 %v2141, %v2141
      %v2157 = vpack.c.bf16 %v2142, %v2142
      %v2158 = vld [vmem:[%s4 + $0x68] sm:$0xff]
      %v2159 = vld [vmem:[%s4 + $0x70] sm:$0xff]
      %v2160 = vld [vmem:[%s4 + $0x78] sm:$0xf]
      %2162 = vset.pattern.permute.xlu0 0
      %2163 = vperm.xlu0 %2162, %v2158
      %v2164 = vpop.permute.xlu0 %2163
      %2167 = vset.pattern.permute.xlu0 0
      %2168 = vperm.xlu0 %2167, %v2159
      %v2169 = vpop.permute.xlu0 %2168
      %2172 = vset.pattern.permute.xlu0 0
      %2173 = vperm.xlu0 %2172, %v2160
      %v2174 = vpop.permute.xlu0 %2173
      %v2179 = vunpack.c.l.b16 %v2113
      %v2180 = vunpack.c.l.b16 %v2114
      %v2181 = vunpack.c.l.b16 %v2115
      %v2182 = vpack.c.b16 %v2180, %v2179
      %v2183 = vpack.c.b16 %v2181, %v2181
      %v2185 = vsel %vm775, %v2182, 0
      %v2188 = vsel %vm775, %v2183, 0
      %v2191 = vsel %vm367, %v2155, 0
      %v2194 = vsel %vm367, %v2156, 0
      %v2197 = vsel %vm367, %v2157, 0
      %2199 = vmatprep.subr.bf16.mxu0 %v2144
      %2200 = vmatpush1.bf16.msra.mxu0 %v2143
      %2201 = vmatprep.subr.bf16.mxu0 %v2147
      %2202 = vmatpush1.bf16.msra.mxu0 %v2146
      %2203 = vmatprep.subr.bf16.mxu0 %v2150
      %2204 = vmatpush1.bf16.msra.mxu0 %v2149
      %2205 = vmatprep.subr.bf16.mxu0 %v2153
      %2206 = vmatpush1.bf16.msra.mxu0 %v2152
      %2207 = vmatprep.subr.bf16.mxu0 %v2194
      %2208 = vmatpush1.bf16.msra.mxu0 %v2191
      %2209 = vmatprep.subr.bf16.mxu0 0
      %2210 = vmatpush1.bf16.msra.mxu0 0
      %2211 = vmatprep.subr.bf16.mxu0 0
      %2212 = vmatpush1.bf16.msra.mxu0 0
      %2213 = vmatprep.subr.bf16.mxu0 0
      %2214 = vmatpush1.bf16.msra.mxu0 0
      %2215 = vmatprep.subr.bf16.mxu0 0
      %2216 = vmatpush1.bf16.msra.mxu0 0
      %2217 = vmatprep.subr.bf16.mxu0 0
      %2218 = vmatpush1.bf16.msra.mxu0 0
      %2219 = vmatprep.subr.bf16.mxu0 0
      %2220 = vmatpush1.bf16.msra.mxu0 0
      %2221 = vmatprep.subr.bf16.mxu0 0
      %2222 = vmatpush1.bf16.msra.mxu0 0
      %2223 = vmatprep.subr.bf16.mxu0 0
      %2224 = vmatpush1.bf16.msra.mxu0 0
      %2225 = vmatprep.subr.bf16.mxu0 0
      %2226 = vmatpush1.bf16.msra.mxu0 0
      %2227 = vmatprep.subr.bf16.mxu0 0
      %2228 = vmatpush1.bf16.msra.mxu0 0
      %2229 = vmatprep.subr.bf16.mxu0 0
      %2230 = vmatpush1.bf16.msra.mxu0 0
      %2231 = vmatprep.mubr.bf16.mxu0 0
      %2232 = vmatmul.mubr.bf16.gmra.mrb[0].mxu0 %v2185
      %v2233 = vpop.f32.mrb[0].mxu0
      %v2234 = vadd.f32 %v2164, %v2233
      %v2235 = vpop.f32.mrb[0].mxu0
      %v2236 = vadd.f32 %v2164, %v2235
      %v2237 = vpop.f32.mrb[0].mxu0
      %v2238 = vadd.f32 %v2169, %v2237
      %v2239 = vpop.f32.mrb[0].mxu0
      %v2240 = vadd.f32 %v2169, %v2239
      %2241 = vmatprep.mubr.bf16.mxu0 0
      %2242 = vmatmul.mubr.bf16.gmra.mrb[0].mxu0 %v2188
      %v2243 = vpop.f32.mrb[0].mxu0
      %v2244 = vadd.f32 %v2174, %v2243
      %v2245 = vpop.f32.mrb[0].mxu0
      %v2246 = vadd.f32 %v2174, %v2245
      %v2247 = vpop.f32.mrb[0].mxu0
      %v2248 = vpop.f32.mrb[0].mxu0
      %2249 = vdwg.mxu0
      %2250 = vmatprep.subr.bf16.mxu0 0
      %2251 = vmatpush1.bf16.msra.mxu0 %v2145
      %2252 = vmatprep.subr.bf16.mxu0 0
      %2253 = vmatpush1.bf16.msra.mxu0 %v2148
      %2254 = vmatprep.subr.bf16.mxu0 0
      %2255 = vmatpush1.bf16.msra.mxu0 %v2151
      %2256 = vmatprep.subr.bf16.mxu0 0
      %2257 = vmatpush1.bf16.msra.mxu0 %v2154
      %2258 = vmatprep.subr.bf16.mxu0 0
      %2259 = vmatpush1.bf16.msra.mxu0 %v2197
      %2260 = vmatprep.subr.bf16.mxu0 0
      %2261 = vmatpush1.bf16.msra.mxu0 0
      %2262 = vmatprep.subr.bf16.mxu0 0
      %2263 = vmatpush1.bf16.msra.mxu0 0
      %2264 = vmatprep.subr.bf16.mxu0 0
      %2265 = vmatpush1.bf16.msra.mxu0 0
      %2266 = vmatprep.subr.bf16.mxu0 0
      %2267 = vmatpush1.bf16.msra.mxu0 0
      %2268 = vmatprep.subr.bf16.mxu0 0
      %2269 = vmatpush1.bf16.msra.mxu0 0
      %2270 = vmatprep.subr.bf16.mxu0 0
      %2271 = vmatpush1.bf16.msra.mxu0 0
      %2272 = vmatprep.subr.bf16.mxu0 0
      %2273 = vmatpush1.bf16.msra.mxu0 0
      %2274 = vmatprep.subr.bf16.mxu0 0
      %2275 = vmatpush1.bf16.msra.mxu0 0
      %2276 = vmatprep.subr.bf16.mxu0 0
      %2277 = vmatpush1.bf16.msra.mxu0 0
      %2278 = vmatprep.subr.bf16.mxu0 0
      %2279 = vmatpush1.bf16.msra.mxu0 0
      %2280 = vmatprep.subr.bf16.mxu0 0
      %2281 = vmatpush1.bf16.msra.mxu0 0
      %2282 = vmatprep.mubr.bf16.mxu0 0
      %2283 = vmatmul.mubr.bf16.gmra.mrb[0].mxu0 %v2185
      %v2284 = vpop.f32.mrb[0].mxu0
      %v2285 = vadd.f32 %v2164, %v2284
      %v2286 = vpop.f32.mrb[0].mxu0
      %v2287 = vpop.f32.mrb[0].mxu0
      %v2288 = vadd.f32 %v2169, %v2287
      %v2289 = vpop.f32.mrb[0].mxu0
      %2290 = vmatprep.mubr.bf16.mxu0 0
      %2291 = vmatmul.mubr.bf16.gmra.mrb[0].mxu0 %v2188
      %v2292 = vpop.f32.mrb[0].mxu0
      %v2293 = vadd.f32 %v2174, %v2292
      %v2294 = vpop.f32.mrb[0].mxu0
      %v2295 = vpop.f32.mrb[0].mxu0
      %v2296 = vpop.f32.mrb[0].mxu0
      %2297 = vdwg.mxu0
      %v2298 = vsel %vm367, %v2244, -inf
      %v2299 = vrot.slane %v2298, 4
      %v2300 = vmax.f32 %v2298, %v2299
      %v2301 = vrot.slane %v2300, 2
      %v2302 = vmax.f32 %v2300, %v2301
      %v2303 = vrot.slane %v2302, 1
      %v2304 = vmax.f32 %v2302, %v2303
      %v2305 = vsel %vm367, %v2246, -inf
      %v2306 = vrot.slane %v2305, 4
      %v2307 = vmax.f32 %v2305, %v2306
      %v2308 = vrot.slane %v2307, 2
      %v2309 = vmax.f32 %v2307, %v2308
      %v2310 = vrot.slane %v2309, 1
      %v2311 = vmax.f32 %v2309, %v2310
      %v2312 = vsel %vm925, %v2293, -inf
      %v2313 = vrot.slane %v2312, 4
      %v2314 = vmax.f32 %v2312, %v2313
      %v2315 = vrot.slane %v2314, 2
      %v2316 = vmax.f32 %v2314, %v2315
      %v2317 = vrot.slane %v2316, 1
      %v2318 = vmax.f32 %v2316, %v2317
      %v2319 = vsub.f32 %v2244, %v2304
      %v2320 = vsub.f32 %v2246, %v2311
      %v2321 = vsub.f32 %v2293, %v2318
      %v2322 = vmul.f32 %v2319, 1.442695
      %v2323 = vpow.pop %v2322
      %v2324 = vmul.f32 %v2320, 1.442695
      %v2325 = vpow.pop %v2324
      %v2326 = vmul.f32 %v2321, 1.442695
      %v2327 = vpow.pop %v2326
      %v2328 = vsel %vm367, %v2323, 0.0
      %v2329 = vrot.slane %v2328, 4
      %v2330 = vadd.f32 %v2328, %v2329
      %v2331 = vrot.slane %v2330, 2
      %v2332 = vadd.f32 %v2330, %v2331
      %v2333 = vrot.slane %v2332, 1
      %v2334 = vadd.f32 %v2332, %v2333
      %v2335 = vsel %vm367, %v2325, 0.0
      %v2336 = vrot.slane %v2335, 4
      %v2337 = vadd.f32 %v2335, %v2336
      %v2338 = vrot.slane %v2337, 2
      %v2339 = vadd.f32 %v2337, %v2338
      %v2340 = vrot.slane %v2339, 1
      %v2341 = vadd.f32 %v2339, %v2340
      %v2342 = vsel %vm925, %v2327, 0.0
      %v2343 = vrot.slane %v2342, 4
      %v2344 = vadd.f32 %v2342, %v2343
      %v2345 = vrot.slane %v2344, 2
      %v2346 = vadd.f32 %v2344, %v2345
      %v2347 = vrot.slane %v2346, 1
      %v2348 = vadd.f32 %v2346, %v2347
      %v2349 = vrcp.pop %v2334
      %v2350 = vmul.f32 %v2323, %v2349
      %v2351 = vrcp.pop %v2341
      %v2352 = vmul.f32 %v2325, %v2351
      %v2353 = vrcp.pop %v2348
      %v2354 = vmul.f32 %v2327, %v2353
      %v2355 = vlaneseq
      %v2356 = vshrl.u32 %v2355, 7
      %v2357 = vsub.s32 0, %v2356
      %v2358 = vrot.slane %v2350, %v2357
      %v2359 = vlaneseq
      %v2360 = vshrl.u32 %v2359, 7
      %v2361 = vsub.s32 0, %v2360
      %v2362 = vrot.slane %v2352, %v2361
      %v2363 = vlaneseq
      %v2364 = vshrl.u32 %v2363, 7
      %v2365 = vsub.s32 0, %v2364
      %v2366 = vrot.slane %v2354, %v2365
      %v2367 = vmul.f32 %v2234, %v2358
      %v2368 = vmul.f32 %v2236, %v2362
      %v2369 = vmul.f32 %v2285, %v2366
      %v2370 = vlaneseq
      %v2371 = vshrl.u32 %v2370, 7
      %v2372 = vsub.s32 1, %v2371
      %v2373 = vrot.slane %v2350, %v2372
      %v2374 = vlaneseq
      %v2375 = vshrl.u32 %v2374, 7
      %v2376 = vsub.s32 1, %v2375
      %v2377 = vrot.slane %v2352, %v2376
      %v2378 = vlaneseq
      %v2379 = vshrl.u32 %v2378, 7
      %v2380 = vsub.s32 1, %v2379
      %v2381 = vrot.slane %v2354, %v2380
      %v2382 = vmul.f32 %v2234, %v2373
      %v2383 = vmul.f32 %v2236, %v2377
      %v2384 = vmul.f32 %v2285, %v2381
      %v2388 = vrot.slane %v2382, 4
      %v2389 = vrot.slane %v2383, 4
      %v2390 = vrot.slane %v2384, 4
      %v2394 = vadd.f32 %v2367, %v2388
      %v2395 = vadd.f32 %v2368, %v2389
      %v2396 = vadd.f32 %v2369, %v2390
      %v2397 = vlaneseq
      %v2398 = vshrl.u32 %v2397, 7
      %v2399 = vsub.s32 2, %v2398
      %v2400 = vrot.slane %v2350, %v2399
      %v2401 = vlaneseq
      %v2402 = vshrl.u32 %v2401, 7
      %v2403 = vsub.s32 2, %v2402
      %v2404 = vrot.slane %v2352, %v2403
      %v2405 = vlaneseq
      %v2406 = vshrl.u32 %v2405, 7
      %v2407 = vsub.s32 2, %v2406
      %v2408 = vrot.slane %v2354, %v2407
      %v2409 = vmul.f32 %v2238, %v2400
      %v2410 = vmul.f32 %v2240, %v2404
      %v2411 = vmul.f32 %v2288, %v2408
      %v2412 = vadd.f32 %v2394, %v2409
      %v2413 = vadd.f32 %v2395, %v2410
      %v2414 = vadd.f32 %v2396, %v2411
      %v2415 = vlaneseq
      %v2416 = vshrl.u32 %v2415, 7
      %v2417 = vsub.s32 3, %v2416
      %v2418 = vrot.slane %v2350, %v2417
      %v2419 = vlaneseq
      %v2420 = vshrl.u32 %v2419, 7
      %v2421 = vsub.s32 3, %v2420
      %v2422 = vrot.slane %v2352, %v2421
      %v2423 = vlaneseq
      %v2424 = vshrl.u32 %v2423, 7
      %v2425 = vsub.s32 3, %v2424
      %v2426 = vrot.slane %v2354, %v2425
      %v2427 = vmul.f32 %v2238, %v2418
      %v2428 = vmul.f32 %v2240, %v2422
      %v2429 = vmul.f32 %v2288, %v2426
      %v2433 = vrot.slane %v2427, 4
      %v2434 = vrot.slane %v2428, 4
      %v2435 = vrot.slane %v2429, 4
      %v2439 = vadd.f32 %v2412, %v2433
      %v2440 = vadd.f32 %v2413, %v2434
      %v2441 = vadd.f32 %v2414, %v2435
      %v2442 = vmul.f32 %v2439, %v480
      %v2443 = vmul.f32 %v2440, %v484
      %v2444 = vmul.f32 %v2441, %v488
      %2445 = vst [vmem:[#allocation2 + $0x8] sm:$0xf] %v2442
      %2446 = vst [vmem:[#allocation2 + $0x10] sm:$0xf] %v2443
      %2447 = vst.msk [vmem:[#allocation2 + $0x18] sm:$0xf] %vm925, %v2444
      %v2448 = vld [vmem:[#allocation2] sm:$0xf]
      %v2449 = vld [vmem:[#allocation2 + $0x8] sm:$0xf]
      %v2450 = vld [vmem:[#allocation2 + $0x10] sm:$0xf]
      %v2451 = vld [vmem:[#allocation2 + $0x18] sm:$0xf]
      %2456 = vrot.lane.b32.xlu0 %v2448, 19
      %v2457 = vpop.permute.xlu0 %2456
      %2458 = vrot.lane.b32.xlu0 %v2449, 19
      %v2459 = vpop.permute.xlu0 %2458
      %2460 = vrot.lane.b32.xlu0 %v2450, 19
      %v2461 = vpop.permute.xlu0 %2460
      %2462 = vrot.lane.b32.xlu0 %v2451, 19
      %v2463 = vpop.permute.xlu0 %2462
      %v2464 = vsel %vm261, %v2457, %v2459
      %v2465 = vsel %vm261, %v2459, %v2461
      %v2466 = vsel %vm261, %v2461, %v2463
      %2470 = vst [vmem:[#allocation3] sm:$0xf] %v2464
      %2471 = vst [vmem:[#allocation3 + $0x8] sm:$0xf] %v2465
      %2472 = vst.msk [vmem:[#allocation3 + $0x10] sm:$0xf] %vm925, %v2466
      %v2473 = vld [vmem:[#allocation2] sm:$0xf]
      %v2474 = vld [vmem:[#allocation2 + $0x8] sm:$0xf]
      %v2475 = vld [vmem:[#allocation2 + $0x10] sm:$0xf]
      %v2476 = vld [vmem:[#allocation2 + $0x18] sm:$0xf]
      %v2481 = vrot.slane %v2473, 4
      %v2482 = vrot.slane %v2474, 4
      %v2483 = vrot.slane %v2475, 4
      %v2484 = vrot.slane %v2476, 4
      %2485 = vrot.lane.b32.xlu0 %v2481, 18
      %v2486 = vpop.permute.xlu0 %2485
      %2487 = vrot.lane.b32.xlu0 %v2482, 18
      %v2488 = vpop.permute.xlu0 %2487
      %2489 = vrot.lane.b32.xlu0 %v2483, 18
      %v2490 = vpop.permute.xlu0 %2489
      %2491 = vrot.lane.b32.xlu0 %v2484, 18
      %v2492 = vpop.permute.xlu0 %2491
      %v2493 = vsel %vm271, %v2486, %v2488
      %v2494 = vsel %vm271, %v2488, %v2490
      %v2495 = vsel %vm271, %v2490, %v2492
      %2499 = vst [vmem:[#allocation3] sm:$0xf0] %v2493
      %2500 = vst [vmem:[#allocation3 + $0x8] sm:$0xf0] %v2494
      %vm2501 = vcmask 261124
      %2502 = vst.msk [vmem:[#allocation3 + $0x10] sm:$0xf0] %vm2501, %v2495
      %v2503 = vld [vmem:[#allocation2] sm:$0xf]
      %v2504 = vld [vmem:[#allocation2 + $0x8] sm:$0xf]
      %v2505 = vld [vmem:[#allocation2 + $0x10] sm:$0xf]
      %v2506 = vld [vmem:[#allocation2 + $0x18] sm:$0xf]
      %2511 = vrot.lane.b32.xlu0 %v2503, 17
      %v2512 = vpop.permute.xlu0 %2511
      %2513 = vrot.lane.b32.xlu0 %v2504, 17
      %v2514 = vpop.permute.xlu0 %2513
      %2515 = vrot.lane.b32.xlu0 %v2505, 17
      %v2516 = vpop.permute.xlu0 %2515
      %2517 = vrot.lane.b32.xlu0 %v2506, 17
      %v2518 = vpop.permute.xlu0 %2517
      %v2519 = vsel %vm282, %v2512, %v2514
      %v2520 = vsel %vm282, %v2514, %v2516
      %v2521 = vsel %vm282, %v2516, %v2518
      %2525 = vst [vmem:[#allocation3 + $0x18] sm:$0xf] %v2519
      %2526 = vst [vmem:[#allocation3 + $0x20] sm:$0xf] %v2520
      %2527 = vst.msk [vmem:[#allocation3 + $0x28] sm:$0xf] %vm925, %v2521
      %v2528 = vld [vmem:[#allocation2] sm:$0xf]
      %v2529 = vld [vmem:[#allocation2 + $0x8] sm:$0xf]
      %v2530 = vld [vmem:[#allocation2 + $0x10] sm:$0xf]
      %v2531 = vld [vmem:[#allocation2 + $0x18] sm:$0xf]
      %v2536 = vrot.slane %v2528, 4
      %v2537 = vrot.slane %v2529, 4
      %v2538 = vrot.slane %v2530, 4
      %v2539 = vrot.slane %v2531, 4
      %2540 = vrot.lane.b32.xlu0 %v2536, 1
      %v2541 = vpop.permute.xlu0 %2540
      %2542 = vrot.lane.b32.xlu0 %v2537, 1
      %v2543 = vpop.permute.xlu0 %2542
      %2544 = vrot.lane.b32.xlu0 %v2538, 1
      %v2545 = vpop.permute.xlu0 %2544
      %2546 = vrot.lane.b32.xlu0 %v2539, 1
      %v2547 = vpop.permute.xlu0 %2546
      %v2548 = vsel %vm293, %v2541, %v2543
      %v2549 = vsel %vm293, %v2543, %v2545
      %v2550 = vsel %vm293, %v2545, %v2547
      %2554 = vst [vmem:[#allocation3 + $0x18] sm:$0xf0] %v2548
      %2555 = vst [vmem:[#allocation3 + $0x20] sm:$0xf0] %v2549
      %2556 = vst.msk [vmem:[#allocation3 + $0x28] sm:$0xf0] %vm2501, %v2550
      %v2557 = vld [vmem:[#allocation2 + $0x8] sm:$0xf]
      %v2558 = vld [vmem:[#allocation2 + $0x10] sm:$0xf]
      %v2559 = vld [vmem:[#allocation2 + $0x18] sm:$0xf]
      %2560 = vst [vmem:[#allocation3 + $0x30] sm:$0xf] %v2557
      %2561 = vst [vmem:[#allocation3 + $0x38] sm:$0xf] %v2558
      %2562 = vst.msk [vmem:[#allocation3 + $0x40] sm:$0xf] %vm925, %v2559
      %v2563 = vld [vmem:[#allocation2 + $0x8] sm:$0xf]
      %v2564 = vld [vmem:[#allocation2 + $0x10] sm:$0xf]
      %v2565 = vld [vmem:[#allocation2 + $0x18] sm:$0xf]
      %v2569 = vrot.slane %v2563, 4
      %v2570 = vrot.slane %v2564, 4
      %v2571 = vrot.slane %v2565, 4
      %2572 = vrot.lane.b32.xlu0 %v2569, 127
      %v2573 = vpop.permute.xlu0 %2572
      %2574 = vrot.lane.b32.xlu0 %v2570, 127
      %v2575 = vpop.permute.xlu0 %2574
      %2576 = vrot.lane.b32.xlu0 %v2571, 127
      %v2577 = vpop.permute.xlu0 %2576
      %v2578 = vsel %vm308, %v2573, %v2575
      %v2579 = vsel %vm308, %v2575, %v2577
      %2583 = vst [vmem:[#allocation3 + $0x30] sm:$0xf0] %v2578
      %2584 = vst [vmem:[#allocation3 + $0x38] sm:$0xf0] %v2579
      %2585 = vst.msk [vmem:[#allocation3 + $0x40] sm:$0xf0] %vm2501, %v2577
      %v2586 = vld [vmem:[#allocation2 + $0x8] sm:$0xf]
      %v2587 = vld [vmem:[#allocation2 + $0x10] sm:$0xf]
      %v2588 = vld [vmem:[#allocation2 + $0x18] sm:$0xf]
      %2592 = vrot.lane.b32.xlu0 %v2586, 111
      %v2593 = vpop.permute.xlu0 %2592
      %2594 = vrot.lane.b32.xlu0 %v2587, 111
      %v2595 = vpop.permute.xlu0 %2594
      %2596 = vrot.lane.b32.xlu0 %v2588, 111
      %v2597 = vpop.permute.xlu0 %2596
      %v2598 = vsel %vm319, %v2593, %v2595
      %v2599 = vsel %vm319, %v2595, %v2597
      %2603 = vst [vmem:[#allocation3 + $0x48] sm:$0xf] %v2598
      %2604 = vst [vmem:[#allocation3 + $0x50] sm:$0xf] %v2599
      %2605 = vst.msk [vmem:[#allocation3 + $0x58] sm:$0xf] %vm925, %v2597
      %v2606 = vld [vmem:[#allocation2 + $0x8] sm:$0xf]
      %v2607 = vld [vmem:[#allocation2 + $0x10] sm:$0xf]
      %v2608 = vld [vmem:[#allocation2 + $0x18] sm:$0xf]
      %v2612 = vrot.slane %v2606, 4
      %v2613 = vrot.slane %v2607, 4
      %v2614 = vrot.slane %v2608, 4
      %2615 = vrot.lane.b32.xlu0 %v2612, 110
      %v2616 = vpop.permute.xlu0 %2615
      %2617 = vrot.lane.b32.xlu0 %v2613, 110
      %v2618 = vpop.permute.xlu0 %2617
      %2619 = vrot.lane.b32.xlu0 %v2614, 110
      %v2620 = vpop.permute.xlu0 %2619
      %v2621 = vsel %vm330, %v2616, %v2618
      %v2622 = vsel %vm330, %v2618, %v2620
      %2626 = vst [vmem:[#allocation3 + $0x48] sm:$0xf0] %v2621
      %2627 = vst [vmem:[#allocation3 + $0x50] sm:$0xf0] %v2622
      %2628 = vst.msk [vmem:[#allocation3 + $0x58] sm:$0xf0] %vm2501, %v2620
      %v2629 = vld [vmem:[#allocation2 + $0x8] sm:$0xf]
      %v2630 = vld [vmem:[#allocation2 + $0x10] sm:$0xf]
      %v2631 = vld [vmem:[#allocation2 + $0x18] sm:$0xf]
      %2635 = vrot.lane.b32.xlu0 %v2629, 109
      %v2636 = vpop.permute.xlu0 %2635
      %2637 = vrot.lane.b32.xlu0 %v2630, 109
      %v2638 = vpop.permute.xlu0 %2637
      %2639 = vrot.lane.b32.xlu0 %v2631, 109
      %v2640 = vpop.permute.xlu0 %2639
      %v2641 = vsel %vm341, %v2636, %v2638
      %v2642 = vsel %vm341, %v2638, %v2640
      %2646 = vst [vmem:[#allocation3 + $0x60] sm:$0xf] %v2641
      %2647 = vst [vmem:[#allocation3 + $0x68] sm:$0xf] %v2642
      %2648 = vst.msk [vmem:[#allocation3 + $0x70] sm:$0xf] %vm925, %v2640
      %v2649 = vld [vmem:[%s3 + $0x3c] sm:$0x3]
      %v2650 = vld [vmem:[#allocation3] sm:$0xff]
      %v2651 = vld [vmem:[#allocation3 + $0x8] sm:$0xff]
      %v2652 = vld [vmem:[#allocation3 + $0x10] sm:$0xff]
      %v2653 = vld [vmem:[#allocation3 + $0x18] sm:$0xff]
      %v2654 = vld [vmem:[#allocation3 + $0x20] sm:$0xff]
      %v2655 = vld [vmem:[#allocation3 + $0x28] sm:$0xff]
      %v2656 = vld [vmem:[#allocation3 + $0x30] sm:$0xff]
      %v2657 = vld [vmem:[#allocation3 + $0x38] sm:$0xff]
      %v2658 = vld [vmem:[#allocation3 + $0x40] sm:$0xff]
      %v2659 = vld [vmem:[#allocation3 + $0x48] sm:$0xff]
      %v2660 = vld [vmem:[#allocation3 + $0x50] sm:$0xff]
      %v2661 = vld [vmem:[#allocation3 + $0x58] sm:$0xff]
      %v2662 = vld [vmem:[#allocation3 + $0x60] sm:$0xf]
      %v2663 = vld [vmem:[#allocation3 + $0x68] sm:$0xf]
      %v2664 = vld [vmem:[#allocation3 + $0x70] sm:$0xf]
      %v2665 = vpack.c.bf16 %v2653, %v2650
      %v2666 = vpack.c.bf16 %v2654, %v2651
      %v2667 = vpack.c.bf16 %v2655, %v2652
      %v2668 = vpack.c.bf16 %v2659, %v2656
      %v2669 = vpack.c.bf16 %v2660, %v2657
      %v2670 = vpack.c.bf16 %v2661, %v2658
      %v2671 = vpack.c.bf16 %v2662, %v2662
      %v2672 = vpack.c.bf16 %v2663, %v2663
      %v2673 = vpack.c.bf16 %v2664, %v2664
      %v2674 = vld [vmem:[%s4 + $0x80] sm:$0xf]
      %2676 = vset.pattern.permute.xlu0 0
      %2677 = vperm.xlu0 %2676, %v2674
      %v2678 = vpop.permute.xlu0 %2677
      %vm2680 = vcmask 293888
      %v2682 = vsel %vm2680, %v2649, 0
      %vm2684 = vcmask 1041408
      %v2686 = vsel %vm2684, %v2671, 0
      %v2689 = vsel %vm2684, %v2672, 0
      %v2692 = vsel %vm2684, %v2673, 0
      %2694 = vmatprep.subr.bf16.mxu0 %v2666
      %2695 = vmatpush1.bf16.msra.mxu0 %v2665
      %2696 = vmatprep.subr.bf16.mxu0 %v2669
      %2697 = vmatpush1.bf16.msra.mxu0 %v2668
      %2698 = vmatprep.subr.bf16.mxu0 %v2689
      %2699 = vmatpush1.bf16.msra.mxu0 %v2686
      %2700 = vmatprep.subr.bf16.mxu0 0
      %2701 = vmatpush1.bf16.msra.mxu0 0
      %2702 = vmatprep.subr.bf16.mxu0 0
      %2703 = vmatpush1.bf16.msra.mxu0 0
      %2704 = vmatprep.subr.bf16.mxu0 0
      %2705 = vmatpush1.bf16.msra.mxu0 0
      %2706 = vmatprep.subr.bf16.mxu0 0
      %2707 = vmatpush1.bf16.msra.mxu0 0
      %2708 = vmatprep.subr.bf16.mxu0 0
      %2709 = vmatpush1.bf16.msra.mxu0 0
      %2710 = vmatprep.subr.bf16.mxu0 0
      %2711 = vmatpush1.bf16.msra.mxu0 0
      %2712 = vmatprep.subr.bf16.mxu0 0
      %2713 = vmatpush1.bf16.msra.mxu0 0
      %2714 = vmatprep.subr.bf16.mxu0 0
      %2715 = vmatpush1.bf16.msra.mxu0 0
      %2716 = vmatprep.subr.bf16.mxu0 0
      %2717 = vmatpush1.bf16.msra.mxu0 0
      %2718 = vmatprep.subr.bf16.mxu0 0
      %2719 = vmatpush1.bf16.msra.mxu0 0
      %2720 = vmatprep.subr.bf16.mxu0 0
      %2721 = vmatpush1.bf16.msra.mxu0 0
      %2722 = vmatprep.subr.bf16.mxu0 0
      %2723 = vmatpush1.bf16.msra.mxu0 0
      %2724 = vmatprep.subr.bf16.mxu0 0
      %2725 = vmatpush1.bf16.msra.mxu0 0
      %2726 = vmatprep.mubr.bf16.mxu0 0
      %2727 = vmatmul.mubr.bf16.gmra.mrb[0].mxu0 %v2682
      %v2728 = vpop.f32.mrb[0].mxu0
      %v2729 = vadd.f32 %v2678, %v2728
      %v2730 = vpop.f32.mrb[0].mxu0
      %v2731 = vadd.f32 %v2678, %v2730
      %v2732 = vpop.f32.mrb[0].mxu0
      %v2733 = vpop.f32.mrb[0].mxu0
      %2734 = vdwg.mxu0
      %2735 = vmatprep.subr.bf16.mxu0 0
      %2736 = vmatpush1.bf16.msra.mxu0 %v2667
      %2737 = vmatprep.subr.bf16.mxu0 0
      %2738 = vmatpush1.bf16.msra.mxu0 %v2670
      %2739 = vmatprep.subr.bf16.mxu0 0
      %2740 = vmatpush1.bf16.msra.mxu0 %v2692
      %2741 = vmatprep.subr.bf16.mxu0 0
      %2742 = vmatpush1.bf16.msra.mxu0 0
      %2743 = vmatprep.subr.bf16.mxu0 0
      %2744 = vmatpush1.bf16.msra.mxu0 0
      %2745 = vmatprep.subr.bf16.mxu0 0
      %2746 = vmatpush1.bf16.msra.mxu0 0
      %2747 = vmatprep.subr.bf16.mxu0 0
      %2748 = vmatpush1.bf16.msra.mxu0 0
      %2749 = vmatprep.subr.bf16.mxu0 0
      %2750 = vmatpush1.bf16.msra.mxu0 0
      %2751 = vmatprep.subr.bf16.mxu0 0
      %2752 = vmatpush1.bf16.msra.mxu0 0
      %2753 = vmatprep.subr.bf16.mxu0 0
      %2754 = vmatpush1.bf16.msra.mxu0 0
      %2755 = vmatprep.subr.bf16.mxu0 0
      %2756 = vmatpush1.bf16.msra.mxu0 0
      %2757 = vmatprep.subr.bf16.mxu0 0
      %2758 = vmatpush1.bf16.msra.mxu0 0
      %2759 = vmatprep.subr.bf16.mxu0 0
      %2760 = vmatpush1.bf16.msra.mxu0 0
      %2761 = vmatprep.subr.bf16.mxu0 0
      %2762 = vmatpush1.bf16.msra.mxu0 0
      %2763 = vmatprep.subr.bf16.mxu0 0
      %2764 = vmatpush1.bf16.msra.mxu0 0
      %2765 = vmatprep.subr.bf16.mxu0 0
      %2766 = vmatpush1.bf16.msra.mxu0 0
      %2767 = vmatprep.mubr.bf16.mxu0 0
      %2768 = vmatmul.mubr.bf16.gmra.mrb[0].mxu0 %v2682
      %v2769 = vpop.f32.mrb[0].mxu0
      %v2770 = vadd.f32 %v2678, %v2769
      %v2771 = vpop.f32.mrb[0].mxu0
      %v2772 = vpop.f32.mrb[0].mxu0
      %v2773 = vpop.f32.mrb[0].mxu0
      %2774 = vdwg.mxu0
      %v2775 = vld [vmem:[%s236] sm:$0xff]
      %v2776 = vld [vmem:[%s236 + $0x8] sm:$0xf]
      %v2778 = vcombine.high %v2775, %v2775
      %v2780 = vadd.f32 %v2729, %v2775
      %v2781 = vadd.f32 %v2731, %v2778
      %v2782 = vadd.f32 %v2770, %v2776
      %v2785 = vcombine.low %v2780, %v2781
      %2787 = vst [vmem:[%s241] sm:$0xff] %v2785
      %2788 = vst.msk [vmem:[%s241 + $0x8] sm:$0xf] %vm925, %v2782
      %p2789 = scmp.lt.s32.totalorder %s16, 1
      %s2790 = scalar_select %p2789, %s16, 1
      %s2791 = smul.addr %s2790, 3
      %s2792 = smul.addr %s2791, 4
      %s2793 = scalar_lea.vmem %s5, %s2792
      // Predicated region
      $region41: #{_lambda_.1} parent=39 // pred_check
        %p2794 = pneg %p149
      $region42: #{_lambda_.1} parent=39 // pred_check_branch
        %2796 = sbr.rel (%p2794) target = $region44
      $region43: #{_lambda_.1} parent=39 // pred_region
        _
      $region44: #{_lambda_.1} parent=39 // pred_fallthru
        _
    $region40: #{_lambda_.1} parent=5 // pred_fallthru
      _
    %p2797 = scmp.le.s32.totalorder 2, %s11
    // Predicated region
    $region45: #{_lambda_.1} parent=5 // pred_check
      %p2798 = pneg %p2797
    $region46: #{_lambda_.1} parent=5 // pred_check_branch
      %2800 = sbr.rel (%p2798) target = $region48
    $region47: #{_lambda_.1} parent=5 // pred_region
      %s2801 = ssub.s32 %s11, 2
      // Predicated region
      $region49: #{_lambda_.1} parent=47 // pred_check
        %p2802 = pneg %p155
      $region50: #{_lambda_.1} parent=47 // pred_check_branch
        %2804 = sbr.rel (%p2802) target = $region52
      $region51: #{_lambda_.1} parent=47 // pred_region
        %p2805 = scmp.lt.s32.totalorder %s17, 1
        %s2806 = scalar_select %p2805, %s17, 1
        %s2807 = smul.addr %s2806, 3
        %s2808 = smul.addr %s2807, 4
        %s2809 = scalar_lea.vmem %s5, %s2808
      $region52: #{_lambda_.1} parent=47 // pred_fallthru
        _
    $region48: #{_lambda_.1} parent=5 // pred_fallthru
      _
  $region6: #{_lambda_.1} parent=0 // loop_footer
    %s15 = sadd.s32 1, %s11
  $region7: #{_lambda_.1} parent=0 // loop_footer_branch
    %10 = sbr.rel target = $region3
  $region8: #{_lambda_.1} parent=0 // loop_exit
    _

</llo_original>
